<compile_context>
chip_gen: v6e
topology: v6e:2x2x1
jax: 0.10.0
libtpu: 0.0.40
codegen_flags: <defaults>
</compile_context>

<pallas_src>
import functools
import math

import jax
import jax.numpy as jnp
from jax.experimental import pallas as pl
from jax.experimental.pallas import tpu as pltpu


# --------------------------------------------------------------------------
# hardware-derived limits / small helpers
# --------------------------------------------------------------------------
@functools.lru_cache(maxsize=1)
def _vmem_limit_bytes():
    cap = None
    try:
        cap = getattr(pltpu.get_tpu_info(), "vmem_capacity_bytes", None)
    except Exception:
        cap = None
    if not cap:
        cap = 64 * 1024 * 1024          # conservative: v7x physical VMEM per TC
    return max(32 * 1024 * 1024, int(cap) - 12 * 1024 * 1024)


def _round_up(x, m):
    return (x + m - 1) // m * m


def _layer_norm(x, w, b, eps=1e-5):
    # torch F.layer_norm: biased variance, eps inside rsqrt
    mu = jnp.mean(x, axis=-1, keepdims=True)
    var = jnp.mean(jnp.square(x - mu), axis=-1, keepdims=True)
    return (x - mu) * jax.lax.rsqrt(var + eps) * w + b


def _gelu_exact(x):
    # nn.GELU() default (approximate='none') -> erf-based GELU
    return 0.5 * x * (1.0 + jax.lax.erf(x * jnp.float32(0.7071067811865476)))


def _pick_head_group(n_head, hd):
    # largest divisor G of n_head with G*hd <= 256 (full v6e/v7x MXU width;
    # two dense passes on v5e's 128-wide MXU).
    g = 1
    for cand in range(1, n_head + 1):
        if n_head % cand == 0 and cand * hd <= 256:
            g = cand
    return g


# --------------------------------------------------------------------------
# Kernel 1: x + MultiheadAttention(LN1(x))     grid = (B, n_head // G)
# --------------------------------------------------------------------------
def _attn_block_kernel(G, hd, has_mask, *refs):
    if has_mask:
        (x_ref, ln1w_ref, ln1b_ref, wqkv_ref, bqkv_ref, wo_ref, bo_ref,
         mask_ref, o_ref, hn_ref, acc_ref) = refs
    else:
        (x_ref, ln1w_ref, ln1b_ref, wqkv_ref, bqkv_ref, wo_ref, bo_ref,
         o_ref, hn_ref, acc_ref) = refs
        mask_ref = None

    g = pl.program_id(1)
    Ghd = G * hd

    @pl.when(g == 0)
    def _init():
        x = x_ref[0]                                            # (S, D) f32
        hn_ref[...] = _layer_norm(x, ln1w_ref[...],
                                  ln1b_ref[...]).astype(jnp.bfloat16)
        acc_ref[...] = jnp.zeros_like(acc_ref)

    hn = hn_ref[...]                                            # (S, D) bf16

    # dense group QKV projection (1/sqrt(hd) pre-folded into Wq / bq)
    qkv = jnp.dot(hn, wqkv_ref[0],
                  preferred_element_type=jnp.float32) + bqkv_ref[0]  # (S, 3*Ghd)
    q_all = qkv[:, 0:Ghd].astype(jnp.bfloat16)
    k_all = qkv[:, Ghd:2 * Ghd].astype(jnp.bfloat16)
    v_all = qkv[:, 2 * Ghd:3 * Ghd].astype(jnp.bfloat16)
    mask = mask_ref[...] if has_mask else None

    ctx_parts = []
    for i in range(G):                                          # G is small & static
        sl = slice(i * hd, (i + 1) * hd)
        s = jnp.einsum('qd,kd->qk', q_all[:, sl], k_all[:, sl],
                       preferred_element_type=jnp.float32)      # (S, S) f32
        if has_mask:
            s = s + mask
        s = s - jnp.max(s, axis=-1, keepdims=True)
        p = jnp.exp(s)
        denom = jnp.sum(p, axis=-1, keepdims=True)
        ctx = jnp.dot(p.astype(jnp.bfloat16), v_all[:, sl],
                      preferred_element_type=jnp.float32)       # (S, hd) f32
        # normalize AFTER PV: (S, hd) multiply instead of (S, S)
        ctx = ctx * pl.reciprocal(denom, approx=True)
        ctx_parts.append(ctx.astype(jnp.bfloat16))

    ctx_grp = ctx_parts[0] if G == 1 else jnp.concatenate(ctx_parts, axis=-1)
    # dense group out-projection accumulate (K = G*hd)
    acc_ref[...] += jnp.dot(ctx_grp, wo_ref[0],
                            preferred_element_type=jnp.float32)  # (S, D)

    @pl.when(g == pl.num_programs(1) - 1)
    def _finalize():
        o_ref[0] = x_ref[0] + acc_ref[...] + bo_ref[...]


def attention_block(x, mask, p, n_head):
    B, S, D = x.shape
    hd = D // n_head
    w_qkv = p['w_qkv']                       # (n_groups, D, 3*G*hd) bf16
    n_groups = w_qkv.shape[0]
    Ghd = w_qkv.shape[2] // 3
    G = Ghd // hd
    has_mask = mask is not None
    # TODO(synk): add a query-row tile grid axis (parallel) so v7x's second
    # TensorCore is used when B == 1; with B >= 2 the batch axis already is.

    in_specs = [
        pl.BlockSpec((1, S, D), lambda b, g: (b, 0, 0)),        # x (resident over g)
        pl.BlockSpec((1, D), lambda b, g: (0, 0)),              # ln1_w
        pl.BlockSpec((1, D), lambda b, g: (0, 0)),              # ln1_b
        pl.BlockSpec((1, D, 3 * Ghd), lambda b, g: (g, 0, 0)),  # fused QKV weight group
        pl.BlockSpec((1, 1, 3 * Ghd), lambda b, g: (g, 0, 0)),  # fused QKV bias group
        pl.BlockSpec((1, Ghd, D), lambda b, g: (g, 0, 0)),      # out-proj weight group
        pl.BlockSpec((1, D), lambda b, g: (0, 0)),              # out-proj bias
    ]
    args = [x, p['ln1_w'], p['ln1_b'], w_qkv, p['b_qkv'], p['wo'], p['bo']]
    if has_mask:
        in_specs.append(pl.BlockSpec((S, S), lambda b, g: (0, 0)))
        args.append(mask)

    return pl.pallas_call(
        functools.partial(_attn_block_kernel, G, hd, has_mask),
        out_shape=jax.ShapeDtypeStruct((B, S, D), x.dtype),
        grid_spec=pltpu.PrefetchScalarGridSpec(
            num_scalar_prefetch=0,
            grid=(B, n_groups),
            in_specs=in_specs,
            out_specs=pl.BlockSpec((1, S, D), lambda b, g: (b, 0, 0)),
            scratch_shapes=[
                pltpu.VMEM((S, D), jnp.bfloat16),   # LN1(x) for this batch row
                pltpu.VMEM((S, D), jnp.float32),    # out-projection accumulator
            ]),
        compiler_params=pltpu.CompilerParams(
            dimension_semantics=("parallel", "arbitrary"),
            vmem_limit_bytes=_vmem_limit_bytes()),
    )(*args)


# --------------------------------------------------------------------------
# Kernel 2: x + c_proj(gelu(c_fc(LN2(x))))   grid = (row_tiles, hidden_chunks)
# --------------------------------------------------------------------------
def _mlp_block_kernel(x_ref, ln2w_ref, ln2b_ref, fcw_ref, fcb_ref,
                      pjw_ref, pjb_ref, o_ref, hn_ref, acc_ref):
    j = pl.program_id(1)

    @pl.when(j == 0)
    def _init():
        hn_ref[...] = _layer_norm(x_ref[...], ln2w_ref[...],
                                  ln2b_ref[...]).astype(jnp.bfloat16)
        acc_ref[...] = jnp.zeros_like(acc_ref)

    h = jnp.dot(hn_ref[...], fcw_ref[...],
                preferred_element_type=jnp.float32) + fcb_ref[...]   # (tm, tk) f32
    h = _gelu_exact(h)
    # TODO(synk): evaluate the GELU in bf16 on v6e/v7x (bf16 VPU) once a safe
    # generation probe is wired in; kept f32 here for lowering safety / v5e.
    acc_ref[...] += jnp.dot(h.astype(jnp.bfloat16), pjw_ref[...],
                            preferred_element_type=jnp.float32)      # (tm, D)

    @pl.when(j == pl.num_programs(1) - 1)
    def _finalize():
        o_ref[...] = acc_ref[...] + pjb_ref[...] + x_ref[...]


def _pick_row_tile(R):
    if R <= 128:
        return _round_up(R, 8)
    cands = (512, 256, 128)
    ok = [t for t in cands if (_round_up(R, t) - R) <= 0.15 * R]
    if ok:
        return max(ok)                               # large tile, little padding
    return min(cands, key=lambda t: (_round_up(R, t), -t))   # minimize padded rows


def _pick_hidden_tile(tm, D, Hd, budget):
    def fits(tk):
        b = 2 * tm * D * 4              # x tile (double-buffered)
        b += 2 * tm * D * 4             # out tile (double-buffered)
        b += 8 * D * tk                 # c_fc + c_proj chunks, bf16, double-buffered
        b += tm * D * (2 + 4)           # hn (bf16) + acc (f32) scratch
        b += 2 * tm * tk * 4            # (tm, tk) fc intermediate + headroom
        return b <= budget
    if fits(Hd):
        return Hd                       # weights fully resident; hidden axis extent 1
    for tk in (2048, 1024, 512, 256, 128):
        if tk < Hd and Hd % tk == 0 and fits(tk):
            return tk
    return Hd if Hd % 128 else 128


def mlp_block(x2d, p):
    R, D = x2d.shape
    Hd = p['fc_w_t'].shape[1]
    limit = _vmem_limit_bytes()
    tm = _pick_row_tile(R)
    tk = _pick_hidden_tile(tm, D, Hd, budget=limit - 8 * 1024 * 1024)
    Rp = _round_up(R, tm)
    xp = x2d if Rp == R else jnp.pad(x2d, ((0, Rp - R), (0, 0)))
    grid = (Rp // tm, Hd // tk)

    out = pl.pallas_call(
        _mlp_block_kernel,
        out_shape=jax.ShapeDtypeStruct((Rp, D), x2d.dtype),
        grid_spec=pltpu.PrefetchScalarGridSpec(
            num_scalar_prefetch=0,
            grid=grid,
            in_specs=[
                pl.BlockSpec((tm, D), lambda i, j: (i, 0)),   # x tile (resident over j)
                pl.BlockSpec((1, D), lambda i, j: (0, 0)),    # ln2_w
                pl.BlockSpec((1, D), lambda i, j: (0, 0)),    # ln2_b
                pl.BlockSpec((D, tk), lambda i, j: (0, j)),   # c_fc weight chunk
                pl.BlockSpec((1, tk), lambda i, j: (0, j)),   # c_fc bias chunk
                pl.BlockSpec((tk, D), lambda i, j: (j, 0)),   # c_proj weight chunk
                pl.BlockSpec((1, D), lambda i, j: (0, 0)),    # c_proj bias
            ],
            out_specs=pl.BlockSpec((tm, D), lambda i, j: (i, 0)),
            scratch_shapes=[
                pltpu.VMEM((tm, D), jnp.bfloat16),   # LN2(x) tile
                pltpu.VMEM((tm, D), jnp.float32),    # c_proj accumulator
            ]),
        compiler_params=pltpu.CompilerParams(
            dimension_semantics=("parallel", "arbitrary"),
            vmem_limit_bytes=limit),
    )(xp, p['ln2_w'], p['ln2_b'], p['fc_w_t'], p['fc_b'],
      p['pj_w_t'], p['pj_b'])
    return out if Rp == R else out[:R]


# --------------------------------------------------------------------------
# host-side weight preparation (transpose / group-split / bf16 cast, once)
# --------------------------------------------------------------------------
def prepare_layer_params(p, n_head):
    D = p['ln1_w'].shape[-1]
    hd = D // n_head
    G = _pick_head_group(n_head, hd)
    n_groups = n_head // G
    Ghd = G * hd
    scale = 1.0 / math.sqrt(hd)

    in_w = p['in_w']                           # (3D, D) torch layout (out, in)
    in_b = p['in_b'].reshape(-1)               # (3D,)
    wq = in_w[0:D].T * scale                   # fold 1/sqrt(hd) into the Q proj
    wk = in_w[D:2 * D].T
    wv = in_w[2 * D:3 * D].T
    bq = in_b[0:D] * scale
    bk = in_b[D:2 * D]
    bv = in_b[2 * D:3 * D]

    def grp_w(w):                              # (D, D) -> (n_groups, D, Ghd)
        return jnp.transpose(w.reshape(D, n_groups, Ghd), (1, 0, 2))

    def grp_b(b):                              # (D,) -> (n_groups, 1, Ghd)
        return b.reshape(n_groups, 1, Ghd)

    w_qkv = jnp.concatenate([grp_w(wq), grp_w(wk), grp_w(wv)],
                            axis=-1).astype(jnp.bfloat16)        # (ng, D, 3*Ghd)
    b_qkv = jnp.concatenate([grp_b(bq), grp_b(bk), grp_b(bv)],
                            axis=-1).astype(jnp.float32)         # (ng, 1, 3*Ghd)

    return dict(
        ln1_w=p['ln1_w'].reshape(1, D).astype(jnp.float32),
        ln1_b=p['ln1_b'].reshape(1, D).astype(jnp.float32),
        w_qkv=w_qkv, b_qkv=b_qkv,
        wo=p['out_w'].T.reshape(n_groups, Ghd, D).astype(jnp.bfloat16),
        bo=p['out_b'].reshape(1, D).astype(jnp.float32),
        ln2_w=p['ln2_w'].reshape(1, D).astype(jnp.float32),
        ln2_b=p['ln2_b'].reshape(1, D).astype(jnp.float32),
        fc_w_t=p['fc_w'].T.astype(jnp.bfloat16),
        fc_b=p['fc_b'].reshape(1, -1).astype(jnp.float32),
        pj_w_t=p['pj_w'].T.astype(jnp.bfloat16),
        pj_b=p['pj_b'].reshape(1, D).astype(jnp.float32),
    )


def prepare_params(layer_params, n_head):
    """Call once, OUTSIDE jit: weight transpose / head-group split / bf16 cast."""
    return [prepare_layer_params(p, n_head) for p in layer_params]


# --------------------------------------------------------------------------
# Transformer.forward (batch_first=True)
# --------------------------------------------------------------------------
@functools.partial(jax.jit, static_argnums=(2,))
def transformer_forward(x, prepped_params, n_head, attn_mask=None):
    B, S, D = x.shape
    assert D % n_head == 0, "d_model must be divisible by n_head"
    # The torch module casts attn_mask to the query dtype, so only additive
    # float (S, S) masks are supported here (matching its effective semantics).
    mask = None if attn_mask is None else attn_mask.astype(jnp.float32)
    # TODO(synk): cross-pallas_call prefetch of layer i+1 weights (P10 DMA-
    # future pattern) to hide weight HBM latency behind layer i's MLP.
    for p in prepped_params:
        x = attention_block(x, mask, p, n_head)
        x = mlp_block(x.reshape(B * S, D), p).reshape(B, S, D)
    return x
    # TODO(synk): record_positive / channel_idle / slab(BatchNorm) / reparam and
    # cross-attention (ln_1_kv) branches are not exercised by the default forward.


# --------------------------------------------------------------------------
# pure-JAX f32 reference (for self-validation) and synthetic params
# --------------------------------------------------------------------------
def _reference_forward(x, layer_params, n_head, attn_mask=None):
    B, S, D = x.shape
    hd = D // n_head
    scale = 1.0 / math.sqrt(hd)
    for lp in layer_params:
        h = _layer_norm(x, lp['ln1_w'], lp['ln1_b'])
        qkv = h @ lp['in_w'].T + lp['in_b'][0]
        q, k, v = qkv[..., :D], qkv[..., D:2 * D], qkv[..., 2 * D:]
        q = q.reshape(B, S, n_head, hd).transpose(0, 2, 1, 3)
        k = k.reshape(B, S, n_head, hd).transpose(0, 2, 1, 3)
        v = v.reshape(B, S, n_head, hd).transpose(0, 2, 1, 3)
        s = (q * scale) @ jnp.swapaxes(k, -1, -2)
        if attn_mask is not None:
            s = s + attn_mask
        attn_p = jax.nn.softmax(s, axis=-1)
        ctx = (attn_p @ v).transpose(0, 2, 1, 3).reshape(B, S, D)
        x = x + ctx @ lp['out_w'].T + lp['out_b'][0]
        h = _layer_norm(x, lp['ln2_w'], lp['ln2_b'])
        h = jax.nn.gelu(h @ lp['fc_w'].T + lp['fc_b'][0], approximate=False)
        x = x + h @ lp['pj_w'].T + lp['pj_b'][0]
    return x


def init_params(key, width, layers, mlp_ratio=4.0):
    """Deterministic synthetic parameters matching the torch module's shapes."""
    hidden = int(width * mlp_ratio)
    params = []
    for i in range(layers):
        ks = jax.random.split(jax.random.fold_in(key, i), 8)
        s = 0.02
        params.append(dict(
            ln1_w=jnp.ones((1, width), jnp.float32),
            ln1_b=jnp.zeros((1, width), jnp.float32),
            in_w=s * jax.random.normal(ks[0], (3 * width, width), jnp.float32),
            in_b=s * jax.random.normal(ks[1], (1, 3 * width), jnp.float32),
            out_w=s * jax.random.normal(ks[2], (width, width), jnp.float32),
            out_b=s * jax.random.normal(ks[3], (1, width), jnp.float32),
            ln2_w=jnp.ones((1, width), jnp.float32),
            ln2_b=jnp.zeros((1, width), jnp.float32),
            fc_w=s * jax.random.normal(ks[4], (hidden, width), jnp.float32),
            fc_b=s * jax.random.normal(ks[5], (1, hidden), jnp.float32),
            pj_w=s * jax.random.normal(ks[6], (width, hidden), jnp.float32),
            pj_b=s * jax.random.normal(ks[7], (1, width), jnp.float32),
        ))
    return params


if __name__ == "__main__":
    key = jax.random.PRNGKey(0)
    B, S = 2, 8
    width, heads, layers = 32, 4, 2

    kx, kp = jax.random.split(key)
    x = jax.random.normal(kx, (B, S, width), jnp.float32)
    params = init_params(kp, width, layers)

    prepped = prepare_params(params, heads)      # host-side weight prep, once
    out = transformer_forward(x, prepped, heads)
    out = jax.block_until_ready(out)

    assert out.shape == (B, S, width) and out.dtype == jnp.float32
    assert bool(jnp.all(jnp.isfinite(out)))

    # self-check against a pure-JAX f32 reference (bf16 MXU math -> loose tol)
    ref = _reference_forward(x, params, heads)
    assert bool(jnp.allclose(out, ref, atol=5e-2, rtol=5e-2)), "mismatch vs reference"

    print("KERNEL_OK")
</pallas_src>

<mosaic_0001>
module attributes {stable_mosaic.version = 11 : i64} {
  func.func @_mlp_block_kernel(%arg0: i32, %arg1: i32, %arg2: memref<16x32xf32, #tpu.memory_space<vmem>>, %arg3: memref<1x32xf32, #tpu.memory_space<vmem>>, %arg4: memref<1x32xf32, #tpu.memory_space<vmem>>, %arg5: memref<32x128xbf16, #tpu.memory_space<vmem>>, %arg6: memref<1x128xf32, #tpu.memory_space<vmem>>, %arg7: memref<128x32xbf16, #tpu.memory_space<vmem>>, %arg8: memref<1x32xf32, #tpu.memory_space<vmem>>, %arg9: memref<16x32xf32, #tpu.memory_space<vmem>>, %arg10: memref<16x32xbf16, #tpu.memory_space<vmem>>, %arg11: memref<16x32xf32, #tpu.memory_space<vmem>>) attributes {dimension_semantics = [#tpu.dimension_semantics<parallel>, #tpu.dimension_semantics<arbitrary>], iteration_bounds = array<i64: 1, 1>, scalar_prefetch = 0 : i64, scratch_operands = 2 : i64, tpu.core_type = #tpu.core_type<tc>, window_params = [{transform_indices = @transform_0, window_bounds = array<i64: 16, 32>}, {pipeline_mode = #tpu.pipeline_mode<synchronous>, transform_indices = @transform_1, window_bounds = array<i64: 1, 32>}, {pipeline_mode = #tpu.pipeline_mode<synchronous>, transform_indices = @transform_2, window_bounds = array<i64: 1, 32>}, {transform_indices = @transform_3, window_bounds = array<i64: 32, 128>}, {transform_indices = @transform_4, window_bounds = array<i64: 1, 128>}, {transform_indices = @transform_5, window_bounds = array<i64: 128, 32>}, {pipeline_mode = #tpu.pipeline_mode<synchronous>, transform_indices = @transform_6, window_bounds = array<i64: 1, 32>}, {transform_indices = @transform_7, window_bounds = array<i64: 16, 32>}]} {
    %c0_i32 = arith.constant 0 : i32
    %0 = arith.cmpi eq, %arg1, %c0_i32 : i32
    %1 = arith.extui %0 : i1 to i32
    %c0_i32_0 = arith.constant 0 : i32
    %2 = arith.cmpi ne, %1, %c0_i32_0 : i32
    scf.if %2 {
      %c0_18 = arith.constant 0 : index
      %c0_19 = arith.constant 0 : index
      %26 = vector.load %arg2[%c0_18, %c0_19] : memref<16x32xf32, #tpu.memory_space<vmem>>, vector<16x32xf32>
      %c0_20 = arith.constant 0 : index
      %c0_21 = arith.constant 0 : index
      %27 = vector.load %arg3[%c0_20, %c0_21] : memref<1x32xf32, #tpu.memory_space<vmem>>, vector<1x32xf32>
      %c0_22 = arith.constant 0 : index
      %c0_23 = arith.constant 0 : index
      %28 = vector.load %arg4[%c0_22, %c0_23] : memref<1x32xf32, #tpu.memory_space<vmem>>, vector<1x32xf32>
      %cst_24 = arith.constant dense<0.000000e+00> : vector<16xf32>
      %29 = vector.multi_reduction <add>, %26, %cst_24 [1] : vector<16x32xf32> to vector<16xf32>
      %30 = vector.shape_cast %29 : vector<16xf32> to vector<16x1xf32>
      %cst_25 = arith.constant 3.200000e+01 : f32
      %31 = vector.broadcast %cst_25 : f32 to vector<16x1xf32>
      %32 = arith.divf %30, %31 : vector<16x1xf32>
      %33 = vector.broadcast %32 : vector<16x1xf32> to vector<16x32xf32>
      %34 = arith.subf %26, %33 : vector<16x32xf32>
      %35 = arith.mulf %34, %34 : vector<16x32xf32>
      %cst_26 = arith.constant dense<0.000000e+00> : vector<16xf32>
      %36 = vector.multi_reduction <add>, %35, %cst_26 [1] : vector<16x32xf32> to vector<16xf32>
      %37 = vector.shape_cast %36 : vector<16xf32> to vector<16x1xf32>
      %cst_27 = arith.constant 3.200000e+01 : f32
      %38 = vector.broadcast %cst_27 : f32 to vector<16x1xf32>
      %39 = arith.divf %37, %38 : vector<16x1xf32>
      %40 = vector.broadcast %32 : vector<16x1xf32> to vector<16x32xf32>
      %41 = arith.subf %26, %40 : vector<16x32xf32>
      %cst_28 = arith.constant 9.99999974E-6 : f32
      %42 = vector.broadcast %cst_28 : f32 to vector<16x1xf32>
      %43 = arith.addf %39, %42 : vector<16x1xf32>
      %44 = math.rsqrt %43 : vector<16x1xf32>
      %45 = vector.broadcast %44 : vector<16x1xf32> to vector<16x32xf32>
      %46 = arith.mulf %41, %45 : vector<16x32xf32>
      %47 = vector.broadcast %27 : vector<1x32xf32> to vector<16x32xf32>
      %48 = arith.mulf %46, %47 : vector<16x32xf32>
      %49 = vector.broadcast %28 : vector<1x32xf32> to vector<16x32xf32>
      %50 = arith.addf %48, %49 : vector<16x32xf32>
      %51 = arith.truncf %50 : vector<16x32xf32> to vector<16x32xbf16>
      %c0_29 = arith.constant 0 : index
      %c0_30 = arith.constant 0 : index
      %52 = vector.load %arg10[%c0_29, %c0_30] : memref<16x32xbf16, #tpu.memory_space<vmem>>, vector<16x32xbf16>
      tpu.vector_store %arg10[%c0_29, %c0_30], %51 {strides = array<i32>} : memref<16x32xbf16, #tpu.memory_space<vmem>>, vector<16x32xbf16>,
      %cst_31 = arith.constant 0.000000e+00 : f32
      %53 = vector.broadcast %cst_31 : f32 to vector<16x32xf32>
      %c0_32 = arith.constant 0 : index
      %c0_33 = arith.constant 0 : index
      %54 = vector.load %arg11[%c0_32, %c0_33] : memref<16x32xf32, #tpu.memory_space<vmem>>, vector<16x32xf32>
      tpu.vector_store %arg11[%c0_32, %c0_33], %53 {strides = array<i32>} : memref<16x32xf32, #tpu.memory_space<vmem>>, vector<16x32xf32>,
    } else {
    }
    %c0 = arith.constant 0 : index
    %c0_1 = arith.constant 0 : index
    %3 = vector.load %arg10[%c0, %c0_1] : memref<16x32xbf16, #tpu.memory_space<vmem>>, vector<16x32xbf16>
    %c0_2 = arith.constant 0 : index
    %c0_3 = arith.constant 0 : index
    %4 = vector.load %arg5[%c0_2, %c0_3] : memref<32x128xbf16, #tpu.memory_space<vmem>>, vector<32x128xbf16>
    %cst = arith.constant dense<0.000000e+00> : vector<16x128xf32>
    %5 = tpu.matmul %3, %4, %cst {dimension_numbers = #tpu.dot_dimension_numbers<[1], [0], [0], [1], [0, 0, 1, 1], [], []>} : vector<16x32xbf16>, vector<32x128xbf16>, vector<16x128xf32> -> vector<16x128xf32>
    %c0_4 = arith.constant 0 : index
    %c0_5 = arith.constant 0 : index
    %6 = vector.load %arg6[%c0_4, %c0_5] : memref<1x128xf32, #tpu.memory_space<vmem>>, vector<1x128xf32>
    %7 = vector.broadcast %6 : vector<1x128xf32> to vector<16x128xf32>
    %8 = arith.addf %5, %7 : vector<16x128xf32>
    %cst_6 = arith.constant 5.000000e-01 : f32
    %9 = vector.broadcast %cst_6 : f32 to vector<16x128xf32>
    %10 = arith.mulf %9, %8 : vector<16x128xf32>
    %cst_7 = arith.constant 0.707106769 : f32
    %11 = vector.broadcast %cst_7 : f32 to vector<16x128xf32>
    %12 = arith.mulf %8, %11 : vector<16x128xf32>
    %13 = math.erf %12 : vector<16x128xf32>
    %cst_8 = arith.constant 1.000000e+00 : f32
    %14 = vector.broadcast %cst_8 : f32 to vector<16x128xf32>
    %15 = arith.addf %14, %13 : vector<16x128xf32>
    %16 = arith.mulf %10, %15 : vector<16x128xf32>
    %c0_9 = arith.constant 0 : index
    %c0_10 = arith.constant 0 : index
    %17 = vector.load %arg11[%c0_9, %c0_10] : memref<16x32xf32, #tpu.memory_space<vmem>>, vector<16x32xf32>
    %18 = arith.truncf %16 : vector<16x128xf32> to vector<16x128xbf16>
    %c0_11 = arith.constant 0 : index
    %c0_12 = arith.constant 0 : index
    %19 = vector.load %arg7[%c0_11, %c0_12] : memref<128x32xbf16, #tpu.memory_space<vmem>>, vector<128x32xbf16>
    %cst_13 = arith.constant dense<0.000000e+00> : vector<16x32xf32>
    %20 = tpu.matmul %18, %19, %cst_13 {dimension_numbers = #tpu.dot_dimension_numbers<[1], [0], [0], [1], [0, 0, 1, 1], [], []>} : vector<16x128xbf16>, vector<128x32xbf16>, vector<16x32xf32> -> vector<16x32xf32>
    %21 = arith.addf %17, %20 : vector<16x32xf32>
    %c0_14 = arith.constant 0 : index
    %c0_15 = arith.constant 0 : index
    %22 = vector.load %arg11[%c0_14, %c0_15] : memref<16x32xf32, #tpu.memory_space<vmem>>, vector<16x32xf32>
    tpu.vector_store %arg11[%c0_14, %c0_15], %21 {strides = array<i32>} : memref<16x32xf32, #tpu.memory_space<vmem>>, vector<16x32xf32>,
    %c0_i32_16 = arith.constant 0 : i32
    %23 = arith.cmpi eq, %arg1, %c0_i32_16 : i32
    %24 = arith.extui %23 : i1 to i32
    %c0_i32_17 = arith.constant 0 : i32
    %25 = arith.cmpi ne, %24, %c0_i32_17 : i32
    scf.if %25 {
      %c0_18 = arith.constant 0 : index
      %c0_19 = arith.constant 0 : index
      %26 = vector.load %arg11[%c0_18, %c0_19] : memref<16x32xf32, #tpu.memory_space<vmem>>, vector<16x32xf32>
      %c0_20 = arith.constant 0 : index
      %c0_21 = arith.constant 0 : index
      %27 = vector.load %arg8[%c0_20, %c0_21] : memref<1x32xf32, #tpu.memory_space<vmem>>, vector<1x32xf32>
      %28 = vector.broadcast %27 : vector<1x32xf32> to vector<16x32xf32>
      %29 = arith.addf %26, %28 : vector<16x32xf32>
      %c0_22 = arith.constant 0 : index
      %c0_23 = arith.constant 0 : index
      %30 = vector.load %arg2[%c0_22, %c0_23] : memref<16x32xf32, #tpu.memory_space<vmem>>, vector<16x32xf32>
      %31 = arith.addf %29, %30 : vector<16x32xf32>
      %c0_24 = arith.constant 0 : index
      %c0_25 = arith.constant 0 : index
      %32 = vector.load %arg9[%c0_24, %c0_25] : memref<16x32xf32, #tpu.memory_space<vmem>>, vector<16x32xf32>
      tpu.vector_store %arg9[%c0_24, %c0_25], %31 {strides = array<i32>} : memref<16x32xf32, #tpu.memory_space<vmem>>, vector<16x32xf32>,
    } else {
    }
    return
  }
  func.func @transform_0(%arg0: i32, %arg1: i32) -> (i32, i32) {
    %c0_i32 = arith.constant 0 : i32
    %c0_i32_0 = arith.constant 0 : i32
    return %arg0, %c0_i32 : i32, i32
  }
  func.func @transform_1(%arg0: i32, %arg1: i32) -> (i32, i32) {
    %c0_i32 = arith.constant 0 : i32
    %c0_i32_0 = arith.constant 0 : i32
    %c0_i32_1 = arith.constant 0 : i32
    return %c0_i32, %c0_i32_0 : i32, i32
  }
  func.func @transform_2(%arg0: i32, %arg1: i32) -> (i32, i32) {
    %c0_i32 = arith.constant 0 : i32
    %c0_i32_0 = arith.constant 0 : i32
    %c0_i32_1 = arith.constant 0 : i32
    return %c0_i32, %c0_i32_0 : i32, i32
  }
  func.func @transform_3(%arg0: i32, %arg1: i32) -> (i32, i32) {
    %c0_i32 = arith.constant 0 : i32
    %c0_i32_0 = arith.constant 0 : i32
    return %c0_i32, %arg1 : i32, i32
  }
  func.func @transform_4(%arg0: i32, %arg1: i32) -> (i32, i32) {
    %c0_i32 = arith.constant 0 : i32
    %c0_i32_0 = arith.constant 0 : i32
    return %c0_i32, %arg1 : i32, i32
  }
  func.func @transform_5(%arg0: i32, %arg1: i32) -> (i32, i32) {
    %c0_i32 = arith.constant 0 : i32
    %c0_i32_0 = arith.constant 0 : i32
    return %arg1, %c0_i32 : i32, i32
  }
  func.func @transform_6(%arg0: i32, %arg1: i32) -> (i32, i32) {
    %c0_i32 = arith.constant 0 : i32
    %c0_i32_0 = arith.constant 0 : i32
    %c0_i32_1 = arith.constant 0 : i32
    return %c0_i32, %c0_i32_0 : i32, i32
  }
  func.func @transform_7(%arg0: i32, %arg1: i32) -> (i32, i32) {
    %c0_i32 = arith.constant 0 : i32
    %c0_i32_0 = arith.constant 0 : i32
    return %arg0, %c0_i32 : i32, i32
  }
}

module attributes {stable_mosaic.version = 11 : i64} {
  func.func @_attn_block_kernel(%arg0: i32, %arg1: i32, %arg2: memref<1x8x32xf32, #tpu.memory_space<vmem>>, %arg3: memref<1x32xf32, #tpu.memory_space<vmem>>, %arg4: memref<1x32xf32, #tpu.memory_space<vmem>>, %arg5: memref<1x32x96xbf16, #tpu.memory_space<vmem>>, %arg6: memref<1x1x96xf32, #tpu.memory_space<vmem>>, %arg7: memref<1x32x32xbf16, #tpu.memory_space<vmem>>, %arg8: memref<1x32xf32, #tpu.memory_space<vmem>>, %arg9: memref<1x8x32xf32, #tpu.memory_space<vmem>>, %arg10: memref<8x32xbf16, #tpu.memory_space<vmem>>, %arg11: memref<8x32xf32, #tpu.memory_space<vmem>>) attributes {dimension_semantics = [#tpu.dimension_semantics<parallel>, #tpu.dimension_semantics<arbitrary>], iteration_bounds = array<i64: 2, 1>, scalar_prefetch = 0 : i64, scratch_operands = 2 : i64, tpu.core_type = #tpu.core_type<tc>, window_params = [{transform_indices = @transform_0, window_bounds = array<i64: 1, 8, 32>}, {pipeline_mode = #tpu.pipeline_mode<synchronous>, transform_indices = @transform_1, window_bounds = array<i64: 1, 32>}, {pipeline_mode = #tpu.pipeline_mode<synchronous>, transform_indices = @transform_2, window_bounds = array<i64: 1, 32>}, {transform_indices = @transform_3, window_bounds = array<i64: 1, 32, 96>}, {transform_indices = @transform_4, window_bounds = array<i64: 1, 1, 96>}, {transform_indices = @transform_5, window_bounds = array<i64: 1, 32, 32>}, {pipeline_mode = #tpu.pipeline_mode<synchronous>, transform_indices = @transform_6, window_bounds = array<i64: 1, 32>}, {transform_indices = @transform_7, window_bounds = array<i64: 1, 8, 32>}]} {
    %c0_i32 = arith.constant 0 : i32
    %0 = arith.cmpi eq, %arg1, %c0_i32 : i32
    %1 = arith.extui %0 : i1 to i32
    %c0_i32_0 = arith.constant 0 : i32
    %2 = arith.cmpi ne, %1, %c0_i32_0 : i32
    scf.if %2 {
      %c0_34 = arith.constant 0 : index
      %c0_35 = arith.constant 0 : index
      %c0_36 = arith.constant 0 : index
      %95 = vector.load %arg2[%c0_34, %c0_35, %c0_36] : memref<1x8x32xf32, #tpu.memory_space<vmem>>, vector<1x8x32xf32>
      %96 = vector.shape_cast %95 : vector<1x8x32xf32> to vector<8x32xf32>
      %c0_37 = arith.constant 0 : index
      %c0_38 = arith.constant 0 : index
      %97 = vector.load %arg3[%c0_37, %c0_38] : memref<1x32xf32, #tpu.memory_space<vmem>>, vector<1x32xf32>
      %c0_39 = arith.constant 0 : index
      %c0_40 = arith.constant 0 : index
      %98 = vector.load %arg4[%c0_39, %c0_40] : memref<1x32xf32, #tpu.memory_space<vmem>>, vector<1x32xf32>
      %cst_41 = arith.constant dense<0.000000e+00> : vector<8xf32>
      %99 = vector.multi_reduction <add>, %96, %cst_41 [1] : vector<8x32xf32> to vector<8xf32>
      %100 = vector.shape_cast %99 : vector<8xf32> to vector<8x1xf32>
      %cst_42 = arith.constant 3.200000e+01 : f32
      %101 = vector.broadcast %cst_42 : f32 to vector<8x1xf32>
      %102 = arith.divf %100, %101 : vector<8x1xf32>
      %103 = vector.broadcast %102 : vector<8x1xf32> to vector<8x32xf32>
      %104 = arith.subf %96, %103 : vector<8x32xf32>
      %105 = arith.mulf %104, %104 : vector<8x32xf32>
      %cst_43 = arith.constant dense<0.000000e+00> : vector<8xf32>
      %106 = vector.multi_reduction <add>, %105, %cst_43 [1] : vector<8x32xf32> to vector<8xf32>
      %107 = vector.shape_cast %106 : vector<8xf32> to vector<8x1xf32>
      %cst_44 = arith.constant 3.200000e+01 : f32
      %108 = vector.broadcast %cst_44 : f32 to vector<8x1xf32>
      %109 = arith.divf %107, %108 : vector<8x1xf32>
      %110 = vector.broadcast %102 : vector<8x1xf32> to vector<8x32xf32>
      %111 = arith.subf %96, %110 : vector<8x32xf32>
      %cst_45 = arith.constant 9.99999974E-6 : f32
      %112 = vector.broadcast %cst_45 : f32 to vector<8x1xf32>
      %113 = arith.addf %109, %112 : vector<8x1xf32>
      %114 = math.rsqrt %113 : vector<8x1xf32>
      %115 = vector.broadcast %114 : vector<8x1xf32> to vector<8x32xf32>
      %116 = arith.mulf %111, %115 : vector<8x32xf32>
      %117 = vector.broadcast %97 : vector<1x32xf32> to vector<8x32xf32>
      %118 = arith.mulf %116, %117 : vector<8x32xf32>
      %119 = vector.broadcast %98 : vector<1x32xf32> to vector<8x32xf32>
      %120 = arith.addf %118, %119 : vector<8x32xf32>
      %121 = arith.truncf %120 : vector<8x32xf32> to vector<8x32xbf16>
      %c0_46 = arith.constant 0 : index
      %c0_47 = arith.constant 0 : index
      %122 = vector.load %arg10[%c0_46, %c0_47] : memref<8x32xbf16, #tpu.memory_space<vmem>>, vector<8x32xbf16>
      tpu.vector_store %arg10[%c0_46, %c0_47], %121 {strides = array<i32>} : memref<8x32xbf16, #tpu.memory_space<vmem>>, vector<8x32xbf16>,
      %cst_48 = arith.constant 0.000000e+00 : f32
      %123 = vector.broadcast %cst_48 : f32 to vector<8x32xf32>
      %c0_49 = arith.constant 0 : index
      %c0_50 = arith.constant 0 : index
      %124 = vector.load %arg11[%c0_49, %c0_50] : memref<8x32xf32, #tpu.memory_space<vmem>>, vector<8x32xf32>
      tpu.vector_store %arg11[%c0_49, %c0_50], %123 {strides = array<i32>} : memref<8x32xf32, #tpu.memory_space<vmem>>, vector<8x32xf32>,
    } else {
    }
    %c0 = arith.constant 0 : index
    %c0_1 = arith.constant 0 : index
    %3 = vector.load %arg10[%c0, %c0_1] : memref<8x32xbf16, #tpu.memory_space<vmem>>, vector<8x32xbf16>
    %c0_2 = arith.constant 0 : index
    %c0_3 = arith.constant 0 : index
    %c0_4 = arith.constant 0 : index
    %4 = vector.load %arg5[%c0_2, %c0_3, %c0_4] : memref<1x32x96xbf16, #tpu.memory_space<vmem>>, vector<1x32x96xbf16>
    %5 = vector.shape_cast %4 : vector<1x32x96xbf16> to vector<32x96xbf16>
    %cst = arith.constant dense<0.000000e+00> : vector<8x96xf32>
    %6 = tpu.matmul %3, %5, %cst {dimension_numbers = #tpu.dot_dimension_numbers<[1], [0], [0], [1], [0, 0, 1, 1], [], []>} : vector<8x32xbf16>, vector<32x96xbf16>, vector<8x96xf32> -> vector<8x96xf32>
    %c0_5 = arith.constant 0 : index
    %c0_6 = arith.constant 0 : index
    %c0_7 = arith.constant 0 : index
    %7 = vector.load %arg6[%c0_5, %c0_6, %c0_7] : memref<1x1x96xf32, #tpu.memory_space<vmem>>, vector<1x1x96xf32>
    %8 = vector.shape_cast %7 : vector<1x1x96xf32> to vector<1x96xf32>
    %9 = vector.broadcast %8 : vector<1x96xf32> to vector<8x96xf32>
    %10 = arith.addf %6, %9 : vector<8x96xf32>
    %11 = vector.extract_strided_slice %10 {offsets = [0, 0], sizes = [8, 32], strides = [1, 1]} : vector<8x96xf32> to vector<8x32xf32>
    %12 = arith.truncf %11 : vector<8x32xf32> to vector<8x32xbf16>
    %13 = vector.extract_strided_slice %10 {offsets = [0, 32], sizes = [8, 32], strides = [1, 1]} : vector<8x96xf32> to vector<8x32xf32>
    %14 = arith.truncf %13 : vector<8x32xf32> to vector<8x32xbf16>
    %15 = vector.extract_strided_slice %10 {offsets = [0, 64], sizes = [8, 32], strides = [1, 1]} : vector<8x96xf32> to vector<8x32xf32>
    %16 = arith.truncf %15 : vector<8x32xf32> to vector<8x32xbf16>
    %17 = vector.extract_strided_slice %12 {offsets = [0, 0], sizes = [8, 8], strides = [1, 1]} : vector<8x32xbf16> to vector<8x8xbf16>
    %18 = vector.extract_strided_slice %14 {offsets = [0, 0], sizes = [8, 8], strides = [1, 1]} : vector<8x32xbf16> to vector<8x8xbf16>
    "tpu.trace_start"() <{level = 10 : i32, message = "qd,kd->qk"}> : () -> ()
    %cst_8 = arith.constant dense<0.000000e+00> : vector<8x8xf32>
    %19 = tpu.matmul %17, %18, %cst_8 {dimension_numbers = #tpu.dot_dimension_numbers<[1], [1], [0], [0], [0, 0, 1, 0], [], []>} : vector<8x8xbf16>, vector<8x8xbf16>, vector<8x8xf32> -> vector<8x8xf32>
    "tpu.trace_stop"() : () -> ()
    %cst_9 = arith.constant dense<0xFF800000> : vector<8xf32>
    %20 = vector.multi_reduction <maximumf>, %19, %cst_9 [1] : vector<8x8xf32> to vector<8xf32>
    %21 = vector.shape_cast %20 : vector<8xf32> to vector<8x1xf32>
    %22 = vector.broadcast %21 : vector<8x1xf32> to vector<8x8xf32>
    %23 = arith.subf %19, %22 : vector<8x8xf32>
    %24 = math.exp %23 : vector<8x8xf32>
    %cst_10 = arith.constant dense<0.000000e+00> : vector<8xf32>
    %25 = vector.multi_reduction <add>, %24, %cst_10 [1] : vector<8x8xf32> to vector<8xf32>
    %26 = vector.shape_cast %25 : vector<8xf32> to vector<8x1xf32>
    %27 = arith.truncf %24 : vector<8x8xf32> to vector<8x8xbf16>
    %28 = vector.extract_strided_slice %16 {offsets = [0, 0], sizes = [8, 8], strides = [1, 1]} : vector<8x32xbf16> to vector<8x8xbf16>
    %cst_11 = arith.constant dense<0.000000e+00> : vector<8x8xf32>
    %29 = tpu.matmul %27, %28, %cst_11 {dimension_numbers = #tpu.dot_dimension_numbers<[1], [0], [0], [1], [0, 0, 1, 1], [], []>} : vector<8x8xbf16>, vector<8x8xbf16>, vector<8x8xf32> -> vector<8x8xf32>
    %30 = tpu.reciprocal %26 {approx = true} : vector<8x1xf32> -> vector<8x1xf32>
    %31 = vector.broadcast %30 : vector<8x1xf32> to vector<8x8xf32>
    %32 = arith.mulf %29, %31 : vector<8x8xf32>
    %33 = arith.truncf %32 : vector<8x8xf32> to vector<8x8xbf16>
    %34 = vector.extract_strided_slice %12 {offsets = [0, 8], sizes = [8, 8], strides = [1, 1]} : vector<8x32xbf16> to vector<8x8xbf16>
    %35 = vector.extract_strided_slice %14 {offsets = [0, 8], sizes = [8, 8], strides = [1, 1]} : vector<8x32xbf16> to vector<8x8xbf16>
    "tpu.trace_start"() <{level = 10 : i32, message = "qd,kd->qk"}> : () -> ()
    %cst_12 = arith.constant dense<0.000000e+00> : vector<8x8xf32>
    %36 = tpu.matmul %34, %35, %cst_12 {dimension_numbers = #tpu.dot_dimension_numbers<[1], [1], [0], [0], [0, 0, 1, 0], [], []>} : vector<8x8xbf16>, vector<8x8xbf16>, vector<8x8xf32> -> vector<8x8xf32>
    "tpu.trace_stop"() : () -> ()
    %cst_13 = arith.constant dense<0xFF800000> : vector<8xf32>
    %37 = vector.multi_reduction <maximumf>, %36, %cst_13 [1] : vector<8x8xf32> to vector<8xf32>
    %38 = vector.shape_cast %37 : vector<8xf32> to vector<8x1xf32>
    %39 = vector.broadcast %38 : vector<8x1xf32> to vector<8x8xf32>
    %40 = arith.subf %36, %39 : vector<8x8xf32>
    %41 = math.exp %40 : vector<8x8xf32>
    %cst_14 = arith.constant dense<0.000000e+00> : vector<8xf32>
    %42 = vector.multi_reduction <add>, %41, %cst_14 [1] : vector<8x8xf32> to vector<8xf32>
    %43 = vector.shape_cast %42 : vector<8xf32> to vector<8x1xf32>
    %44 = arith.truncf %41 : vector<8x8xf32> to vector<8x8xbf16>
    %45 = vector.extract_strided_slice %16 {offsets = [0, 8], sizes = [8, 8], strides = [1, 1]} : vector<8x32xbf16> to vector<8x8xbf16>
    %cst_15 = arith.constant dense<0.000000e+00> : vector<8x8xf32>
    %46 = tpu.matmul %44, %45, %cst_15 {dimension_numbers = #tpu.dot_dimension_numbers<[1], [0], [0], [1], [0, 0, 1, 1], [], []>} : vector<8x8xbf16>, vector<8x8xbf16>, vector<8x8xf32> -> vector<8x8xf32>
    %47 = tpu.reciprocal %43 {approx = true} : vector<8x1xf32> -> vector<8x1xf32>
    %48 = vector.broadcast %47 : vector<8x1xf32> to vector<8x8xf32>
    %49 = arith.mulf %46, %48 : vector<8x8xf32>
    %50 = arith.truncf %49 : vector<8x8xf32> to vector<8x8xbf16>
    %51 = vector.extract_strided_slice %12 {offsets = [0, 16], sizes = [8, 8], strides = [1, 1]} : vector<8x32xbf16> to vector<8x8xbf16>
    %52 = vector.extract_strided_slice %14 {offsets = [0, 16], sizes = [8, 8], strides = [1, 1]} : vector<8x32xbf16> to vector<8x8xbf16>
    "tpu.trace_start"() <{level = 10 : i32, message = "qd,kd->qk"}> : () -> ()
    %cst_16 = arith.constant dense<0.000000e+00> : vector<8x8xf32>
    %53 = tpu.matmul %51, %52, %cst_16 {dimension_numbers = #tpu.dot_dimension_numbers<[1], [1], [0], [0], [0, 0, 1, 0], [], []>} : vector<8x8xbf16>, vector<8x8xbf16>, vector<8x8xf32> -> vector<8x8xf32>
    "tpu.trace_stop"() : () -> ()
    %cst_17 = arith.constant dense<0xFF800000> : vector<8xf32>
    %54 = vector.multi_reduction <maximumf>, %53, %cst_17 [1] : vector<8x8xf32> to vector<8xf32>
    %55 = vector.shape_cast %54 : vector<8xf32> to vector<8x1xf32>
    %56 = vector.broadcast %55 : vector<8x1xf32> to vector<8x8xf32>
    %57 = arith.subf %53, %56 : vector<8x8xf32>
    %58 = math.exp %57 : vector<8x8xf32>
    %cst_18 = arith.constant dense<0.000000e+00> : vector<8xf32>
    %59 = vector.multi_reduction <add>, %58, %cst_18 [1] : vector<8x8xf32> to vector<8xf32>
    %60 = vector.shape_cast %59 : vector<8xf32> to vector<8x1xf32>
    %61 = arith.truncf %58 : vector<8x8xf32> to vector<8x8xbf16>
    %62 = vector.extract_strided_slice %16 {offsets = [0, 16], sizes = [8, 8], strides = [1, 1]} : vector<8x32xbf16> to vector<8x8xbf16>
    %cst_19 = arith.constant dense<0.000000e+00> : vector<8x8xf32>
    %63 = tpu.matmul %61, %62, %cst_19 {dimension_numbers = #tpu.dot_dimension_numbers<[1], [0], [0], [1], [0, 0, 1, 1], [], []>} : vector<8x8xbf16>, vector<8x8xbf16>, vector<8x8xf32> -> vector<8x8xf32>
    %64 = tpu.reciprocal %60 {approx = true} : vector<8x1xf32> -> vector<8x1xf32>
    %65 = vector.broadcast %64 : vector<8x1xf32> to vector<8x8xf32>
    %66 = arith.mulf %63, %65 : vector<8x8xf32>
    %67 = arith.truncf %66 : vector<8x8xf32> to vector<8x8xbf16>
    %68 = vector.extract_strided_slice %12 {offsets = [0, 24], sizes = [8, 8], strides = [1, 1]} : vector<8x32xbf16> to vector<8x8xbf16>
    %69 = vector.extract_strided_slice %14 {offsets = [0, 24], sizes = [8, 8], strides = [1, 1]} : vector<8x32xbf16> to vector<8x8xbf16>
    "tpu.trace_start"() <{level = 10 : i32, message = "qd,kd->qk"}> : () -> ()
    %cst_20 = arith.constant dense<0.000000e+00> : vector<8x8xf32>
    %70 = tpu.matmul %68, %69, %cst_20 {dimension_numbers = #tpu.dot_dimension_numbers<[1], [1], [0], [0], [0, 0, 1, 0], [], []>} : vector<8x8xbf16>, vector<8x8xbf16>, vector<8x8xf32> -> vector<8x8xf32>
    "tpu.trace_stop"() : () -> ()
    %cst_21 = arith.constant dense<0xFF800000> : vector<8xf32>
    %71 = vector.multi_reduction <maximumf>, %70, %cst_21 [1] : vector<8x8xf32> to vector<8xf32>
    %72 = vector.shape_cast %71 : vector<8xf32> to vector<8x1xf32>
    %73 = vector.broadcast %72 : vector<8x1xf32> to vector<8x8xf32>
    %74 = arith.subf %70, %73 : vector<8x8xf32>
    %75 = math.exp %74 : vector<8x8xf32>
    %cst_22 = arith.constant dense<0.000000e+00> : vector<8xf32>
    %76 = vector.multi_reduction <add>, %75, %cst_22 [1] : vector<8x8xf32> to vector<8xf32>
    %77 = vector.shape_cast %76 : vector<8xf32> to vector<8x1xf32>
    %78 = arith.truncf %75 : vector<8x8xf32> to vector<8x8xbf16>
    %79 = vector.extract_strided_slice %16 {offsets = [0, 24], sizes = [8, 8], strides = [1, 1]} : vector<8x32xbf16> to vector<8x8xbf16>
    %cst_23 = arith.constant dense<0.000000e+00> : vector<8x8xf32>
    %80 = tpu.matmul %78, %79, %cst_23 {dimension_numbers = #tpu.dot_dimension_numbers<[1], [0], [0], [1], [0, 0, 1, 1], [], []>} : vector<8x8xbf16>, vector<8x8xbf16>, vector<8x8xf32> -> vector<8x8xf32>
    %81 = tpu.reciprocal %77 {approx = true} : vector<8x1xf32> -> vector<8x1xf32>
    %82 = vector.broadcast %81 : vector<8x1xf32> to vector<8x8xf32>
    %83 = arith.mulf %80, %82 : vector<8x8xf32>
    %84 = arith.truncf %83 : vector<8x8xf32> to vector<8x8xbf16>
    %85 = tpu.concatenate %33, %50, %67, %84 in 1 : vector<8x8xbf16>, vector<8x8xbf16>, vector<8x8xbf16>, vector<8x8xbf16> -> vector<8x32xbf16>
    %c0_24 = arith.constant 0 : index
    %c0_25 = arith.constant 0 : index
    %86 = vector.load %arg11[%c0_24, %c0_25] : memref<8x32xf32, #tpu.memory_space<vmem>>, vector<8x32xf32>
    %c0_26 = arith.constant 0 : index
    %c0_27 = arith.constant 0 : index
    %c0_28 = arith.constant 0 : index
    %87 = vector.load %arg7[%c0_26, %c0_27, %c0_28] : memref<1x32x32xbf16, #tpu.memory_space<vmem>>, vector<1x32x32xbf16>
    %88 = vector.shape_cast %87 : vector<1x32x32xbf16> to vector<32x32xbf16>
    %cst_29 = arith.constant dense<0.000000e+00> : vector<8x32xf32>
    %89 = tpu.matmul %85, %88, %cst_29 {dimension_numbers = #tpu.dot_dimension_numbers<[1], [0], [0], [1], [0, 0, 1, 1], [], []>} : vector<8x32xbf16>, vector<32x32xbf16>, vector<8x32xf32> -> vector<8x32xf32>
    %90 = arith.addf %86, %89 : vector<8x32xf32>
    %c0_30 = arith.constant 0 : index
    %c0_31 = arith.constant 0 : index
    %91 = vector.load %arg11[%c0_30, %c0_31] : memref<8x32xf32, #tpu.memory_space<vmem>>, vector<8x32xf32>
    tpu.vector_store %arg11[%c0_30, %c0_31], %90 {strides = array<i32>} : memref<8x32xf32, #tpu.memory_space<vmem>>, vector<8x32xf32>,
    %c0_i32_32 = arith.constant 0 : i32
    %92 = arith.cmpi eq, %arg1, %c0_i32_32 : i32
    %93 = arith.extui %92 : i1 to i32
    %c0_i32_33 = arith.constant 0 : i32
    %94 = arith.cmpi ne, %93, %c0_i32_33 : i32
    scf.if %94 {
      %c0_34 = arith.constant 0 : index
      %c0_35 = arith.constant 0 : index
      %c0_36 = arith.constant 0 : index
      %95 = vector.load %arg2[%c0_34, %c0_35, %c0_36] : memref<1x8x32xf32, #tpu.memory_space<vmem>>, vector<1x8x32xf32>
      %96 = vector.shape_cast %95 : vector<1x8x32xf32> to vector<8x32xf32>
      %c0_37 = arith.constant 0 : index
      %c0_38 = arith.constant 0 : index
      %97 = vector.load %arg11[%c0_37, %c0_38] : memref<8x32xf32, #tpu.memory_space<vmem>>, vector<8x32xf32>
      %98 = arith.addf %96, %97 : vector<8x32xf32>
      %c0_39 = arith.constant 0 : index
      %c0_40 = arith.constant 0 : index
      %99 = vector.load %arg8[%c0_39, %c0_40] : memref<1x32xf32, #tpu.memory_space<vmem>>, vector<1x32xf32>
      %100 = vector.broadcast %99 : vector<1x32xf32> to vector<8x32xf32>
      %101 = arith.addf %98, %100 : vector<8x32xf32>
      %c0_41 = arith.constant 0 : index
      %c0_42 = arith.constant 0 : index
      %c0_43 = arith.constant 0 : index
      %102 = vector.load %arg9[%c0_41, %c0_42, %c0_43] : memref<1x8x32xf32, #tpu.memory_space<vmem>>, vector<1x8x32xf32>
      %103 = vector.shape_cast %102 : vector<1x8x32xf32> to vector<8x32xf32>
      %104 = vector.shape_cast %101 : vector<8x32xf32> to vector<1x8x32xf32>
      tpu.vector_store %arg9[%c0_41, %c0_42, %c0_43], %104 {strides = array<i32>} : memref<1x8x32xf32, #tpu.memory_space<vmem>>, vector<1x8x32xf32>,
    } else {
    }
    return
  }
  func.func @transform_0(%arg0: i32, %arg1: i32) -> (i32, i32, i32) {
    %c0_i32 = arith.constant 0 : i32
    %c0_i32_0 = arith.constant 0 : i32
    %c0_i32_1 = arith.constant 0 : i32
    return %arg0, %c0_i32, %c0_i32_0 : i32, i32, i32
  }
  func.func @transform_1(%arg0: i32, %arg1: i32) -> (i32, i32) {
    %c0_i32 = arith.constant 0 : i32
    %c0_i32_0 = arith.constant 0 : i32
    %c0_i32_1 = arith.constant 0 : i32
    return %c0_i32, %c0_i32_0 : i32, i32
  }
  func.func @transform_2(%arg0: i32, %arg1: i32) -> (i32, i32) {
    %c0_i32 = arith.constant 0 : i32
    %c0_i32_0 = arith.constant 0 : i32
    %c0_i32_1 = arith.constant 0 : i32
    return %c0_i32, %c0_i32_0 : i32, i32
  }
  func.func @transform_3(%arg0: i32, %arg1: i32) -> (i32, i32, i32) {
    %c0_i32 = arith.constant 0 : i32
    %c0_i32_0 = arith.constant 0 : i32
    %c0_i32_1 = arith.constant 0 : i32
    return %arg1, %c0_i32, %c0_i32_0 : i32, i32, i32
  }
  func.func @transform_4(%arg0: i32, %arg1: i32) -> (i32, i32, i32) {
    %c0_i32 = arith.constant 0 : i32
    %c0_i32_0 = arith.constant 0 : i32
    %c0_i32_1 = arith.constant 0 : i32
    return %arg1, %c0_i32, %c0_i32_0 : i32, i32, i32
  }
  func.func @transform_5(%arg0: i32, %arg1: i32) -> (i32, i32, i32) {
    %c0_i32 = arith.constant 0 : i32
    %c0_i32_0 = arith.constant 0 : i32
    %c0_i32_1 = arith.constant 0 : i32
    return %arg1, %c0_i32, %c0_i32_0 : i32, i32, i32
  }
  func.func @transform_6(%arg0: i32, %arg1: i32) -> (i32, i32) {
    %c0_i32 = arith.constant 0 : i32
    %c0_i32_0 = arith.constant 0 : i32
    %c0_i32_1 = arith.constant 0 : i32
    return %c0_i32, %c0_i32_0 : i32, i32
  }
  func.func @transform_7(%arg0: i32, %arg1: i32) -> (i32, i32, i32) {
    %c0_i32 = arith.constant 0 : i32
    %c0_i32_0 = arith.constant 0 : i32
    %c0_i32_1 = arith.constant 0 : i32
    return %arg0, %c0_i32, %c0_i32_0 : i32, i32, i32
  }
}

module attributes {stable_mosaic.version = 11 : i64} {
  func.func @_attn_block_kernel(%arg0: i32, %arg1: i32, %arg2: memref<1x8x32xf32, #tpu.memory_space<vmem>>, %arg3: memref<1x32xf32, #tpu.memory_space<vmem>>, %arg4: memref<1x32xf32, #tpu.memory_space<vmem>>, %arg5: memref<1x32x96xbf16, #tpu.memory_space<vmem>>, %arg6: memref<1x1x96xf32, #tpu.memory_space<vmem>>, %arg7: memref<1x32x32xbf16, #tpu.memory_space<vmem>>, %arg8: memref<1x32xf32, #tpu.memory_space<vmem>>, %arg9: memref<1x8x32xf32, #tpu.memory_space<vmem>>, %arg10: memref<8x32xbf16, #tpu.memory_space<vmem>>, %arg11: memref<8x32xf32, #tpu.memory_space<vmem>>) attributes {dimension_semantics = [#tpu.dimension_semantics<parallel>, #tpu.dimension_semantics<arbitrary>], iteration_bounds = array<i64: 2, 1>, scalar_prefetch = 0 : i64, scratch_operands = 2 : i64, tpu.core_type = #tpu.core_type<tc>, window_params = [{transform_indices = @transform_0, window_bounds = array<i64: 1, 8, 32>}, {pipeline_mode = #tpu.pipeline_mode<synchronous>, transform_indices = @transform_1, window_bounds = array<i64: 1, 32>}, {pipeline_mode = #tpu.pipeline_mode<synchronous>, transform_indices = @transform_2, window_bounds = array<i64: 1, 32>}, {transform_indices = @transform_3, window_bounds = array<i64: 1, 32, 96>}, {transform_indices = @transform_4, window_bounds = array<i64: 1, 1, 96>}, {transform_indices = @transform_5, window_bounds = array<i64: 1, 32, 32>}, {pipeline_mode = #tpu.pipeline_mode<synchronous>, transform_indices = @transform_6, window_bounds = array<i64: 1, 32>}, {transform_indices = @transform_7, window_bounds = array<i64: 1, 8, 32>}]} {
    %c0_i32 = arith.constant 0 : i32
    %0 = arith.cmpi eq, %arg1, %c0_i32 : i32
    %1 = arith.extui %0 : i1 to i32
    %c0_i32_0 = arith.constant 0 : i32
    %2 = arith.cmpi ne, %1, %c0_i32_0 : i32
    scf.if %2 {
      %c0_34 = arith.constant 0 : index
      %c0_35 = arith.constant 0 : index
      %c0_36 = arith.constant 0 : index
      %95 = vector.load %arg2[%c0_34, %c0_35, %c0_36] : memref<1x8x32xf32, #tpu.memory_space<vmem>>, vector<1x8x32xf32>
      %96 = vector.shape_cast %95 : vector<1x8x32xf32> to vector<8x32xf32>
      %c0_37 = arith.constant 0 : index
      %c0_38 = arith.constant 0 : index
      %97 = vector.load %arg3[%c0_37, %c0_38] : memref<1x32xf32, #tpu.memory_space<vmem>>, vector<1x32xf32>
      %c0_39 = arith.constant 0 : index
      %c0_40 = arith.constant 0 : index
      %98 = vector.load %arg4[%c0_39, %c0_40] : memref<1x32xf32, #tpu.memory_space<vmem>>, vector<1x32xf32>
      %cst_41 = arith.constant dense<0.000000e+00> : vector<8xf32>
      %99 = vector.multi_reduction <add>, %96, %cst_41 [1] : vector<8x32xf32> to vector<8xf32>
      %100 = vector.shape_cast %99 : vector<8xf32> to vector<8x1xf32>
      %cst_42 = arith.constant 3.200000e+01 : f32
      %101 = vector.broadcast %cst_42 : f32 to vector<8x1xf32>
      %102 = arith.divf %100, %101 : vector<8x1xf32>
      %103 = vector.broadcast %102 : vector<8x1xf32> to vector<8x32xf32>
      %104 = arith.subf %96, %103 : vector<8x32xf32>
      %105 = arith.mulf %104, %104 : vector<8x32xf32>
      %cst_43 = arith.constant dense<0.000000e+00> : vector<8xf32>
      %106 = vector.multi_reduction <add>, %105, %cst_43 [1] : vector<8x32xf32> to vector<8xf32>
      %107 = vector.shape_cast %106 : vector<8xf32> to vector<8x1xf32>
      %cst_44 = arith.constant 3.200000e+01 : f32
      %108 = vector.broadcast %cst_44 : f32 to vector<8x1xf32>
      %109 = arith.divf %107, %108 : vector<8x1xf32>
      %110 = vector.broadcast %102 : vector<8x1xf32> to vector<8x32xf32>
      %111 = arith.subf %96, %110 : vector<8x32xf32>
      %cst_45 = arith.constant 9.99999974E-6 : f32
      %112 = vector.broadcast %cst_45 : f32 to vector<8x1xf32>
      %113 = arith.addf %109, %112 : vector<8x1xf32>
      %114 = math.rsqrt %113 : vector<8x1xf32>
      %115 = vector.broadcast %114 : vector<8x1xf32> to vector<8x32xf32>
      %116 = arith.mulf %111, %115 : vector<8x32xf32>
      %117 = vector.broadcast %97 : vector<1x32xf32> to vector<8x32xf32>
      %118 = arith.mulf %116, %117 : vector<8x32xf32>
      %119 = vector.broadcast %98 : vector<1x32xf32> to vector<8x32xf32>
      %120 = arith.addf %118, %119 : vector<8x32xf32>
      %121 = arith.truncf %120 : vector<8x32xf32> to vector<8x32xbf16>
      %c0_46 = arith.constant 0 : index
      %c0_47 = arith.constant 0 : index
      %122 = vector.load %arg10[%c0_46, %c0_47] : memref<8x32xbf16, #tpu.memory_space<vmem>>, vector<8x32xbf16>
      tpu.vector_store %arg10[%c0_46, %c0_47], %121 {strides = array<i32>} : memref<8x32xbf16, #tpu.memory_space<vmem>>, vector<8x32xbf16>,
      %cst_48 = arith.constant 0.000000e+00 : f32
      %123 = vector.broadcast %cst_48 : f32 to vector<8x32xf32>
      %c0_49 = arith.constant 0 : index
      %c0_50 = arith.constant 0 : index
      %124 = vector.load %arg11[%c0_49, %c0_50] : memref<8x32xf32, #tpu.memory_space<vmem>>, vector<8x32xf32>
      tpu.vector_store %arg11[%c0_49, %c0_50], %123 {strides = array<i32>} : memref<8x32xf32, #tpu.memory_space<vmem>>, vector<8x32xf32>,
    } else {
    }
    %c0 = arith.constant 0 : index
    %c0_1 = arith.constant 0 : index
    %3 = vector.load %arg10[%c0, %c0_1] : memref<8x32xbf16, #tpu.memory_space<vmem>>, vector<8x32xbf16>
    %c0_2 = arith.constant 0 : index
    %c0_3 = arith.constant 0 : index
    %c0_4 = arith.constant 0 : index
    %4 = vector.load %arg5[%c0_2, %c0_3, %c0_4] : memref<1x32x96xbf16, #tpu.memory_space<vmem>>, vector<1x32x96xbf16>
    %5 = vector.shape_cast %4 : vector<1x32x96xbf16> to vector<32x96xbf16>
    %cst = arith.constant dense<0.000000e+00> : vector<8x96xf32>
    %6 = tpu.matmul %3, %5, %cst {dimension_numbers = #tpu.dot_dimension_numbers<[1], [0], [0], [1], [0, 0, 1, 1], [], []>} : vector<8x32xbf16>, vector<32x96xbf16>, vector<8x96xf32> -> vector<8x96xf32>
    %c0_5 = arith.constant 0 : index
    %c0_6 = arith.constant 0 : index
    %c0_7 = arith.constant 0 : index
    %7 = vector.load %arg6[%c0_5, %c0_6, %c0_7] : memref<1x1x96xf32, #tpu.memory_space<vmem>>, vector<1x1x96xf32>
    %8 = vector.shape_cast %7 : vector<1x1x96xf32> to vector<1x96xf32>
    %9 = vector.broadcast %8 : vector<1x96xf32> to vector<8x96xf32>
    %10 = arith.addf %6, %9 : vector<8x96xf32>
    %11 = vector.extract_strided_slice %10 {offsets = [0, 0], sizes = [8, 32], strides = [1, 1]} : vector<8x96xf32> to vector<8x32xf32>
    %12 = arith.truncf %11 : vector<8x32xf32> to vector<8x32xbf16>
    %13 = vector.extract_strided_slice %10 {offsets = [0, 32], sizes = [8, 32], strides = [1, 1]} : vector<8x96xf32> to vector<8x32xf32>
    %14 = arith.truncf %13 : vector<8x32xf32> to vector<8x32xbf16>
    %15 = vector.extract_strided_slice %10 {offsets = [0, 64], sizes = [8, 32], strides = [1, 1]} : vector<8x96xf32> to vector<8x32xf32>
    %16 = arith.truncf %15 : vector<8x32xf32> to vector<8x32xbf16>
    %17 = vector.extract_strided_slice %12 {offsets = [0, 0], sizes = [8, 8], strides = [1, 1]} : vector<8x32xbf16> to vector<8x8xbf16>
    %18 = vector.extract_strided_slice %14 {offsets = [0, 0], sizes = [8, 8], strides = [1, 1]} : vector<8x32xbf16> to vector<8x8xbf16>
    "tpu.trace_start"() <{level = 10 : i32, message = "qd,kd->qk"}> : () -> ()
    %cst_8 = arith.constant dense<0.000000e+00> : vector<8x8xf32>
    %19 = tpu.matmul %17, %18, %cst_8 {dimension_numbers = #tpu.dot_dimension_numbers<[1], [1], [0], [0], [0, 0, 1, 0], [], []>} : vector<8x8xbf16>, vector<8x8xbf16>, vector<8x8xf32> -> vector<8x8xf32>
    "tpu.trace_stop"() : () -> ()
    %cst_9 = arith.constant dense<0xFF800000> : vector<8xf32>
    %20 = vector.multi_reduction <maximumf>, %19, %cst_9 [1] : vector<8x8xf32> to vector<8xf32>
    %21 = vector.shape_cast %20 : vector<8xf32> to vector<8x1xf32>
    %22 = vector.broadcast %21 : vector<8x1xf32> to vector<8x8xf32>
    %23 = arith.subf %19, %22 : vector<8x8xf32>
    %24 = math.exp %23 : vector<8x8xf32>
    %cst_10 = arith.constant dense<0.000000e+00> : vector<8xf32>
    %25 = vector.multi_reduction <add>, %24, %cst_10 [1] : vector<8x8xf32> to vector<8xf32>
    %26 = vector.shape_cast %25 : vector<8xf32> to vector<8x1xf32>
    %27 = arith.truncf %24 : vector<8x8xf32> to vector<8x8xbf16>
    %28 = vector.extract_strided_slice %16 {offsets = [0, 0], sizes = [8, 8], strides = [1, 1]} : vector<8x32xbf16> to vector<8x8xbf16>
    %cst_11 = arith.constant dense<0.000000e+00> : vector<8x8xf32>
    %29 = tpu.matmul %27, %28, %cst_11 {dimension_numbers = #tpu.dot_dimension_numbers<[1], [0], [0], [1], [0, 0, 1, 1], [], []>} : vector<8x8xbf16>, vector<8x8xbf16>, vector<8x8xf32> -> vector<8x8xf32>
    %30 = tpu.reciprocal %26 {approx = true} : vector<8x1xf32> -> vector<8x1xf32>
    %31 = vector.broadcast %30 : vector<8x1xf32> to vector<8x8xf32>
    %32 = arith.mulf %29, %31 : vector<8x8xf32>
    %33 = arith.truncf %32 : vector<8x8xf32> to vector<8x8xbf16>
    %34 = vector.extract_strided_slice %12 {offsets = [0, 8], sizes = [8, 8], strides = [1, 1]} : vector<8x32xbf16> to vector<8x8xbf16>
    %35 = vector.extract_strided_slice %14 {offsets = [0, 8], sizes = [8, 8], strides = [1, 1]} : vector<8x32xbf16> to vector<8x8xbf16>
    "tpu.trace_start"() <{level = 10 : i32, message = "qd,kd->qk"}> : () -> ()
    %cst_12 = arith.constant dense<0.000000e+00> : vector<8x8xf32>
    %36 = tpu.matmul %34, %35, %cst_12 {dimension_numbers = #tpu.dot_dimension_numbers<[1], [1], [0], [0], [0, 0, 1, 0], [], []>} : vector<8x8xbf16>, vector<8x8xbf16>, vector<8x8xf32> -> vector<8x8xf32>
    "tpu.trace_stop"() : () -> ()
    %cst_13 = arith.constant dense<0xFF800000> : vector<8xf32>
    %37 = vector.multi_reduction <maximumf>, %36, %cst_13 [1] : vector<8x8xf32> to vector<8xf32>
    %38 = vector.shape_cast %37 : vector<8xf32> to vector<8x1xf32>
    %39 = vector.broadcast %38 : vector<8x1xf32> to vector<8x8xf32>
    %40 = arith.subf %36, %39 : vector<8x8xf32>
    %41 = math.exp %40 : vector<8x8xf32>
    %cst_14 = arith.constant dense<0.000000e+00> : vector<8xf32>
    %42 = vector.multi_reduction <add>, %41, %cst_14 [1] : vector<8x8xf32> to vector<8xf32>
    %43 = vector.shape_cast %42 : vector<8xf32> to vector<8x1xf32>
    %44 = arith.truncf %41 : vector<8x8xf32> to vector<8x8xbf16>
    %45 = vector.extract_strided_slice %16 {offsets = [0, 8], sizes = [8, 8], strides = [1, 1]} : vector<8x32xbf16> to vector<8x8xbf16>
    %cst_15 = arith.constant dense<0.000000e+00> : vector<8x8xf32>
    %46 = tpu.matmul %44, %45, %cst_15 {dimension_numbers = #tpu.dot_dimension_numbers<[1], [0], [0], [1], [0, 0, 1, 1], [], []>} : vector<8x8xbf16>, vector<8x8xbf16>, vector<8x8xf32> -> vector<8x8xf32>
    %47 = tpu.reciprocal %43 {approx = true} : vector<8x1xf32> -> vector<8x1xf32>
    %48 = vector.broadcast %47 : vector<8x1xf32> to vector<8x8xf32>
    %49 = arith.mulf %46, %48 : vector<8x8xf32>
    %50 = arith.truncf %49 : vector<8x8xf32> to vector<8x8xbf16>
    %51 = vector.extract_strided_slice %12 {offsets = [0, 16], sizes = [8, 8], strides = [1, 1]} : vector<8x32xbf16> to vector<8x8xbf16>
    %52 = vector.extract_strided_slice %14 {offsets = [0, 16], sizes = [8, 8], strides = [1, 1]} : vector<8x32xbf16> to vector<8x8xbf16>
    "tpu.trace_start"() <{level = 10 : i32, message = "qd,kd->qk"}> : () -> ()
    %cst_16 = arith.constant dense<0.000000e+00> : vector<8x8xf32>
    %53 = tpu.matmul %51, %52, %cst_16 {dimension_numbers = #tpu.dot_dimension_numbers<[1], [1], [0], [0], [0, 0, 1, 0], [], []>} : vector<8x8xbf16>, vector<8x8xbf16>, vector<8x8xf32> -> vector<8x8xf32>
    "tpu.trace_stop"() : () -> ()
    %cst_17 = arith.constant dense<0xFF800000> : vector<8xf32>
    %54 = vector.multi_reduction <maximumf>, %53, %cst_17 [1] : vector<8x8xf32> to vector<8xf32>
    %55 = vector.shape_cast %54 : vector<8xf32> to vector<8x1xf32>
    %56 = vector.broadcast %55 : vector<8x1xf32> to vector<8x8xf32>
    %57 = arith.subf %53, %56 : vector<8x8xf32>
    %58 = math.exp %57 : vector<8x8xf32>
    %cst_18 = arith.constant dense<0.000000e+00> : vector<8xf32>
    %59 = vector.multi_reduction <add>, %58, %cst_18 [1] : vector<8x8xf32> to vector<8xf32>
    %60 = vector.shape_cast %59 : vector<8xf32> to vector<8x1xf32>
    %61 = arith.truncf %58 : vector<8x8xf32> to vector<8x8xbf16>
    %62 = vector.extract_strided_slice %16 {offsets = [0, 16], sizes = [8, 8], strides = [1, 1]} : vector<8x32xbf16> to vector<8x8xbf16>
    %cst_19 = arith.constant dense<0.000000e+00> : vector<8x8xf32>
    %63 = tpu.matmul %61, %62, %cst_19 {dimension_numbers = #tpu.dot_dimension_numbers<[1], [0], [0], [1], [0, 0, 1, 1], [], []>} : vector<8x8xbf16>, vector<8x8xbf16>, vector<8x8xf32> -> vector<8x8xf32>
    %64 = tpu.reciprocal %60 {approx = true} : vector<8x1xf32> -> vector<8x1xf32>
    %65 = vector.broadcast %64 : vector<8x1xf32> to vector<8x8xf32>
    %66 = arith.mulf %63, %65 : vector<8x8xf32>
    %67 = arith.truncf %66 : vector<8x8xf32> to vector<8x8xbf16>
    %68 = vector.extract_strided_slice %12 {offsets = [0, 24], sizes = [8, 8], strides = [1, 1]} : vector<8x32xbf16> to vector<8x8xbf16>
    %69 = vector.extract_strided_slice %14 {offsets = [0, 24], sizes = [8, 8], strides = [1, 1]} : vector<8x32xbf16> to vector<8x8xbf16>
    "tpu.trace_start"() <{level = 10 : i32, message = "qd,kd->qk"}> : () -> ()
    %cst_20 = arith.constant dense<0.000000e+00> : vector<8x8xf32>
    %70 = tpu.matmul %68, %69, %cst_20 {dimension_numbers = #tpu.dot_dimension_numbers<[1], [1], [0], [0], [0, 0, 1, 0], [], []>} : vector<8x8xbf16>, vector<8x8xbf16>, vector<8x8xf32> -> vector<8x8xf32>
    "tpu.trace_stop"() : () -> ()
    %cst_21 = arith.constant dense<0xFF800000> : vector<8xf32>
    %71 = vector.multi_reduction <maximumf>, %70, %cst_21 [1] : vector<8x8xf32> to vector<8xf32>
    %72 = vector.shape_cast %71 : vector<8xf32> to vector<8x1xf32>
    %73 = vector.broadcast %72 : vector<8x1xf32> to vector<8x8xf32>
    %74 = arith.subf %70, %73 : vector<8x8xf32>
    %75 = math.exp %74 : vector<8x8xf32>
    %cst_22 = arith.constant dense<0.000000e+00> : vector<8xf32>
    %76 = vector.multi_reduction <add>, %75, %cst_22 [1] : vector<8x8xf32> to vector<8xf32>
    %77 = vector.shape_cast %76 : vector<8xf32> to vector<8x1xf32>
    %78 = arith.truncf %75 : vector<8x8xf32> to vector<8x8xbf16>
    %79 = vector.extract_strided_slice %16 {offsets = [0, 24], sizes = [8, 8], strides = [1, 1]} : vector<8x32xbf16> to vector<8x8xbf16>
    %cst_23 = arith.constant dense<0.000000e+00> : vector<8x8xf32>
    %80 = tpu.matmul %78, %79, %cst_23 {dimension_numbers = #tpu.dot_dimension_numbers<[1], [0], [0], [1], [0, 0, 1, 1], [], []>} : vector<8x8xbf16>, vector<8x8xbf16>, vector<8x8xf32> -> vector<8x8xf32>
    %81 = tpu.reciprocal %77 {approx = true} : vector<8x1xf32> -> vector<8x1xf32>
    %82 = vector.broadcast %81 : vector<8x1xf32> to vector<8x8xf32>
    %83 = arith.mulf %80, %82 : vector<8x8xf32>
    %84 = arith.truncf %83 : vector<8x8xf32> to vector<8x8xbf16>
    %85 = tpu.concatenate %33, %50, %67, %84 in 1 : vector<8x8xbf16>, vector<8x8xbf16>, vector<8x8xbf16>, vector<8x8xbf16> -> vector<8x32xbf16>
    %c0_24 = arith.constant 0 : index
    %c0_25 = arith.constant 0 : index
    %86 = vector.load %arg11[%c0_24, %c0_25] : memref<8x32xf32, #tpu.memory_space<vmem>>, vector<8x32xf32>
    %c0_26 = arith.constant 0 : index
    %c0_27 = arith.constant 0 : index
    %c0_28 = arith.constant 0 : index
    %87 = vector.load %arg7[%c0_26, %c0_27, %c0_28] : memref<1x32x32xbf16, #tpu.memory_space<vmem>>, vector<1x32x32xbf16>
    %88 = vector.shape_cast %87 : vector<1x32x32xbf16> to vector<32x32xbf16>
    %cst_29 = arith.constant dense<0.000000e+00> : vector<8x32xf32>
    %89 = tpu.matmul %85, %88, %cst_29 {dimension_numbers = #tpu.dot_dimension_numbers<[1], [0], [0], [1], [0, 0, 1, 1], [], []>} : vector<8x32xbf16>, vector<32x32xbf16>, vector<8x32xf32> -> vector<8x32xf32>
    %90 = arith.addf %86, %89 : vector<8x32xf32>
    %c0_30 = arith.constant 0 : index
    %c0_31 = arith.constant 0 : index
    %91 = vector.load %arg11[%c0_30, %c0_31] : memref<8x32xf32, #tpu.memory_space<vmem>>, vector<8x32xf32>
    tpu.vector_store %arg11[%c0_30, %c0_31], %90 {strides = array<i32>} : memref<8x32xf32, #tpu.memory_space<vmem>>, vector<8x32xf32>,
    %c0_i32_32 = arith.constant 0 : i32
    %92 = arith.cmpi eq, %arg1, %c0_i32_32 : i32
    %93 = arith.extui %92 : i1 to i32
    %c0_i32_33 = arith.constant 0 : i32
    %94 = arith.cmpi ne, %93, %c0_i32_33 : i32
    scf.if %94 {
      %c0_34 = arith.constant 0 : index
      %c0_35 = arith.constant 0 : index
      %c0_36 = arith.constant 0 : index
      %95 = vector.load %arg2[%c0_34, %c0_35, %c0_36] : memref<1x8x32xf32, #tpu.memory_space<vmem>>, vector<1x8x32xf32>
      %96 = vector.shape_cast %95 : vector<1x8x32xf32> to vector<8x32xf32>
      %c0_37 = arith.constant 0 : index
      %c0_38 = arith.constant 0 : index
      %97 = vector.load %arg11[%c0_37, %c0_38] : memref<8x32xf32, #tpu.memory_space<vmem>>, vector<8x32xf32>
      %98 = arith.addf %96, %97 : vector<8x32xf32>
      %c0_39 = arith.constant 0 : index
      %c0_40 = arith.constant 0 : index
      %99 = vector.load %arg8[%c0_39, %c0_40] : memref<1x32xf32, #tpu.memory_space<vmem>>, vector<1x32xf32>
      %100 = vector.broadcast %99 : vector<1x32xf32> to vector<8x32xf32>
      %101 = arith.addf %98, %100 : vector<8x32xf32>
      %c0_41 = arith.constant 0 : index
      %c0_42 = arith.constant 0 : index
      %c0_43 = arith.constant 0 : index
      %102 = vector.load %arg9[%c0_41, %c0_42, %c0_43] : memref<1x8x32xf32, #tpu.memory_space<vmem>>, vector<1x8x32xf32>
      %103 = vector.shape_cast %102 : vector<1x8x32xf32> to vector<8x32xf32>
      %104 = vector.shape_cast %101 : vector<8x32xf32> to vector<1x8x32xf32>
      tpu.vector_store %arg9[%c0_41, %c0_42, %c0_43], %104 {strides = array<i32>} : memref<1x8x32xf32, #tpu.memory_space<vmem>>, vector<1x8x32xf32>,
    } else {
    }
    return
  }
  func.func @transform_0(%arg0: i32, %arg1: i32) -> (i32, i32, i32) {
    %c0_i32 = arith.constant 0 : i32
    %c0_i32_0 = arith.constant 0 : i32
    %c0_i32_1 = arith.constant 0 : i32
    return %arg0, %c0_i32, %c0_i32_0 : i32, i32, i32
  }
  func.func @transform_1(%arg0: i32, %arg1: i32) -> (i32, i32) {
    %c0_i32 = arith.constant 0 : i32
    %c0_i32_0 = arith.constant 0 : i32
    %c0_i32_1 = arith.constant 0 : i32
    return %c0_i32, %c0_i32_0 : i32, i32
  }
  func.func @transform_2(%arg0: i32, %arg1: i32) -> (i32, i32) {
    %c0_i32 = arith.constant 0 : i32
    %c0_i32_0 = arith.constant 0 : i32
    %c0_i32_1 = arith.constant 0 : i32
    return %c0_i32, %c0_i32_0 : i32, i32
  }
  func.func @transform_3(%arg0: i32, %arg1: i32) -> (i32, i32, i32) {
    %c0_i32 = arith.constant 0 : i32
    %c0_i32_0 = arith.constant 0 : i32
    %c0_i32_1 = arith.constant 0 : i32
    return %arg1, %c0_i32, %c0_i32_0 : i32, i32, i32
  }
  func.func @transform_4(%arg0: i32, %arg1: i32) -> (i32, i32, i32) {
    %c0_i32 = arith.constant 0 : i32
    %c0_i32_0 = arith.constant 0 : i32
    %c0_i32_1 = arith.constant 0 : i32
    return %arg1, %c0_i32, %c0_i32_0 : i32, i32, i32
  }
  func.func @transform_5(%arg0: i32, %arg1: i32) -> (i32, i32, i32) {
    %c0_i32 = arith.constant 0 : i32
    %c0_i32_0 = arith.constant 0 : i32
    %c0_i32_1 = arith.constant 0 : i32
    return %arg1, %c0_i32, %c0_i32_0 : i32, i32, i32
  }
  func.func @transform_6(%arg0: i32, %arg1: i32) -> (i32, i32) {
    %c0_i32 = arith.constant 0 : i32
    %c0_i32_0 = arith.constant 0 : i32
    %c0_i32_1 = arith.constant 0 : i32
    return %c0_i32, %c0_i32_0 : i32, i32
  }
  func.func @transform_7(%arg0: i32, %arg1: i32) -> (i32, i32, i32) {
    %c0_i32 = arith.constant 0 : i32
    %c0_i32_0 = arith.constant 0 : i32
    %c0_i32_1 = arith.constant 0 : i32
    return %arg0, %c0_i32, %c0_i32_0 : i32, i32, i32
  }
}

module attributes {stable_mosaic.version = 11 : i64} {
  func.func @_mlp_block_kernel(%arg0: i32, %arg1: i32, %arg2: memref<16x32xf32, #tpu.memory_space<vmem>>, %arg3: memref<1x32xf32, #tpu.memory_space<vmem>>, %arg4: memref<1x32xf32, #tpu.memory_space<vmem>>, %arg5: memref<32x128xbf16, #tpu.memory_space<vmem>>, %arg6: memref<1x128xf32, #tpu.memory_space<vmem>>, %arg7: memref<128x32xbf16, #tpu.memory_space<vmem>>, %arg8: memref<1x32xf32, #tpu.memory_space<vmem>>, %arg9: memref<16x32xf32, #tpu.memory_space<vmem>>, %arg10: memref<16x32xbf16, #tpu.memory_space<vmem>>, %arg11: memref<16x32xf32, #tpu.memory_space<vmem>>) attributes {dimension_semantics = [#tpu.dimension_semantics<parallel>, #tpu.dimension_semantics<arbitrary>], iteration_bounds = array<i64: 1, 1>, scalar_prefetch = 0 : i64, scratch_operands = 2 : i64, tpu.core_type = #tpu.core_type<tc>, window_params = [{transform_indices = @transform_0, window_bounds = array<i64: 16, 32>}, {pipeline_mode = #tpu.pipeline_mode<synchronous>, transform_indices = @transform_1, window_bounds = array<i64: 1, 32>}, {pipeline_mode = #tpu.pipeline_mode<synchronous>, transform_indices = @transform_2, window_bounds = array<i64: 1, 32>}, {transform_indices = @transform_3, window_bounds = array<i64: 32, 128>}, {transform_indices = @transform_4, window_bounds = array<i64: 1, 128>}, {transform_indices = @transform_5, window_bounds = array<i64: 128, 32>}, {pipeline_mode = #tpu.pipeline_mode<synchronous>, transform_indices = @transform_6, window_bounds = array<i64: 1, 32>}, {transform_indices = @transform_7, window_bounds = array<i64: 16, 32>}]} {
    %c0_i32 = arith.constant 0 : i32
    %0 = arith.cmpi eq, %arg1, %c0_i32 : i32
    %1 = arith.extui %0 : i1 to i32
    %c0_i32_0 = arith.constant 0 : i32
    %2 = arith.cmpi ne, %1, %c0_i32_0 : i32
    scf.if %2 {
      %c0_18 = arith.constant 0 : index
      %c0_19 = arith.constant 0 : index
      %26 = vector.load %arg2[%c0_18, %c0_19] : memref<16x32xf32, #tpu.memory_space<vmem>>, vector<16x32xf32>
      %c0_20 = arith.constant 0 : index
      %c0_21 = arith.constant 0 : index
      %27 = vector.load %arg3[%c0_20, %c0_21] : memref<1x32xf32, #tpu.memory_space<vmem>>, vector<1x32xf32>
      %c0_22 = arith.constant 0 : index
      %c0_23 = arith.constant 0 : index
      %28 = vector.load %arg4[%c0_22, %c0_23] : memref<1x32xf32, #tpu.memory_space<vmem>>, vector<1x32xf32>
      %cst_24 = arith.constant dense<0.000000e+00> : vector<16xf32>
      %29 = vector.multi_reduction <add>, %26, %cst_24 [1] : vector<16x32xf32> to vector<16xf32>
      %30 = vector.shape_cast %29 : vector<16xf32> to vector<16x1xf32>
      %cst_25 = arith.constant 3.200000e+01 : f32
      %31 = vector.broadcast %cst_25 : f32 to vector<16x1xf32>
      %32 = arith.divf %30, %31 : vector<16x1xf32>
      %33 = vector.broadcast %32 : vector<16x1xf32> to vector<16x32xf32>
      %34 = arith.subf %26, %33 : vector<16x32xf32>
      %35 = arith.mulf %34, %34 : vector<16x32xf32>
      %cst_26 = arith.constant dense<0.000000e+00> : vector<16xf32>
      %36 = vector.multi_reduction <add>, %35, %cst_26 [1] : vector<16x32xf32> to vector<16xf32>
      %37 = vector.shape_cast %36 : vector<16xf32> to vector<16x1xf32>
      %cst_27 = arith.constant 3.200000e+01 : f32
      %38 = vector.broadcast %cst_27 : f32 to vector<16x1xf32>
      %39 = arith.divf %37, %38 : vector<16x1xf32>
      %40 = vector.broadcast %32 : vector<16x1xf32> to vector<16x32xf32>
      %41 = arith.subf %26, %40 : vector<16x32xf32>
      %cst_28 = arith.constant 9.99999974E-6 : f32
      %42 = vector.broadcast %cst_28 : f32 to vector<16x1xf32>
      %43 = arith.addf %39, %42 : vector<16x1xf32>
      %44 = math.rsqrt %43 : vector<16x1xf32>
      %45 = vector.broadcast %44 : vector<16x1xf32> to vector<16x32xf32>
      %46 = arith.mulf %41, %45 : vector<16x32xf32>
      %47 = vector.broadcast %27 : vector<1x32xf32> to vector<16x32xf32>
      %48 = arith.mulf %46, %47 : vector<16x32xf32>
      %49 = vector.broadcast %28 : vector<1x32xf32> to vector<16x32xf32>
      %50 = arith.addf %48, %49 : vector<16x32xf32>
      %51 = arith.truncf %50 : vector<16x32xf32> to vector<16x32xbf16>
      %c0_29 = arith.constant 0 : index
      %c0_30 = arith.constant 0 : index
      %52 = vector.load %arg10[%c0_29, %c0_30] : memref<16x32xbf16, #tpu.memory_space<vmem>>, vector<16x32xbf16>
      tpu.vector_store %arg10[%c0_29, %c0_30], %51 {strides = array<i32>} : memref<16x32xbf16, #tpu.memory_space<vmem>>, vector<16x32xbf16>,
      %cst_31 = arith.constant 0.000000e+00 : f32
      %53 = vector.broadcast %cst_31 : f32 to vector<16x32xf32>
      %c0_32 = arith.constant 0 : index
      %c0_33 = arith.constant 0 : index
      %54 = vector.load %arg11[%c0_32, %c0_33] : memref<16x32xf32, #tpu.memory_space<vmem>>, vector<16x32xf32>
      tpu.vector_store %arg11[%c0_32, %c0_33], %53 {strides = array<i32>} : memref<16x32xf32, #tpu.memory_space<vmem>>, vector<16x32xf32>,
    } else {
    }
    %c0 = arith.constant 0 : index
    %c0_1 = arith.constant 0 : index
    %3 = vector.load %arg10[%c0, %c0_1] : memref<16x32xbf16, #tpu.memory_space<vmem>>, vector<16x32xbf16>
    %c0_2 = arith.constant 0 : index
    %c0_3 = arith.constant 0 : index
    %4 = vector.load %arg5[%c0_2, %c0_3] : memref<32x128xbf16, #tpu.memory_space<vmem>>, vector<32x128xbf16>
    %cst = arith.constant dense<0.000000e+00> : vector<16x128xf32>
    %5 = tpu.matmul %3, %4, %cst {dimension_numbers = #tpu.dot_dimension_numbers<[1], [0], [0], [1], [0, 0, 1, 1], [], []>} : vector<16x32xbf16>, vector<32x128xbf16>, vector<16x128xf32> -> vector<16x128xf32>
    %c0_4 = arith.constant 0 : index
    %c0_5 = arith.constant 0 : index
    %6 = vector.load %arg6[%c0_4, %c0_5] : memref<1x128xf32, #tpu.memory_space<vmem>>, vector<1x128xf32>
    %7 = vector.broadcast %6 : vector<1x128xf32> to vector<16x128xf32>
    %8 = arith.addf %5, %7 : vector<16x128xf32>
    %cst_6 = arith.constant 5.000000e-01 : f32
    %9 = vector.broadcast %cst_6 : f32 to vector<16x128xf32>
    %10 = arith.mulf %9, %8 : vector<16x128xf32>
    %cst_7 = arith.constant 0.707106769 : f32
    %11 = vector.broadcast %cst_7 : f32 to vector<16x128xf32>
    %12 = arith.mulf %8, %11 : vector<16x128xf32>
    %13 = math.erf %12 : vector<16x128xf32>
    %cst_8 = arith.constant 1.000000e+00 : f32
    %14 = vector.broadcast %cst_8 : f32 to vector<16x128xf32>
    %15 = arith.addf %14, %13 : vector<16x128xf32>
    %16 = arith.mulf %10, %15 : vector<16x128xf32>
    %c0_9 = arith.constant 0 : index
    %c0_10 = arith.constant 0 : index
    %17 = vector.load %arg11[%c0_9, %c0_10] : memref<16x32xf32, #tpu.memory_space<vmem>>, vector<16x32xf32>
    %18 = arith.truncf %16 : vector<16x128xf32> to vector<16x128xbf16>
    %c0_11 = arith.constant 0 : index
    %c0_12 = arith.constant 0 : index
    %19 = vector.load %arg7[%c0_11, %c0_12] : memref<128x32xbf16, #tpu.memory_space<vmem>>, vector<128x32xbf16>
    %cst_13 = arith.constant dense<0.000000e+00> : vector<16x32xf32>
    %20 = tpu.matmul %18, %19, %cst_13 {dimension_numbers = #tpu.dot_dimension_numbers<[1], [0], [0], [1], [0, 0, 1, 1], [], []>} : vector<16x128xbf16>, vector<128x32xbf16>, vector<16x32xf32> -> vector<16x32xf32>
    %21 = arith.addf %17, %20 : vector<16x32xf32>
    %c0_14 = arith.constant 0 : index
    %c0_15 = arith.constant 0 : index
    %22 = vector.load %arg11[%c0_14, %c0_15] : memref<16x32xf32, #tpu.memory_space<vmem>>, vector<16x32xf32>
    tpu.vector_store %arg11[%c0_14, %c0_15], %21 {strides = array<i32>} : memref<16x32xf32, #tpu.memory_space<vmem>>, vector<16x32xf32>,
    %c0_i32_16 = arith.constant 0 : i32
    %23 = arith.cmpi eq, %arg1, %c0_i32_16 : i32
    %24 = arith.extui %23 : i1 to i32
    %c0_i32_17 = arith.constant 0 : i32
    %25 = arith.cmpi ne, %24, %c0_i32_17 : i32
    scf.if %25 {
      %c0_18 = arith.constant 0 : index
      %c0_19 = arith.constant 0 : index
      %26 = vector.load %arg11[%c0_18, %c0_19] : memref<16x32xf32, #tpu.memory_space<vmem>>, vector<16x32xf32>
      %c0_20 = arith.constant 0 : index
      %c0_21 = arith.constant 0 : index
      %27 = vector.load %arg8[%c0_20, %c0_21] : memref<1x32xf32, #tpu.memory_space<vmem>>, vector<1x32xf32>
      %28 = vector.broadcast %27 : vector<1x32xf32> to vector<16x32xf32>
      %29 = arith.addf %26, %28 : vector<16x32xf32>
      %c0_22 = arith.constant 0 : index
      %c0_23 = arith.constant 0 : index
      %30 = vector.load %arg2[%c0_22, %c0_23] : memref<16x32xf32, #tpu.memory_space<vmem>>, vector<16x32xf32>
      %31 = arith.addf %29, %30 : vector<16x32xf32>
      %c0_24 = arith.constant 0 : index
      %c0_25 = arith.constant 0 : index
      %32 = vector.load %arg9[%c0_24, %c0_25] : memref<16x32xf32, #tpu.memory_space<vmem>>, vector<16x32xf32>
      tpu.vector_store %arg9[%c0_24, %c0_25], %31 {strides = array<i32>} : memref<16x32xf32, #tpu.memory_space<vmem>>, vector<16x32xf32>,
    } else {
    }
    return
  }
  func.func @transform_0(%arg0: i32, %arg1: i32) -> (i32, i32) {
    %c0_i32 = arith.constant 0 : i32
    %c0_i32_0 = arith.constant 0 : i32
    return %arg0, %c0_i32 : i32, i32
  }
  func.func @transform_1(%arg0: i32, %arg1: i32) -> (i32, i32) {
    %c0_i32 = arith.constant 0 : i32
    %c0_i32_0 = arith.constant 0 : i32
    %c0_i32_1 = arith.constant 0 : i32
    return %c0_i32, %c0_i32_0 : i32, i32
  }
  func.func @transform_2(%arg0: i32, %arg1: i32) -> (i32, i32) {
    %c0_i32 = arith.constant 0 : i32
    %c0_i32_0 = arith.constant 0 : i32
    %c0_i32_1 = arith.constant 0 : i32
    return %c0_i32, %c0_i32_0 : i32, i32
  }
  func.func @transform_3(%arg0: i32, %arg1: i32) -> (i32, i32) {
    %c0_i32 = arith.constant 0 : i32
    %c0_i32_0 = arith.constant 0 : i32
    return %c0_i32, %arg1 : i32, i32
  }
  func.func @transform_4(%arg0: i32, %arg1: i32) -> (i32, i32) {
    %c0_i32 = arith.constant 0 : i32
    %c0_i32_0 = arith.constant 0 : i32
    return %c0_i32, %arg1 : i32, i32
  }
  func.func @transform_5(%arg0: i32, %arg1: i32) -> (i32, i32) {
    %c0_i32 = arith.constant 0 : i32
    %c0_i32_0 = arith.constant 0 : i32
    return %arg1, %c0_i32 : i32, i32
  }
  func.func @transform_6(%arg0: i32, %arg1: i32) -> (i32, i32) {
    %c0_i32 = arith.constant 0 : i32
    %c0_i32_0 = arith.constant 0 : i32
    %c0_i32_1 = arith.constant 0 : i32
    return %c0_i32, %c0_i32_0 : i32, i32
  }
  func.func @transform_7(%arg0: i32, %arg1: i32) -> (i32, i32) {
    %c0_i32 = arith.constant 0 : i32
    %c0_i32_0 = arith.constant 0 : i32
    return %arg0, %c0_i32 : i32, i32
  }
}

</mosaic_0001>

<llo_original>
// kernel: transformer_forward.5
$region0: #{transformer_forward.5}
  #allocation0 [shape = 'u32[]', space=smem, size = 0x4, offset = 0x4, fixed_abs, tag = 'smem constant byte address 0x4 - core index']
  #allocation1 [shape = 'u32[144,128]{1,0:T(1,128)}', space=vmem, size = 0x12000, scoped, tag = 'internal scratch']
  #allocation2 [shape = 'bf16[16,32]{1,0:T(8,128)(2,1)}', space=vmem, size = 0x1000, scoped, tag = 'scratch operand']
  #allocation3 [shape = 'f32[16,32]{1,0:T(8,128)}', space=vmem, size = 0x2000, scoped, tag = 'scratch operand']
  %s0 = inlined_call_operand.vmem [shape: f32[16,32], index: 0, kind: input, shape index: {}]
  %s1 = inlined_call_operand.vmem [shape: f32[1,32], index: 1, kind: input, shape index: {}]
  %s2 = inlined_call_operand.vmem [shape: f32[1,32], index: 2, kind: input, shape index: {}]
  %s3 = inlined_call_operand.vmem [shape: bf16[32,128], index: 3, kind: input, shape index: {}]
  %s4 = inlined_call_operand.vmem [shape: f32[1,128], index: 4, kind: input, shape index: {}]
  %s5 = inlined_call_operand.vmem [shape: bf16[128,32], index: 5, kind: input, shape index: {}]
  %s6 = inlined_call_operand.vmem [shape: f32[1,32], index: 6, kind: input, shape index: {}]
  %s7 = inlined_call_operand.vmem [shape: f32[16,32], index: 7, kind: output, shape index: {}]
  %s8 = sld [smem:[#allocation0]]
  $region46: #{transformer_forward.5} parent=0
    _
  %s10 = ssub.s32 1, %s8
  %s11 = scalar_select 0, %s10, %s8
  // Predicated region
  $region2: #{transformer_forward.5} parent=0 // pred_check
    _
  $region3: #{transformer_forward.5} parent=0 // pred_check_branch
    %13 = sbr.rel (0) target = $region5
  $region4: #{transformer_forward.5} parent=0 // pred_region
    _
  $region5: #{transformer_forward.5} parent=0 // pred_fallthru
    _
  // Predicated region
  $region6: #{transformer_forward.5} parent=0 // pred_check
    _
  $region7: #{transformer_forward.5} parent=0 // pred_check_branch
    %15 = sbr.rel (0) target = $region9
  $region8: #{transformer_forward.5} parent=0 // pred_region
    _
  $region9: #{transformer_forward.5} parent=0 // pred_fallthru
    _
  // Predicated region
  $region10: #{transformer_forward.5} parent=0 // pred_check
    _
  $region11: #{transformer_forward.5} parent=0 // pred_check_branch
    %17 = sbr.rel (0) target = $region13
  $region12: #{transformer_forward.5} parent=0 // pred_region
    _
  $region13: #{transformer_forward.5} parent=0 // pred_fallthru
    _
  // Predicated region
  $region14: #{transformer_forward.5} parent=0 // pred_check
    _
  $region15: #{transformer_forward.5} parent=0 // pred_check_branch
    %19 = sbr.rel (0) target = $region17
  $region16: #{transformer_forward.5} parent=0 // pred_region
    _
  $region17: #{transformer_forward.5} parent=0 // pred_fallthru
    _
  // Predicated region
  $region18: #{transformer_forward.5} parent=0 // pred_check
    _
  $region19: #{transformer_forward.5} parent=0 // pred_check_branch
    %21 = sbr.rel (0) target = $region21
  $region20: #{transformer_forward.5} parent=0 // pred_region
    _
  $region21: #{transformer_forward.5} parent=0 // pred_fallthru
    _
  // Predicated region
  $region22: #{transformer_forward.5} parent=0 // pred_check
    _
  $region23: #{transformer_forward.5} parent=0 // pred_check_branch
    %23 = sbr.rel (0) target = $region25
  $region24: #{transformer_forward.5} parent=0 // pred_region
    _
  $region25: #{transformer_forward.5} parent=0 // pred_fallthru
    _
  // Predicated region
  $region26: #{transformer_forward.5} parent=0 // pred_check
    _
  $region27: #{transformer_forward.5} parent=0 // pred_check_branch
    %25 = sbr.rel (0) target = $region29
  $region28: #{transformer_forward.5} parent=0 // pred_region
    _
  $region29: #{transformer_forward.5} parent=0 // pred_fallthru
    _
  %p27 = scmp.eq.s32.totalorder 0, 0
  // Predicated region
  $region30: #{transformer_forward.5} parent=0 // pred_check
    %p28 = pneg %p27
  $region31: #{transformer_forward.5} parent=0 // pred_check_branch
    %30 = sbr.rel (%p28) target = $region33
  $region32: #{transformer_forward.5} parent=0 // pred_region
    %v31 = vld [vmem:[%s0] sm:$0xff]
    %v32 = vld [vmem:[%s0 + $0x8] sm:$0xff]
    %v33 = vld [vmem:[%s1] sm:$0x1]
    %v34 = vld [vmem:[%s2] sm:$0x1]
    %vm35 = vcmask 261120
    %v36 = vsel %vm35, %v31, 0.0
    %37 = vadd.xlane.f32.xlu0 %v36
    %v38 = vpop.xlane.xlu0 %37
    %v39 = vsel %vm35, %v32, 0.0
    %40 = vadd.xlane.f32.xlu0 %v39
    %v41 = vpop.xlane.xlu0 %40
    %v42 = vrcp.pop 32.0
    %v43 = vmul.f32 %v38, %v42
    %v44 = vmul.f32 %v41, %v42
    %v45 = vsub.f32 %v31, %v43
    %v46 = vsub.f32 %v32, %v44
    %v47 = vmul.f32 %v45, %v45
    %v48 = vmul.f32 %v46, %v46
    %v49 = vsel %vm35, %v47, 0.0
    %50 = vadd.xlane.f32.xlu0 %v49
    %v51 = vpop.xlane.xlu0 %50
    %v52 = vsel %vm35, %v48, 0.0
    %53 = vadd.xlane.f32.xlu0 %v52
    %v54 = vpop.xlane.xlu0 %53
    %v55 = vmul.f32 %v51, %v42
    %v56 = vmul.f32 %v54, %v42
    %v57 = vadd.f32 %v55, 1e-05
    %v58 = vadd.f32 %v56, 1e-05
    %v59 = vrsqrt.pop %v57
    %v60 = vrsqrt.pop %v58
    %v61 = vmul.f32 %v45, %v59
    %v62 = vmul.f32 %v46, %v60
    %v64 = vlaneseq
    %v65 = vshrl.u32 %v64, 7
    %v66 = vsub.s32 0, %v65
    %v67 = vrot.slane %v33, %v66
    %v69 = vmul.f32 %v61, %v67
    %v70 = vmul.f32 %v62, %v67
    %v72 = vlaneseq
    %v73 = vshrl.u32 %v72, 7
    %v74 = vsub.s32 0, %v73
    %v75 = vrot.slane %v34, %v74
    %v77 = vadd.f32 %v69, %v75
    %v78 = vadd.f32 %v70, %v75
    %v79 = vpack.c.bf16 %v78, %v77
    %v81 = vunpack.c.l.b16 %v79
    %v82 = vunpack.c.h.b16 %v79
    %v83 = vpack.c.b16 %v81, %v81
    %v84 = vpack.c.b16 %v82, %v82
    %vm87 = vcmask 257024
    %88 = vst.msk [vmem:[#allocation2] sm:$0xf] %vm87, %v83
    %89 = vst.msk [vmem:[#allocation2 + $0x4] sm:$0xf] %vm87, %v84
    %90 = vst.msk [vmem:[#allocation3] sm:$0xff] %vm35, 0.0
    %91 = vst.msk [vmem:[#allocation3 + $0x8] sm:$0xff] %vm35, 0.0
  $region33: #{transformer_forward.5} parent=0 // pred_fallthru
    _
  %v92 = vld [vmem:[#allocation2] sm:$0xf]
  %v93 = vld [vmem:[#allocation2 + $0x4] sm:$0xf]
  %v94 = vld [vmem:[%s3] sm:$0xf]
  %v95 = vld [vmem:[%s3 + $0x4] sm:$0xf]
  %v96 = vld [vmem:[%s3 + $0x8] sm:$0xf]
  %v97 = vld [vmem:[%s3 + $0xc] sm:$0xf]
  %v98 = vld [vmem:[%s4] sm:$0x1]
  %v100 = vlaneseq
  %v101 = vshrl.u32 %v100, 7
  %v102 = vsub.s32 0, %v101
  %v103 = vrot.slane %v98, %v102
  %v107 = vunpack.c.l.b16 %v92
  %v108 = vunpack.c.l.b16 %v93
  %v109 = vpack.c.b16 %v108, %v107
  %v114 = vunpack.c.l.b16 %v94
  %v115 = vunpack.c.l.b16 %v95
  %v116 = vunpack.c.l.b16 %v96
  %v117 = vunpack.c.l.b16 %v97
  %v118 = vpack.c.b16 %v115, %v114
  %v119 = vpack.c.b16 %v117, %v116
  %vm122 = vcmask 261120
  %v124 = vsel %vm122, %v109, 0
  %126 = vmatprep.subr.bf16.mxu0 0
  %127 = vmatpush1.bf16.msra.mxu0 0
  %128 = vmatprep.subr.bf16.mxu0 0
  %129 = vmatpush1.bf16.msra.mxu0 0
  %130 = vmatprep.subr.bf16.mxu0 0
  %131 = vmatpush1.bf16.msra.mxu0 0
  %132 = vmatprep.subr.bf16.mxu0 0
  %133 = vmatpush1.bf16.msra.mxu0 0
  %134 = vmatprep.subr.bf16.mxu0 0
  %135 = vmatpush1.bf16.msra.mxu0 0
  %136 = vmatprep.subr.bf16.mxu0 0
  %137 = vmatpush1.bf16.msra.mxu0 0
  %138 = vmatprep.subr.bf16.mxu0 0
  %139 = vmatpush1.bf16.msra.mxu0 %v119
  %140 = vmatprep.subr.bf16.mxu0 0
  %141 = vmatpush1.bf16.msra.mxu0 %v118
  %142 = vmatprep.subr.bf16.mxu0 0
  %143 = vmatpush2.bf16.msra.mxu0 0
  %144 = vmatprep.subr.bf16.mxu0 0
  %145 = vmatpush2.bf16.msra.mxu0 0
  %146 = vmatprep.subr.bf16.mxu0 0
  %147 = vmatpush2.bf16.msra.mxu0 0
  %148 = vmatprep.subr.bf16.mxu0 0
  %149 = vmatpush2.bf16.msra.mxu0 0
  %150 = vmatprep.subr.bf16.mxu0 0
  %151 = vmatpush2.bf16.msra.mxu0 0
  %152 = vmatprep.subr.bf16.mxu0 0
  %153 = vmatpush2.bf16.msra.mxu0 0
  %154 = vmatprep.subr.bf16.mxu0 0
  %155 = vmatpush2.bf16.msra.mxu0 0
  %156 = vmatprep.subr.bf16.mxu0 0
  %157 = vmatpush2.bf16.msra.mxu0 0
  %158 = vmatprep.mubr.bf16.mxu0 0
  %159 = vmatmul.mubr.bf16.gmra.mxu0 %v124
  %v160 = vpop.f32.mrf.mxu0
  %v161 = vadd.f32 %v103, %v160
  %v162 = vpop.f32.mrf.mxu0
  %v163 = vpop.f32.mrf.mxu0
  %v164 = vadd.f32 %v103, %v163
  %v165 = vpop.f32.mrf.mxu0
  %166 = vdwg.mxu0
  %v167 = vmul.f32 %v161, 0.5
  %v168 = vmul.f32 %v164, 0.5
  %v169 = vmul.f32 %v161, 0.70710677
  %v170 = vmul.f32 %v164, 0.70710677
  %v171 = verf.f32.pop %v169
  %v172 = verf.f32.pop %v170
  %v173 = vadd.f32 %v171, 1.0
  %v174 = vadd.f32 %v172, 1.0
  %v175 = vmul.f32 %v167, %v173
  %v176 = vmul.f32 %v168, %v174
  %v177 = vld [vmem:[#allocation3] sm:$0xff]
  %v178 = vld [vmem:[#allocation3 + $0x8] sm:$0xff]
  %v179 = vpack.c.bf16 %v176, %v175
  %v180 = vld [vmem:[%s5] sm:$0xf]
  %v181 = vld [vmem:[%s5 + $0x4] sm:$0xf]
  %v182 = vld [vmem:[%s5 + $0x8] sm:$0xf]
  %v183 = vld [vmem:[%s5 + $0xc] sm:$0xf]
  %v184 = vld [vmem:[%s5 + $0x10] sm:$0xf]
  %v185 = vld [vmem:[%s5 + $0x14] sm:$0xf]
  %v186 = vld [vmem:[%s5 + $0x18] sm:$0xf]
  %v187 = vld [vmem:[%s5 + $0x1c] sm:$0xf]
  %v188 = vld [vmem:[%s5 + $0x20] sm:$0xf]
  %v189 = vld [vmem:[%s5 + $0x24] sm:$0xf]
  %v190 = vld [vmem:[%s5 + $0x28] sm:$0xf]
  %v191 = vld [vmem:[%s5 + $0x2c] sm:$0xf]
  %v192 = vld [vmem:[%s5 + $0x30] sm:$0xf]
  %v193 = vld [vmem:[%s5 + $0x34] sm:$0xf]
  %v194 = vld [vmem:[%s5 + $0x38] sm:$0xf]
  %v195 = vld [vmem:[%s5 + $0x3c] sm:$0xf]
  %v212 = vunpack.c.l.b16 %v180
  %v213 = vunpack.c.l.b16 %v181
  %v214 = vunpack.c.l.b16 %v182
  %v215 = vunpack.c.l.b16 %v183
  %v216 = vunpack.c.l.b16 %v184
  %v217 = vunpack.c.l.b16 %v185
  %v218 = vunpack.c.l.b16 %v186
  %v219 = vunpack.c.l.b16 %v187
  %v220 = vunpack.c.l.b16 %v188
  %v221 = vunpack.c.l.b16 %v189
  %v222 = vunpack.c.l.b16 %v190
  %v223 = vunpack.c.l.b16 %v191
  %v224 = vunpack.c.l.b16 %v192
  %v225 = vunpack.c.l.b16 %v193
  %v226 = vunpack.c.l.b16 %v194
  %v227 = vunpack.c.l.b16 %v195
  %v228 = vpack.c.b16 %v213, %v212
  %v229 = vpack.c.b16 %v215, %v214
  %v230 = vpack.c.b16 %v217, %v216
  %v231 = vpack.c.b16 %v219, %v218
  %v232 = vpack.c.b16 %v221, %v220
  %v233 = vpack.c.b16 %v223, %v222
  %v234 = vpack.c.b16 %v225, %v224
  %v235 = vpack.c.b16 %v227, %v226
  %244 = vmatprep.subr.bf16.mxu0 0
  %245 = vmatpush1.bf16.msra.mxu0 %v235
  %246 = vmatprep.subr.bf16.mxu0 0
  %247 = vmatpush1.bf16.msra.mxu0 %v234
  %248 = vmatprep.subr.bf16.mxu0 0
  %249 = vmatpush1.bf16.msra.mxu0 %v233
  %250 = vmatprep.subr.bf16.mxu0 0
  %251 = vmatpush1.bf16.msra.mxu0 %v232
  %252 = vmatprep.subr.bf16.mxu0 0
  %253 = vmatpush1.bf16.msra.mxu0 %v231
  %254 = vmatprep.subr.bf16.mxu0 0
  %255 = vmatpush1.bf16.msra.mxu0 %v230
  %256 = vmatprep.subr.bf16.mxu0 0
  %257 = vmatpush1.bf16.msra.mxu0 %v229
  %258 = vmatprep.subr.bf16.mxu0 0
  %259 = vmatpush1.bf16.msra.mxu0 %v228
  %260 = vmatprep.subr.bf16.mxu0 0
  %261 = vmatpush2.bf16.msra.mxu0 0
  %262 = vmatprep.subr.bf16.mxu0 0
  %263 = vmatpush2.bf16.msra.mxu0 0
  %264 = vmatprep.subr.bf16.mxu0 0
  %265 = vmatpush2.bf16.msra.mxu0 0
  %266 = vmatprep.subr.bf16.mxu0 0
  %267 = vmatpush2.bf16.msra.mxu0 0
  %268 = vmatprep.subr.bf16.mxu0 0
  %269 = vmatpush2.bf16.msra.mxu0 0
  %270 = vmatprep.subr.bf16.mxu0 0
  %271 = vmatpush2.bf16.msra.mxu0 0
  %272 = vmatprep.subr.bf16.mxu0 0
  %273 = vmatpush2.bf16.msra.mxu0 0
  %274 = vmatprep.subr.bf16.mxu0 0
  %275 = vmatpush2.bf16.msra.mxu0 0
  %276 = vmatprep.mubr.bf16.mxu0 0
  %277 = vmatmul.mubr.bf16.gmra.mxu0 %v179
  %v278 = vpop.f32.mrf.mxu0
  %v279 = vadd.f32 0.0, %v278
  %v280 = vpop.f32.mrf.mxu0
  %v281 = vpop.f32.mrf.mxu0
  %v282 = vadd.f32 0.0, %v281
  %v283 = vpop.f32.mrf.mxu0
  %284 = vdwg.mxu0
  %v285 = vadd.f32 %v177, %v279
  %v286 = vadd.f32 %v178, %v282
  %287 = vst.msk [vmem:[#allocation3] sm:$0xff] %vm122, %v285
  %288 = vst.msk [vmem:[#allocation3 + $0x8] sm:$0xff] %vm122, %v286
  // Predicated region
  $region34: #{transformer_forward.5} parent=0 // pred_check
    %p289 = pneg %p27
  $region35: #{transformer_forward.5} parent=0 // pred_check_branch
    %291 = sbr.rel (%p289) target = $region37
  $region36: #{transformer_forward.5} parent=0 // pred_region
    %v292 = vld [vmem:[#allocation3] sm:$0xff]
    %v293 = vld [vmem:[#allocation3 + $0x8] sm:$0xff]
    %v294 = vld [vmem:[%s6] sm:$0x1]
    %v296 = vlaneseq
    %v297 = vshrl.u32 %v296, 7
    %v298 = vsub.s32 0, %v297
    %v299 = vrot.slane %v294, %v298
    %v301 = vadd.f32 %v292, %v299
    %v302 = vadd.f32 %v293, %v299
    %v303 = vld [vmem:[%s0] sm:$0xff]
    %v304 = vld [vmem:[%s0 + $0x8] sm:$0xff]
    %v305 = vadd.f32 %v301, %v303
    %v306 = vadd.f32 %v302, %v304
    %307 = vst.msk [vmem:[%s7] sm:$0xff] %vm122, %v305
    %308 = vst.msk [vmem:[%s7 + $0x8] sm:$0xff] %vm122, %v306
  $region37: #{transformer_forward.5} parent=0 // pred_fallthru
    _
  // Predicated region
  $region38: #{transformer_forward.5} parent=0 // pred_check
    _
  $region39: #{transformer_forward.5} parent=0 // pred_check_branch
    %310 = sbr.rel (0) target = $region41
  $region40: #{transformer_forward.5} parent=0 // pred_region
    _
  $region41: #{transformer_forward.5} parent=0 // pred_fallthru
    _
  // Predicated region
  $region42: #{transformer_forward.5} parent=0 // pred_check
    _
  $region43: #{transformer_forward.5} parent=0 // pred_check_branch
    %312 = sbr.rel (0) target = $region45
  $region44: #{transformer_forward.5} parent=0 // pred_region
    _
  $region45: #{transformer_forward.5} parent=0 // pred_fallthru
    _

// kernel: transformer_forward.6
$region0: #{transformer_forward.6}
  #allocation0 [shape = 'u32[]', space=smem, size = 0x4, offset = 0x4, fixed_abs, tag = 'smem constant byte address 0x4 - core index']
  #allocation1 [shape = 'u32[144,128]{1,0:T(1,128)}', space=vmem, size = 0x12000, scoped, tag = 'internal scratch']
  #allocation2 [shape = 'bf16[8,32]{1,0:T(8,128)(2,1)}', space=vmem, size = 0x800, scoped, tag = 'scratch operand']
  #allocation3 [shape = 'f32[8,32]{1,0:T(8,128)}', space=vmem, size = 0x1000, scoped, tag = 'scratch operand']
  %s0 = inlined_call_operand.vmem [shape: f32[2,8,32], index: 0, kind: input, shape index: {}]
  %s1 = inlined_call_operand.vmem [shape: f32[1,32], index: 1, kind: input, shape index: {}]
  %s2 = inlined_call_operand.vmem [shape: f32[1,32], index: 2, kind: input, shape index: {}]
  %s3 = inlined_call_operand.vmem [shape: bf16[1,32,96], index: 3, kind: input, shape index: {}]
  %s4 = inlined_call_operand.vmem [shape: f32[1,1,96], index: 4, kind: input, shape index: {}]
  %s5 = inlined_call_operand.vmem [shape: bf16[1,32,32], index: 5, kind: input, shape index: {}]
  %s6 = inlined_call_operand.vmem [shape: f32[1,32], index: 6, kind: input, shape index: {}]
  %s7 = inlined_call_operand.vmem [shape: f32[2,8,32], index: 7, kind: output, shape index: {}]
  %s8 = sld [smem:[#allocation0]]
  $region69: #{transformer_forward.6} parent=0
    _
  %s10 = ssub.s32 1, %s8
  %s11 = scalar_select 0, %s10, %s8
  loop: start=0, step=1, limit=4
  $region2: #{transformer_forward.6} parent=0 // loop_pre_header
    _
  $region3: #{transformer_forward.6} parent=0 // loop_header
    %s13 = sphi 0, %s17
    %p14 = scmp.ge.s32.totalorder %s13, 4
    %s20 = sphi 0, %s32
    %s21 = sphi 0, %s28
    %s22 = sphi 0, %s20
    %s23 = sphi 0, %s21
    %s24 = sphi 0, %s22
    %s25 = sphi 0, %s23
    %s35 = sphi 0, %s37
    %s38 = sphi 0, %s35
    %s39 = sphi 0, %s38
    %s55 = sphi 0, %s39
    %s59 = sphi 0, %s59
    %s61 = sphi 0, %s59
    %s62 = sphi 0, %s61
    %s76 = sphi 0, %s62
    %s80 = sphi 0, %s80
    %s82 = sphi 0, %s80
    %s83 = sphi 0, %s82
    %s97 = sphi 0, %s83
    %s103 = sphi 0, %s105
    %s106 = sphi 0, %s103
    %s107 = sphi 0, %s106
    %s123 = sphi 0, %s107
    %s129 = sphi 0, %s131
    %s132 = sphi 0, %s129
    %s133 = sphi 0, %s132
    %s149 = sphi 0, %s133
    %s155 = sphi 0, %s157
    %s158 = sphi 0, %s155
    %s159 = sphi 0, %s158
    %s175 = sphi 0, %s159
    %s179 = sphi 0, %s179
    %s181 = sphi 0, %s179
    %s182 = sphi 0, %s181
    %s196 = sphi 0, %s182
    %s202 = sphi 0, %s204
    %s205 = sphi 0, %s202
    %s206 = sphi 0, %s205
    %s222 = sphi 0, %s206
  $region4: #{transformer_forward.6} parent=0 // loop_header_branch
    %16 = sbr.rel (%p14) target = $region8
  $region5: #{transformer_forward.6} parent=0 // loop_body
    %s18 = ssub.s32 %s13, 1
    %s19 = ssub.s32 %s13, 2
    %s26 = sadd.s32 1, %s21
    %p27 = scmp.ge.s32.totalorder %s26, 1
    %s28 = scalar_select %p27, 0, %s26
    %s29 = sadd.s32 1, %s20
    %s30 = scalar_select %p27, %s29, %s20
    %p31 = scmp.ge.s32.totalorder %s30, 2
    %s32 = scalar_select %p31, 0, %s30
    %s33 = ssub.s32 %s20, %s32
    %p34 = scmp.eq.s32.totalorder %s33, 0
    %s36 = sadd.s32 %s35, 1
    %s37 = scalar_select %p34, %s35, %s36
    %p40 = pneg %p34
    %p41 = scmp.eq.s32.totalorder %s13, 1
    %p42 = por %p40, %p41
    %p43 = scmp.ne.s32.totalorder %s35, %s38
    %p44 = scmp.eq.s32.totalorder %s13, 0
    %p45 = por %p43, %p44
    %p46 = scmp.ne.s32.totalorder %s35, %s38
    %p47 = scmp.eq.s32.totalorder %s18, 1
    %p48 = por %p46, %p47
    %p49 = scmp.ne.s32.totalorder %s38, %s39
    %p50 = scmp.eq.s32.totalorder %s18, 0
    %p51 = por %p49, %p50
    %p52 = scmp.ne.s32.totalorder %s38, %s39
    %p53 = scmp.eq.s32.totalorder %s19, 1
    %p54 = por %p52, %p53
    %p56 = scmp.ne.s32.totalorder %s39, %s55
    %p57 = scmp.eq.s32.totalorder %s19, 0
    %p58 = por %p56, %p57
    %s60 = sadd.s32 %s59, 1
    %p63 = scmp.eq.s32.totalorder %s13, 1
    %p64 = scmp.ne.s32.totalorder %s59, %s61
    %p65 = scmp.eq.s32.totalorder %s13, 0
    %p66 = por %p64, %p65
    %p67 = scmp.ne.s32.totalorder %s59, %s61
    %p68 = scmp.eq.s32.totalorder %s18, 1
    %p69 = por %p67, %p68
    %p70 = scmp.ne.s32.totalorder %s61, %s62
    %p71 = scmp.eq.s32.totalorder %s18, 0
    %p72 = por %p70, %p71
    %p73 = scmp.ne.s32.totalorder %s61, %s62
    %p74 = scmp.eq.s32.totalorder %s19, 1
    %p75 = por %p73, %p74
    %p77 = scmp.ne.s32.totalorder %s62, %s76
    %p78 = scmp.eq.s32.totalorder %s19, 0
    %p79 = por %p77, %p78
    %s81 = sadd.s32 %s80, 1
    %p84 = scmp.eq.s32.totalorder %s13, 1
    %p85 = scmp.ne.s32.totalorder %s80, %s82
    %p86 = scmp.eq.s32.totalorder %s13, 0
    %p87 = por %p85, %p86
    %p88 = scmp.ne.s32.totalorder %s80, %s82
    %p89 = scmp.eq.s32.totalorder %s18, 1
    %p90 = por %p88, %p89
    %p91 = scmp.ne.s32.totalorder %s82, %s83
    %p92 = scmp.eq.s32.totalorder %s18, 0
    %p93 = por %p91, %p92
    %p94 = scmp.ne.s32.totalorder %s82, %s83
    %p95 = scmp.eq.s32.totalorder %s19, 1
    %p96 = por %p94, %p95
    %p98 = scmp.ne.s32.totalorder %s83, %s97
    %p99 = scmp.eq.s32.totalorder %s19, 0
    %p100 = por %p98, %p99
    %s101 = ssub.s32 %s21, %s28
    %p102 = scmp.eq.s32.totalorder %s101, 0
    %s104 = sadd.s32 %s103, 1
    %s105 = scalar_select %p102, %s103, %s104
    %p108 = pneg %p102
    %p109 = scmp.eq.s32.totalorder %s13, 1
    %p110 = por %p108, %p109
    %p111 = scmp.ne.s32.totalorder %s103, %s106
    %p112 = scmp.eq.s32.totalorder %s13, 0
    %p113 = por %p111, %p112
    %p114 = scmp.ne.s32.totalorder %s103, %s106
    %p115 = scmp.eq.s32.totalorder %s18, 1
    %p116 = por %p114, %p115
    %p117 = scmp.ne.s32.totalorder %s106, %s107
    %p118 = scmp.eq.s32.totalorder %s18, 0
    %p119 = por %p117, %p118
    %p120 = scmp.ne.s32.totalorder %s106, %s107
    %p121 = scmp.eq.s32.totalorder %s19, 1
    %p122 = por %p120, %p121
    %p124 = scmp.ne.s32.totalorder %s107, %s123
    %p125 = scmp.eq.s32.totalorder %s19, 0
    %p126 = por %p124, %p125
    %s127 = ssub.s32 %s21, %s28
    %p128 = scmp.eq.s32.totalorder %s127, 0
    %s130 = sadd.s32 %s129, 1
    %s131 = scalar_select %p128, %s129, %s130
    %p134 = pneg %p128
    %p135 = scmp.eq.s32.totalorder %s13, 1
    %p136 = por %p134, %p135
    %p137 = scmp.ne.s32.totalorder %s129, %s132
    %p138 = scmp.eq.s32.totalorder %s13, 0
    %p139 = por %p137, %p138
    %p140 = scmp.ne.s32.totalorder %s129, %s132
    %p141 = scmp.eq.s32.totalorder %s18, 1
    %p142 = por %p140, %p141
    %p143 = scmp.ne.s32.totalorder %s132, %s133
    %p144 = scmp.eq.s32.totalorder %s18, 0
    %p145 = por %p143, %p144
    %p146 = scmp.ne.s32.totalorder %s132, %s133
    %p147 = scmp.eq.s32.totalorder %s19, 1
    %p148 = por %p146, %p147
    %p150 = scmp.ne.s32.totalorder %s133, %s149
    %p151 = scmp.eq.s32.totalorder %s19, 0
    %p152 = por %p150, %p151
    %s153 = ssub.s32 %s21, %s28
    %p154 = scmp.eq.s32.totalorder %s153, 0
    %s156 = sadd.s32 %s155, 1
    %s157 = scalar_select %p154, %s155, %s156
    %p160 = pneg %p154
    %p161 = scmp.eq.s32.totalorder %s13, 1
    %p162 = por %p160, %p161
    %p163 = scmp.ne.s32.totalorder %s155, %s158
    %p164 = scmp.eq.s32.totalorder %s13, 0
    %p165 = por %p163, %p164
    %p166 = scmp.ne.s32.totalorder %s155, %s158
    %p167 = scmp.eq.s32.totalorder %s18, 1
    %p168 = por %p166, %p167
    %p169 = scmp.ne.s32.totalorder %s158, %s159
    %p170 = scmp.eq.s32.totalorder %s18, 0
    %p171 = por %p169, %p170
    %p172 = scmp.ne.s32.totalorder %s158, %s159
    %p173 = scmp.eq.s32.totalorder %s19, 1
    %p174 = por %p172, %p173
    %p176 = scmp.ne.s32.totalorder %s159, %s175
    %p177 = scmp.eq.s32.totalorder %s19, 0
    %p178 = por %p176, %p177
    %s180 = sadd.s32 %s179, 1
    %p183 = scmp.eq.s32.totalorder %s13, 1
    %p184 = scmp.ne.s32.totalorder %s179, %s181
    %p185 = scmp.eq.s32.totalorder %s13, 0
    %p186 = por %p184, %p185
    %p187 = scmp.ne.s32.totalorder %s179, %s181
    %p188 = scmp.eq.s32.totalorder %s18, 1
    %p189 = por %p187, %p188
    %p190 = scmp.ne.s32.totalorder %s181, %s182
    %p191 = scmp.eq.s32.totalorder %s18, 0
    %p192 = por %p190, %p191
    %p193 = scmp.ne.s32.totalorder %s181, %s182
    %p194 = scmp.eq.s32.totalorder %s19, 1
    %p195 = por %p193, %p194
    %p197 = scmp.ne.s32.totalorder %s182, %s196
    %p198 = scmp.eq.s32.totalorder %s19, 0
    %p199 = por %p197, %p198
    %s200 = ssub.s32 %s20, %s32
    %p201 = scmp.eq.s32.totalorder %s200, 0
    %s203 = sadd.s32 %s202, 1
    %s204 = scalar_select %p201, %s202, %s203
    %p207 = pneg %p201
    %p208 = scmp.eq.s32.totalorder %s13, 1
    %p209 = por %p207, %p208
    %p210 = scmp.ne.s32.totalorder %s202, %s205
    %p211 = scmp.eq.s32.totalorder %s13, 0
    %p212 = por %p210, %p211
    %p213 = scmp.ne.s32.totalorder %s202, %s205
    %p214 = scmp.eq.s32.totalorder %s18, 1
    %p215 = por %p213, %p214
    %p216 = scmp.ne.s32.totalorder %s205, %s206
    %p217 = scmp.eq.s32.totalorder %s18, 0
    %p218 = por %p216, %p217
    %p219 = scmp.ne.s32.totalorder %s205, %s206
    %p220 = scmp.eq.s32.totalorder %s19, 1
    %p221 = por %p219, %p220
    %p223 = scmp.ne.s32.totalorder %s206, %s222
    %p224 = scmp.eq.s32.totalorder %s19, 0
    %p225 = por %p223, %p224
    %p226 = scmp.le.s32.totalorder 1, %s13
    %p227 = scmp.lt.s32.totalorder %s13, 3
    %p228 = pnand %p226, %p227
    %p229 = pneg %p228
    // Predicated region
    $region9: #{transformer_forward.6} parent=5 // pred_check
      _
    $region10: #{transformer_forward.6} parent=5 // pred_check_branch
      %231 = sbr.rel (%p228) target = $region12
    $region11: #{transformer_forward.6} parent=5 // pred_region
      %s232 = ssub.s32 %s13, 1
      // Predicated region
      $region13: #{transformer_forward.6} parent=11 // pred_check
        %p233 = pneg %p72
      $region14: #{transformer_forward.6} parent=11 // pred_check_branch
        %235 = sbr.rel (%p233) target = $region16
      $region15: #{transformer_forward.6} parent=11 // pred_region
        _
      $region16: #{transformer_forward.6} parent=11 // pred_fallthru
        _
      // Predicated region
      $region17: #{transformer_forward.6} parent=11 // pred_check
        %p236 = pneg %p93
      $region18: #{transformer_forward.6} parent=11 // pred_check_branch
        %238 = sbr.rel (%p236) target = $region20
      $region19: #{transformer_forward.6} parent=11 // pred_region
        _
      $region20: #{transformer_forward.6} parent=11 // pred_fallthru
        _
      // Predicated region
      $region21: #{transformer_forward.6} parent=11 // pred_check
        %p239 = pneg %p119
      $region22: #{transformer_forward.6} parent=11 // pred_check_branch
        %241 = sbr.rel (%p239) target = $region24
      $region23: #{transformer_forward.6} parent=11 // pred_region
        %p242 = scmp.lt.s32.totalorder %s23, 0
        %s243 = scalar_select %p242, %s23, 0
        %s244 = smul.addr %s243, 4
        %s245 = smul.addr %s244, 4
        %s246 = scalar_lea.vmem %s3, %s245
      $region24: #{transformer_forward.6} parent=11 // pred_fallthru
        _
      // Predicated region
      $region25: #{transformer_forward.6} parent=11 // pred_check
        %p247 = pneg %p145
      $region26: #{transformer_forward.6} parent=11 // pred_check_branch
        %249 = sbr.rel (%p247) target = $region28
      $region27: #{transformer_forward.6} parent=11 // pred_region
        %p250 = scmp.lt.s32.totalorder %s23, 0
        %s251 = scalar_select %p250, %s23, 0
        %s252 = scalar_lea.vmem %s4, %s251
      $region28: #{transformer_forward.6} parent=11 // pred_fallthru
        _
      // Predicated region
      $region29: #{transformer_forward.6} parent=11 // pred_check
        %p253 = pneg %p171
      $region30: #{transformer_forward.6} parent=11 // pred_check_branch
        %255 = sbr.rel (%p253) target = $region32
      $region31: #{transformer_forward.6} parent=11 // pred_region
        %p256 = scmp.lt.s32.totalorder %s23, 0
        %s257 = scalar_select %p256, %s23, 0
        %s258 = smul.addr %s257, 4
        %s259 = smul.addr %s258, 4
        %s260 = scalar_lea.vmem %s5, %s259
      $region32: #{transformer_forward.6} parent=11 // pred_fallthru
        _
      // Predicated region
      $region33: #{transformer_forward.6} parent=11 // pred_check
        %p261 = pneg %p192
      $region34: #{transformer_forward.6} parent=11 // pred_check_branch
        %263 = sbr.rel (%p261) target = $region36
      $region35: #{transformer_forward.6} parent=11 // pred_region
        _
      $region36: #{transformer_forward.6} parent=11 // pred_fallthru
        _
    $region12: #{transformer_forward.6} parent=5 // pred_fallthru
      _
    %p264 = scmp.lt.s32.totalorder %s13, 2
    // Predicated region
    $region37: #{transformer_forward.6} parent=5 // pred_check
      %p265 = pneg %p264
    $region38: #{transformer_forward.6} parent=5 // pred_check_branch
      %267 = sbr.rel (%p265) target = $region40
    $region39: #{transformer_forward.6} parent=5 // pred_region
      // Predicated region
      $region41: #{transformer_forward.6} parent=39 // pred_check
        %p268 = pneg %p45
      $region42: #{transformer_forward.6} parent=39 // pred_check_branch
        %270 = sbr.rel (%p268) target = $region44
      $region43: #{transformer_forward.6} parent=39 // pred_region
        %p271 = scmp.lt.s32.totalorder %s20, 1
        %s272 = scalar_select %p271, %s20, 1
        %s273 = smul.addr %s272, 8
        %s274 = scalar_lea.vmem %s0, %s273
      $region44: #{transformer_forward.6} parent=39 // pred_fallthru
        _
    $region40: #{transformer_forward.6} parent=5 // pred_fallthru
      _
    %p275 = scmp.le.s32.totalorder 1, %s13
    %p276 = scmp.lt.s32.totalorder %s13, 3
    %p277 = pnand %p275, %p276
    %p278 = pneg %p277
    // Predicated region
    $region45: #{transformer_forward.6} parent=5 // pred_check
      _
    $region46: #{transformer_forward.6} parent=5 // pred_check_branch
      %280 = sbr.rel (%p277) target = $region48
    $region47: #{transformer_forward.6} parent=5 // pred_region
      %s281 = ssub.s32 %s13, 1
      %p282 = scmp.lt.s32.totalorder %s22, 1
      %s283 = scalar_select %p282, %s22, 1
      %s284 = smul.addr %s283, 8
      %s285 = scalar_lea.vmem %s0, %s284
      %p286 = pneg %p51
      %p287 = pneg %p48
      %p288 = pneg %p72
      %p289 = pneg %p69
      %p290 = pneg %p93
      %p291 = pneg %p90
      %p292 = scmp.lt.s32.totalorder %s23, 0
      %s293 = scalar_select %p292, %s23, 0
      %s294 = smul.addr %s293, 4
      %s295 = smul.addr %s294, 4
      %s296 = scalar_lea.vmem %s3, %s295
      %p297 = pneg %p119
      %p298 = pneg %p116
      %p299 = scmp.lt.s32.totalorder %s23, 0
      %s300 = scalar_select %p299, %s23, 0
      %s301 = scalar_lea.vmem %s4, %s300
      %p302 = pneg %p145
      %p303 = pneg %p142
      %p304 = scmp.lt.s32.totalorder %s23, 0
      %s305 = scalar_select %p304, %s23, 0
      %s306 = smul.addr %s305, 4
      %s307 = smul.addr %s306, 4
      %s308 = scalar_lea.vmem %s5, %s307
      %p309 = pneg %p171
      %p310 = pneg %p168
      %p311 = pneg %p192
      %p312 = pneg %p189
      %p313 = pneg %p218
      %p314 = pneg %p215
      %p315 = scmp.lt.s32.totalorder %s22, 1
      %s316 = scalar_select %p315, %s22, 1
      %s317 = smul.addr %s316, 8
      %s318 = scalar_lea.vmem %s7, %s317
      %p319 = scmp.lt.s32.totalorder %s22, 1
      %s320 = scalar_select %p319, %s22, 1
      %s321 = smul.addr %s320, 8
      %s322 = scalar_lea.vmem %s0, %s321
      %p323 = scmp.lt.s32.totalorder %s23, 0
      %s324 = scalar_select %p323, %s23, 0
      %s325 = smul.addr %s324, 4
      %s326 = smul.addr %s325, 4
      %s327 = scalar_lea.vmem %s3, %s326
      %p328 = scmp.lt.s32.totalorder %s23, 0
      %s329 = scalar_select %p328, %s23, 0
      %s330 = scalar_lea.vmem %s4, %s329
      %p331 = scmp.lt.s32.totalorder %s23, 0
      %s332 = scalar_select %p331, %s23, 0
      %s333 = smul.addr %s332, 4
      %s334 = smul.addr %s333, 4
      %s335 = scalar_lea.vmem %s5, %s334
      %p336 = scmp.lt.s32.totalorder %s22, 1
      %s337 = scalar_select %p336, %s22, 1
      %s338 = smul.addr %s337, 8
      %s339 = scalar_lea.vmem %s7, %s338
      %p341 = scmp.eq.s32.totalorder %s23, 0
      // Predicated region
      $region49: #{transformer_forward.6} parent=47 // pred_check
        %p342 = pneg %p341
      $region50: #{transformer_forward.6} parent=47 // pred_check_branch
        %344 = sbr.rel (%p342) target = $region52
      $region51: #{transformer_forward.6} parent=47 // pred_region
        %v345 = vld [vmem:[%s322] sm:$0xff]
        %v346 = vld [vmem:[%s1] sm:$0x1]
        %v347 = vld [vmem:[%s2] sm:$0x1]
        %vm348 = vcmask 261120
        %v349 = vsel %vm348, %v345, 0.0
        %350 = vadd.xlane.f32.xlu0 %v349
        %v351 = vpop.xlane.xlu0 %350
        %v352 = vrcp.pop 32.0
        %v353 = vmul.f32 %v351, %v352
        %v354 = vsub.f32 %v345, %v353
        %v355 = vmul.f32 %v354, %v354
        %v356 = vsel %vm348, %v355, 0.0
        %357 = vadd.xlane.f32.xlu0 %v356
        %v358 = vpop.xlane.xlu0 %357
        %v359 = vmul.f32 %v358, %v352
        %v360 = vadd.f32 %v359, 1e-05
        %v361 = vrsqrt.pop %v360
        %v362 = vmul.f32 %v354, %v361
        %v364 = vlaneseq
        %v365 = vshrl.u32 %v364, 7
        %v366 = vsub.s32 0, %v365
        %v367 = vrot.slane %v346, %v366
        %v369 = vmul.f32 %v362, %v367
        %v371 = vlaneseq
        %v372 = vshrl.u32 %v371, 7
        %v373 = vsub.s32 0, %v372
        %v374 = vrot.slane %v347, %v373
        %v376 = vadd.f32 %v369, %v374
        %v377 = vpack.c.bf16 %v376, %v376
        %vm378 = vcmask 257024
        %379 = vst.msk [vmem:[#allocation2] sm:$0xf] %vm378, %v377
        %380 = vst.msk [vmem:[#allocation3] sm:$0xff] %vm348, 0.0
      $region52: #{transformer_forward.6} parent=47 // pred_fallthru
        _
      %v381 = vld [vmem:[#allocation2] sm:$0xf]
      %v382 = vld [vmem:[%s327] sm:$0xf]
      %v383 = vld [vmem:[%s327 + $0x4] sm:$0xf]
      %v384 = vld [vmem:[%s327 + $0x8] sm:$0xf]
      %v385 = vld [vmem:[%s327 + $0xc] sm:$0xf]
      %v386 = vld [vmem:[%s330] sm:$0x1]
      %v388 = vlaneseq
      %v389 = vshrl.u32 %v388, 7
      %v390 = vsub.s32 0, %v389
      %v391 = vrot.slane %v386, %v390
      %v397 = vunpack.c.l.b16 %v382
      %v398 = vunpack.c.l.b16 %v383
      %v399 = vunpack.c.l.b16 %v384
      %v400 = vunpack.c.l.b16 %v385
      %v401 = vpack.c.b16 %v398, %v397
      %v402 = vpack.c.b16 %v400, %v399
      %vm405 = vcmask 261120
      %v407 = vsel %vm405, %v381, 0
      %409 = vmatprep.subr.bf16.mxu0 0
      %410 = vmatpush1.bf16.msra.mxu0 0
      %411 = vmatprep.subr.bf16.mxu0 0
      %412 = vmatpush1.bf16.msra.mxu0 0
      %413 = vmatprep.subr.bf16.mxu0 0
      %414 = vmatpush1.bf16.msra.mxu0 0
      %415 = vmatprep.subr.bf16.mxu0 0
      %416 = vmatpush1.bf16.msra.mxu0 0
      %417 = vmatprep.subr.bf16.mxu0 0
      %418 = vmatpush1.bf16.msra.mxu0 0
      %419 = vmatprep.subr.bf16.mxu0 0
      %420 = vmatpush1.bf16.msra.mxu0 0
      %421 = vmatprep.subr.bf16.mxu0 0
      %422 = vmatpush1.bf16.msra.mxu0 %v402
      %423 = vmatprep.subr.bf16.mxu0 0
      %424 = vmatpush1.bf16.msra.mxu0 %v401
      %425 = vmatprep.subr.bf16.mxu0 0
      %426 = vmatpush2.bf16.msra.mxu0 0
      %427 = vmatprep.subr.bf16.mxu0 0
      %428 = vmatpush2.bf16.msra.mxu0 0
      %429 = vmatprep.subr.bf16.mxu0 0
      %430 = vmatpush2.bf16.msra.mxu0 0
      %431 = vmatprep.subr.bf16.mxu0 0
      %432 = vmatpush2.bf16.msra.mxu0 0
      %433 = vmatprep.subr.bf16.mxu0 0
      %434 = vmatpush2.bf16.msra.mxu0 0
      %435 = vmatprep.subr.bf16.mxu0 0
      %436 = vmatpush2.bf16.msra.mxu0 0
      %437 = vmatprep.subr.bf16.mxu0 0
      %438 = vmatpush2.bf16.msra.mxu0 0
      %439 = vmatprep.subr.bf16.mxu0 0
      %440 = vmatpush2.bf16.msra.mxu0 0
      %441 = vmatprep.mubr.bf16.mxu0 0
      %442 = vmatmul.mubr.bf16.gmra.mxu0 %v407
      %v443 = vpop.f32.mrf.mxu0
      %v444 = vadd.f32 %v391, %v443
      %v445 = vpop.f32.mrf.mxu0
      %v446 = vpop.f32.mrf.mxu0
      %v447 = vpop.f32.mrf.mxu0
      %448 = vdwg.mxu0
      %v449 = vpack.c.bf16 %v444, %v444
      %451 = vrot.lane.b32.xlu0 %v449, 96
      %v452 = vpop.permute.xlu0 %451
      %vm453 = vcmask 64512
      %v455 = vsel %vm453, %v449, 0
      %v458 = vsel %vm453, %v452, 0
      %460 = vmatprep.subr.bf16.mxu0 0
      %461 = vmatpush1.bf16.xpose.msra.mxu0 0
      %462 = vmatprep.subr.bf16.mxu0 0
      %463 = vmatpush1.bf16.xpose.msra.mxu0 0
      %464 = vmatprep.subr.bf16.mxu0 0
      %465 = vmatpush1.bf16.xpose.msra.mxu0 0
      %466 = vmatprep.subr.bf16.mxu0 0
      %467 = vmatpush1.bf16.xpose.msra.mxu0 0
      %468 = vmatprep.subr.bf16.mxu0 0
      %469 = vmatpush1.bf16.xpose.msra.mxu0 0
      %470 = vmatprep.subr.bf16.mxu0 0
      %471 = vmatpush1.bf16.xpose.msra.mxu0 0
      %472 = vmatprep.subr.bf16.mxu0 0
      %473 = vmatpush1.bf16.xpose.msra.mxu0 0
      %474 = vmatprep.subr.bf16.mxu0 0
      %475 = vmatpush1.bf16.xpose.msra.mxu0 %v458
      %476 = vmatprep.subr.bf16.mxu0 0
      %477 = vmatpush2.bf16.xpose.msra.mxu0 0
      %478 = vmatprep.subr.bf16.mxu0 0
      %479 = vmatpush2.bf16.xpose.msra.mxu0 0
      %480 = vmatprep.subr.bf16.mxu0 0
      %481 = vmatpush2.bf16.xpose.msra.mxu0 0
      %482 = vmatprep.subr.bf16.mxu0 0
      %483 = vmatpush2.bf16.xpose.msra.mxu0 0
      %484 = vmatprep.subr.bf16.mxu0 0
      %485 = vmatpush2.bf16.xpose.msra.mxu0 0
      %486 = vmatprep.subr.bf16.mxu0 0
      %487 = vmatpush2.bf16.xpose.msra.mxu0 0
      %488 = vmatprep.subr.bf16.mxu0 0
      %489 = vmatpush2.bf16.xpose.msra.mxu0 0
      %490 = vmatprep.subr.bf16.mxu0 0
      %491 = vmatpush2.bf16.xpose.msra.mxu0 0
      %492 = vmatprep.mubr.bf16.mxu0 0
      %493 = vmatmul.mubr.bf16.gmra.mxu0 %v455
      %v494 = vpop.f32.mrf.mxu0
      %v495 = vadd.f32 0.0, %v494
      %v496 = vpop.f32.mrf.mxu0
      %v497 = vpop.f32.mrf.mxu0
      %v498 = vpop.f32.mrf.mxu0
      %499 = vdwg.mxu0
      %v500 = vsel %vm453, %v495, -inf
      %501 = vmax.xlane.f32.xlu0 %v500
      %v502 = vpop.xlane.xlu0 %501
      %v503 = vsub.f32 %v495, %v502
      %v504 = vmul.f32 %v503, 1.442695
      %v505 = vpow.pop %v504
      %v506 = vsel %vm453, %v505, 0.0
      %507 = vadd.xlane.f32.xlu0 %v506
      %v508 = vpop.xlane.xlu0 %507
      %v509 = vpack.c.bf16 %v505, %v505
      %510 = vrot.lane.b32.xlu0 %v449, 64
      %v511 = vpop.permute.xlu0 %510
      %v513 = vsel %vm453, %v509, 0
      %vm515 = vcmask 1043456
      %v517 = vsel %vm515, %v511, 0
      %519 = vmatprep.subr.bf16.mxu0 0
      %520 = vmatpush1.bf16.msra.mxu0 0
      %521 = vmatprep.subr.bf16.mxu0 0
      %522 = vmatpush1.bf16.msra.mxu0 0
      %523 = vmatprep.subr.bf16.mxu0 0
      %524 = vmatpush1.bf16.msra.mxu0 0
      %525 = vmatprep.subr.bf16.mxu0 0
      %526 = vmatpush1.bf16.msra.mxu0 0
      %527 = vmatprep.subr.bf16.mxu0 0
      %528 = vmatpush1.bf16.msra.mxu0 0
      %529 = vmatprep.subr.bf16.mxu0 0
      %530 = vmatpush1.bf16.msra.mxu0 0
      %531 = vmatprep.subr.bf16.mxu0 0
      %532 = vmatpush1.bf16.msra.mxu0 0
      %533 = vmatprep.subr.bf16.mxu0 0
      %534 = vmatpush1.bf16.msra.mxu0 %v517
      %535 = vmatprep.subr.bf16.mxu0 0
      %536 = vmatpush2.bf16.msra.mxu0 0
      %537 = vmatprep.subr.bf16.mxu0 0
      %538 = vmatpush2.bf16.msra.mxu0 0
      %539 = vmatprep.subr.bf16.mxu0 0
      %540 = vmatpush2.bf16.msra.mxu0 0
      %541 = vmatprep.subr.bf16.mxu0 0
      %542 = vmatpush2.bf16.msra.mxu0 0
      %543 = vmatprep.subr.bf16.mxu0 0
      %544 = vmatpush2.bf16.msra.mxu0 0
      %545 = vmatprep.subr.bf16.mxu0 0
      %546 = vmatpush2.bf16.msra.mxu0 0
      %547 = vmatprep.subr.bf16.mxu0 0
      %548 = vmatpush2.bf16.msra.mxu0 0
      %549 = vmatprep.subr.bf16.mxu0 0
      %550 = vmatpush2.bf16.msra.mxu0 0
      %551 = vmatprep.mubr.bf16.mxu0 0
      %552 = vmatmul.mubr.bf16.gmra.mxu0 %v513
      %v553 = vpop.f32.mrf.mxu0
      %v554 = vadd.f32 0.0, %v553
      %v555 = vpop.f32.mrf.mxu0
      %v556 = vpop.f32.mrf.mxu0
      %v557 = vpop.f32.mrf.mxu0
      %558 = vdwg.mxu0
      %v559 = vrcp.pop %v508
      %v560 = vmul.f32 %v554, %v559
      %v561 = vpack.c.bf16 %v560, %v560
      %562 = vrot.lane.b32.xlu0 %v449, 120
      %v563 = vpop.permute.xlu0 %562
      %564 = vrot.lane.b32.xlu0 %v449, 88
      %v565 = vpop.permute.xlu0 %564
      %v567 = vsel %vm453, %v563, 0
      %v570 = vsel %vm453, %v565, 0
      %572 = vmatprep.subr.bf16.mxu0 0
      %573 = vmatpush1.bf16.xpose.msra.mxu0 0
      %574 = vmatprep.subr.bf16.mxu0 0
      %575 = vmatpush1.bf16.xpose.msra.mxu0 0
      %576 = vmatprep.subr.bf16.mxu0 0
      %577 = vmatpush1.bf16.xpose.msra.mxu0 0
      %578 = vmatprep.subr.bf16.mxu0 0
      %579 = vmatpush1.bf16.xpose.msra.mxu0 0
      %580 = vmatprep.subr.bf16.mxu0 0
      %581 = vmatpush1.bf16.xpose.msra.mxu0 0
      %582 = vmatprep.subr.bf16.mxu0 0
      %583 = vmatpush1.bf16.xpose.msra.mxu0 0
      %584 = vmatprep.subr.bf16.mxu0 0
      %585 = vmatpush1.bf16.xpose.msra.mxu0 0
      %586 = vmatprep.subr.bf16.mxu0 0
      %587 = vmatpush1.bf16.xpose.msra.mxu0 %v570
      %588 = vmatprep.subr.bf16.mxu0 0
      %589 = vmatpush2.bf16.xpose.msra.mxu0 0
      %590 = vmatprep.subr.bf16.mxu0 0
      %591 = vmatpush2.bf16.xpose.msra.mxu0 0
      %592 = vmatprep.subr.bf16.mxu0 0
      %593 = vmatpush2.bf16.xpose.msra.mxu0 0
      %594 = vmatprep.subr.bf16.mxu0 0
      %595 = vmatpush2.bf16.xpose.msra.mxu0 0
      %596 = vmatprep.subr.bf16.mxu0 0
      %597 = vmatpush2.bf16.xpose.msra.mxu0 0
      %598 = vmatprep.subr.bf16.mxu0 0
      %599 = vmatpush2.bf16.xpose.msra.mxu0 0
      %600 = vmatprep.subr.bf16.mxu0 0
      %601 = vmatpush2.bf16.xpose.msra.mxu0 0
      %602 = vmatprep.subr.bf16.mxu0 0
      %603 = vmatpush2.bf16.xpose.msra.mxu0 0
      %604 = vmatprep.mubr.bf16.mxu0 0
      %605 = vmatmul.mubr.bf16.gmra.mxu0 %v567
      %v606 = vpop.f32.mrf.mxu0
      %v607 = vadd.f32 0.0, %v606
      %v608 = vpop.f32.mrf.mxu0
      %v609 = vpop.f32.mrf.mxu0
      %v610 = vpop.f32.mrf.mxu0
      %611 = vdwg.mxu0
      %v612 = vsel %vm453, %v607, -inf
      %613 = vmax.xlane.f32.xlu0 %v612
      %v614 = vpop.xlane.xlu0 %613
      %v615 = vsub.f32 %v607, %v614
      %v616 = vmul.f32 %v615, 1.442695
      %v617 = vpow.pop %v616
      %v618 = vsel %vm453, %v617, 0.0
      %619 = vadd.xlane.f32.xlu0 %v618
      %v620 = vpop.xlane.xlu0 %619
      %v621 = vpack.c.bf16 %v617, %v617
      %622 = vrot.lane.b32.xlu0 %v449, 56
      %v623 = vpop.permute.xlu0 %622
      %v625 = vsel %vm453, %v621, 0
      %v628 = vsel %vm515, %v623, 0
      %630 = vmatprep.subr.bf16.mxu0 0
      %631 = vmatpush1.bf16.msra.mxu0 0
      %632 = vmatprep.subr.bf16.mxu0 0
      %633 = vmatpush1.bf16.msra.mxu0 0
      %634 = vmatprep.subr.bf16.mxu0 0
      %635 = vmatpush1.bf16.msra.mxu0 0
      %636 = vmatprep.subr.bf16.mxu0 0
      %637 = vmatpush1.bf16.msra.mxu0 0
      %638 = vmatprep.subr.bf16.mxu0 0
      %639 = vmatpush1.bf16.msra.mxu0 0
      %640 = vmatprep.subr.bf16.mxu0 0
      %641 = vmatpush1.bf16.msra.mxu0 0
      %642 = vmatprep.subr.bf16.mxu0 0
      %643 = vmatpush1.bf16.msra.mxu0 0
      %644 = vmatprep.subr.bf16.mxu0 0
      %645 = vmatpush1.bf16.msra.mxu0 %v628
      %646 = vmatprep.subr.bf16.mxu0 0
      %647 = vmatpush2.bf16.msra.mxu0 0
      %648 = vmatprep.subr.bf16.mxu0 0
      %649 = vmatpush2.bf16.msra.mxu0 0
      %650 = vmatprep.subr.bf16.mxu0 0
      %651 = vmatpush2.bf16.msra.mxu0 0
      %652 = vmatprep.subr.bf16.mxu0 0
      %653 = vmatpush2.bf16.msra.mxu0 0
      %654 = vmatprep.subr.bf16.mxu0 0
      %655 = vmatpush2.bf16.msra.mxu0 0
      %656 = vmatprep.subr.bf16.mxu0 0
      %657 = vmatpush2.bf16.msra.mxu0 0
      %658 = vmatprep.subr.bf16.mxu0 0
      %659 = vmatpush2.bf16.msra.mxu0 0
      %660 = vmatprep.subr.bf16.mxu0 0
      %661 = vmatpush2.bf16.msra.mxu0 0
      %662 = vmatprep.mubr.bf16.mxu0 0
      %663 = vmatmul.mubr.bf16.gmra.mxu0 %v625
      %v664 = vpop.f32.mrf.mxu0
      %v665 = vadd.f32 0.0, %v664
      %v666 = vpop.f32.mrf.mxu0
      %v667 = vpop.f32.mrf.mxu0
      %v668 = vpop.f32.mrf.mxu0
      %669 = vdwg.mxu0
      %v670 = vrcp.pop %v620
      %v671 = vmul.f32 %v665, %v670
      %v672 = vpack.c.bf16 %v671, %v671
      %673 = vrot.lane.b32.xlu0 %v449, 112
      %v674 = vpop.permute.xlu0 %673
      %675 = vrot.lane.b32.xlu0 %v449, 80
      %v676 = vpop.permute.xlu0 %675
      %v678 = vsel %vm453, %v674, 0
      %v681 = vsel %vm453, %v676, 0
      %683 = vmatprep.subr.bf16.mxu0 0
      %684 = vmatpush1.bf16.xpose.msra.mxu0 0
      %685 = vmatprep.subr.bf16.mxu0 0
      %686 = vmatpush1.bf16.xpose.msra.mxu0 0
      %687 = vmatprep.subr.bf16.mxu0 0
      %688 = vmatpush1.bf16.xpose.msra.mxu0 0
      %689 = vmatprep.subr.bf16.mxu0 0
      %690 = vmatpush1.bf16.xpose.msra.mxu0 0
      %691 = vmatprep.subr.bf16.mxu0 0
      %692 = vmatpush1.bf16.xpose.msra.mxu0 0
      %693 = vmatprep.subr.bf16.mxu0 0
      %694 = vmatpush1.bf16.xpose.msra.mxu0 0
      %695 = vmatprep.subr.bf16.mxu0 0
      %696 = vmatpush1.bf16.xpose.msra.mxu0 0
      %697 = vmatprep.subr.bf16.mxu0 0
      %698 = vmatpush1.bf16.xpose.msra.mxu0 %v681
      %699 = vmatprep.subr.bf16.mxu0 0
      %700 = vmatpush2.bf16.xpose.msra.mxu0 0
      %701 = vmatprep.subr.bf16.mxu0 0
      %702 = vmatpush2.bf16.xpose.msra.mxu0 0
      %703 = vmatprep.subr.bf16.mxu0 0
      %704 = vmatpush2.bf16.xpose.msra.mxu0 0
      %705 = vmatprep.subr.bf16.mxu0 0
      %706 = vmatpush2.bf16.xpose.msra.mxu0 0
      %707 = vmatprep.subr.bf16.mxu0 0
      %708 = vmatpush2.bf16.xpose.msra.mxu0 0
      %709 = vmatprep.subr.bf16.mxu0 0
      %710 = vmatpush2.bf16.xpose.msra.mxu0 0
      %711 = vmatprep.subr.bf16.mxu0 0
      %712 = vmatpush2.bf16.xpose.msra.mxu0 0
      %713 = vmatprep.subr.bf16.mxu0 0
      %714 = vmatpush2.bf16.xpose.msra.mxu0 0
      %715 = vmatprep.mubr.bf16.mxu0 0
      %716 = vmatmul.mubr.bf16.gmra.mxu0 %v678
      %v717 = vpop.f32.mrf.mxu0
      %v718 = vadd.f32 0.0, %v717
      %v719 = vpop.f32.mrf.mxu0
      %v720 = vpop.f32.mrf.mxu0
      %v721 = vpop.f32.mrf.mxu0
      %722 = vdwg.mxu0
      %v723 = vsel %vm453, %v718, -inf
      %724 = vmax.xlane.f32.xlu0 %v723
      %v725 = vpop.xlane.xlu0 %724
      %v726 = vsub.f32 %v718, %v725
      %v727 = vmul.f32 %v726, 1.442695
      %v728 = vpow.pop %v727
      %v729 = vsel %vm453, %v728, 0.0
      %730 = vadd.xlane.f32.xlu0 %v729
      %v731 = vpop.xlane.xlu0 %730
      %v732 = vpack.c.bf16 %v728, %v728
      %733 = vrot.lane.b32.xlu0 %v449, 48
      %v734 = vpop.permute.xlu0 %733
      %v736 = vsel %vm453, %v732, 0
      %v739 = vsel %vm515, %v734, 0
      %741 = vmatprep.subr.bf16.mxu0 0
      %742 = vmatpush1.bf16.msra.mxu0 0
      %743 = vmatprep.subr.bf16.mxu0 0
      %744 = vmatpush1.bf16.msra.mxu0 0
      %745 = vmatprep.subr.bf16.mxu0 0
      %746 = vmatpush1.bf16.msra.mxu0 0
      %747 = vmatprep.subr.bf16.mxu0 0
      %748 = vmatpush1.bf16.msra.mxu0 0
      %749 = vmatprep.subr.bf16.mxu0 0
      %750 = vmatpush1.bf16.msra.mxu0 0
      %751 = vmatprep.subr.bf16.mxu0 0
      %752 = vmatpush1.bf16.msra.mxu0 0
      %753 = vmatprep.subr.bf16.mxu0 0
      %754 = vmatpush1.bf16.msra.mxu0 0
      %755 = vmatprep.subr.bf16.mxu0 0
      %756 = vmatpush1.bf16.msra.mxu0 %v739
      %757 = vmatprep.subr.bf16.mxu0 0
      %758 = vmatpush2.bf16.msra.mxu0 0
      %759 = vmatprep.subr.bf16.mxu0 0
      %760 = vmatpush2.bf16.msra.mxu0 0
      %761 = vmatprep.subr.bf16.mxu0 0
      %762 = vmatpush2.bf16.msra.mxu0 0
      %763 = vmatprep.subr.bf16.mxu0 0
      %764 = vmatpush2.bf16.msra.mxu0 0
      %765 = vmatprep.subr.bf16.mxu0 0
      %766 = vmatpush2.bf16.msra.mxu0 0
      %767 = vmatprep.subr.bf16.mxu0 0
      %768 = vmatpush2.bf16.msra.mxu0 0
      %769 = vmatprep.subr.bf16.mxu0 0
      %770 = vmatpush2.bf16.msra.mxu0 0
      %771 = vmatprep.subr.bf16.mxu0 0
      %772 = vmatpush2.bf16.msra.mxu0 0
      %773 = vmatprep.mubr.bf16.mxu0 0
      %774 = vmatmul.mubr.bf16.gmra.mxu0 %v736
      %v775 = vpop.f32.mrf.mxu0
      %v776 = vadd.f32 0.0, %v775
      %v777 = vpop.f32.mrf.mxu0
      %v778 = vpop.f32.mrf.mxu0
      %v779 = vpop.f32.mrf.mxu0
      %780 = vdwg.mxu0
      %v781 = vrcp.pop %v731
      %v782 = vmul.f32 %v776, %v781
      %v783 = vpack.c.bf16 %v782, %v782
      %784 = vrot.lane.b32.xlu0 %v449, 104
      %v785 = vpop.permute.xlu0 %784
      %786 = vrot.lane.b32.xlu0 %v449, 72
      %v787 = vpop.permute.xlu0 %786
      %v789 = vsel %vm453, %v785, 0
      %v792 = vsel %vm453, %v787, 0
      %794 = vmatprep.subr.bf16.mxu0 0
      %795 = vmatpush1.bf16.xpose.msra.mxu0 0
      %796 = vmatprep.subr.bf16.mxu0 0
      %797 = vmatpush1.bf16.xpose.msra.mxu0 0
      %798 = vmatprep.subr.bf16.mxu0 0
      %799 = vmatpush1.bf16.xpose.msra.mxu0 0
      %800 = vmatprep.subr.bf16.mxu0 0
      %801 = vmatpush1.bf16.xpose.msra.mxu0 0
      %802 = vmatprep.subr.bf16.mxu0 0
      %803 = vmatpush1.bf16.xpose.msra.mxu0 0
      %804 = vmatprep.subr.bf16.mxu0 0
      %805 = vmatpush1.bf16.xpose.msra.mxu0 0
      %806 = vmatprep.subr.bf16.mxu0 0
      %807 = vmatpush1.bf16.xpose.msra.mxu0 0
      %808 = vmatprep.subr.bf16.mxu0 0
      %809 = vmatpush1.bf16.xpose.msra.mxu0 %v792
      %810 = vmatprep.subr.bf16.mxu0 0
      %811 = vmatpush2.bf16.xpose.msra.mxu0 0
      %812 = vmatprep.subr.bf16.mxu0 0
      %813 = vmatpush2.bf16.xpose.msra.mxu0 0
      %814 = vmatprep.subr.bf16.mxu0 0
      %815 = vmatpush2.bf16.xpose.msra.mxu0 0
      %816 = vmatprep.subr.bf16.mxu0 0
      %817 = vmatpush2.bf16.xpose.msra.mxu0 0
      %818 = vmatprep.subr.bf16.mxu0 0
      %819 = vmatpush2.bf16.xpose.msra.mxu0 0
      %820 = vmatprep.subr.bf16.mxu0 0
      %821 = vmatpush2.bf16.xpose.msra.mxu0 0
      %822 = vmatprep.subr.bf16.mxu0 0
      %823 = vmatpush2.bf16.xpose.msra.mxu0 0
      %824 = vmatprep.subr.bf16.mxu0 0
      %825 = vmatpush2.bf16.xpose.msra.mxu0 0
      %826 = vmatprep.mubr.bf16.mxu0 0
      %827 = vmatmul.mubr.bf16.gmra.mxu0 %v789
      %v828 = vpop.f32.mrf.mxu0
      %v829 = vadd.f32 0.0, %v828
      %v830 = vpop.f32.mrf.mxu0
      %v831 = vpop.f32.mrf.mxu0
      %v832 = vpop.f32.mrf.mxu0
      %833 = vdwg.mxu0
      %v834 = vsel %vm453, %v829, -inf
      %835 = vmax.xlane.f32.xlu0 %v834
      %v836 = vpop.xlane.xlu0 %835
      %v837 = vsub.f32 %v829, %v836
      %v838 = vmul.f32 %v837, 1.442695
      %v839 = vpow.pop %v838
      %v840 = vsel %vm453, %v839, 0.0
      %841 = vadd.xlane.f32.xlu0 %v840
      %v842 = vpop.xlane.xlu0 %841
      %v843 = vpack.c.bf16 %v839, %v839
      %844 = vrot.lane.b32.xlu0 %v449, 40
      %v845 = vpop.permute.xlu0 %844
      %v847 = vsel %vm453, %v843, 0
      %v850 = vsel %vm515, %v845, 0
      %852 = vmatprep.subr.bf16.mxu0 0
      %853 = vmatpush1.bf16.msra.mxu0 0
      %854 = vmatprep.subr.bf16.mxu0 0
      %855 = vmatpush1.bf16.msra.mxu0 0
      %856 = vmatprep.subr.bf16.mxu0 0
      %857 = vmatpush1.bf16.msra.mxu0 0
      %858 = vmatprep.subr.bf16.mxu0 0
      %859 = vmatpush1.bf16.msra.mxu0 0
      %860 = vmatprep.subr.bf16.mxu0 0
      %861 = vmatpush1.bf16.msra.mxu0 0
      %862 = vmatprep.subr.bf16.mxu0 0
      %863 = vmatpush1.bf16.msra.mxu0 0
      %864 = vmatprep.subr.bf16.mxu0 0
      %865 = vmatpush1.bf16.msra.mxu0 0
      %866 = vmatprep.subr.bf16.mxu0 0
      %867 = vmatpush1.bf16.msra.mxu0 %v850
      %868 = vmatprep.subr.bf16.mxu0 0
      %869 = vmatpush2.bf16.msra.mxu0 0
      %870 = vmatprep.subr.bf16.mxu0 0
      %871 = vmatpush2.bf16.msra.mxu0 0
      %872 = vmatprep.subr.bf16.mxu0 0
      %873 = vmatpush2.bf16.msra.mxu0 0
      %874 = vmatprep.subr.bf16.mxu0 0
      %875 = vmatpush2.bf16.msra.mxu0 0
      %876 = vmatprep.subr.bf16.mxu0 0
      %877 = vmatpush2.bf16.msra.mxu0 0
      %878 = vmatprep.subr.bf16.mxu0 0
      %879 = vmatpush2.bf16.msra.mxu0 0
      %880 = vmatprep.subr.bf16.mxu0 0
      %881 = vmatpush2.bf16.msra.mxu0 0
      %882 = vmatprep.subr.bf16.mxu0 0
      %883 = vmatpush2.bf16.msra.mxu0 0
      %884 = vmatprep.mubr.bf16.mxu0 0
      %885 = vmatmul.mubr.bf16.gmra.mxu0 %v847
      %v886 = vpop.f32.mrf.mxu0
      %v887 = vadd.f32 0.0, %v886
      %v888 = vpop.f32.mrf.mxu0
      %v889 = vpop.f32.mrf.mxu0
      %v890 = vpop.f32.mrf.mxu0
      %891 = vdwg.mxu0
      %v892 = vrcp.pop %v842
      %v893 = vmul.f32 %v887, %v892
      %v894 = vpack.c.bf16 %v893, %v893
      %896 = vrot.lane.b32.xlu0 %v672, 8
      %v897 = vpop.permute.xlu0 %896
      %899 = vrot.lane.b32.xlu0 %v783, 16
      %v900 = vpop.permute.xlu0 %899
      %902 = vrot.lane.b32.xlu0 %v894, 24
      %v903 = vpop.permute.xlu0 %902
      %v906 = vsel %vm453, %v561, %v897
      %vm907 = vcmask 130048
      %v909 = vsel %vm907, %v906, %v900
      %vm910 = vcmask 195584
      %v912 = vsel %vm910, %v909, %v903
      %v913 = vld [vmem:[#allocation3] sm:$0xff]
      %v914 = vld [vmem:[%s335] sm:$0xf]
      %v915 = vld [vmem:[%s335 + $0x4] sm:$0xf]
      %v916 = vld [vmem:[%s335 + $0x8] sm:$0xf]
      %v917 = vld [vmem:[%s335 + $0xc] sm:$0xf]
      %v922 = vunpack.c.l.b16 %v914
      %v923 = vunpack.c.l.b16 %v915
      %v924 = vunpack.c.l.b16 %v916
      %v925 = vunpack.c.l.b16 %v917
      %v926 = vpack.c.b16 %v923, %v922
      %v927 = vpack.c.b16 %v925, %v924
      %v930 = vsel %vm405, %v912, 0
      %932 = vmatprep.subr.bf16.mxu0 0
      %933 = vmatpush1.bf16.msra.mxu0 0
      %934 = vmatprep.subr.bf16.mxu0 0
      %935 = vmatpush1.bf16.msra.mxu0 0
      %936 = vmatprep.subr.bf16.mxu0 0
      %937 = vmatpush1.bf16.msra.mxu0 0
      %938 = vmatprep.subr.bf16.mxu0 0
      %939 = vmatpush1.bf16.msra.mxu0 0
      %940 = vmatprep.subr.bf16.mxu0 0
      %941 = vmatpush1.bf16.msra.mxu0 0
      %942 = vmatprep.subr.bf16.mxu0 0
      %943 = vmatpush1.bf16.msra.mxu0 0
      %944 = vmatprep.subr.bf16.mxu0 0
      %945 = vmatpush1.bf16.msra.mxu0 %v927
      %946 = vmatprep.subr.bf16.mxu0 0
      %947 = vmatpush1.bf16.msra.mxu0 %v926
      %948 = vmatprep.subr.bf16.mxu0 0
      %949 = vmatpush2.bf16.msra.mxu0 0
      %950 = vmatprep.subr.bf16.mxu0 0
      %951 = vmatpush2.bf16.msra.mxu0 0
      %952 = vmatprep.subr.bf16.mxu0 0
      %953 = vmatpush2.bf16.msra.mxu0 0
      %954 = vmatprep.subr.bf16.mxu0 0
      %955 = vmatpush2.bf16.msra.mxu0 0
      %956 = vmatprep.subr.bf16.mxu0 0
      %957 = vmatpush2.bf16.msra.mxu0 0
      %958 = vmatprep.subr.bf16.mxu0 0
      %959 = vmatpush2.bf16.msra.mxu0 0
      %960 = vmatprep.subr.bf16.mxu0 0
      %961 = vmatpush2.bf16.msra.mxu0 0
      %962 = vmatprep.subr.bf16.mxu0 0
      %963 = vmatpush2.bf16.msra.mxu0 0
      %964 = vmatprep.mubr.bf16.mxu0 0
      %965 = vmatmul.mubr.bf16.gmra.mxu0 %v930
      %v966 = vpop.f32.mrf.mxu0
      %v967 = vadd.f32 0.0, %v966
      %v968 = vpop.f32.mrf.mxu0
      %v969 = vpop.f32.mrf.mxu0
      %v970 = vpop.f32.mrf.mxu0
      %971 = vdwg.mxu0
      %v972 = vadd.f32 %v913, %v967
      %973 = vst.msk [vmem:[#allocation3] sm:$0xff] %vm405, %v972
      // Predicated region
      $region53: #{transformer_forward.6} parent=47 // pred_check
        %p974 = pneg %p341
      $region54: #{transformer_forward.6} parent=47 // pred_check_branch
        %976 = sbr.rel (%p974) target = $region56
      $region55: #{transformer_forward.6} parent=47 // pred_region
        %v977 = vld [vmem:[%s322] sm:$0xff]
        %v978 = vld [vmem:[#allocation3] sm:$0xff]
        %v979 = vadd.f32 %v977, %v978
        %v980 = vld [vmem:[%s6] sm:$0x1]
        %v982 = vlaneseq
        %v983 = vshrl.u32 %v982, 7
        %v984 = vsub.s32 0, %v983
        %v985 = vrot.slane %v980, %v984
        %v987 = vadd.f32 %v979, %v985
        %988 = vst.msk [vmem:[%s339] sm:$0xff] %vm405, %v987
      $region56: #{transformer_forward.6} parent=47 // pred_fallthru
        _
      %p989 = scmp.lt.s32.totalorder %s22, 1
      %s990 = scalar_select %p989, %s22, 1
      %s991 = smul.addr %s990, 8
      %s992 = scalar_lea.vmem %s7, %s991
      // Predicated region
      $region57: #{transformer_forward.6} parent=47 // pred_check
        %p993 = pneg %p215
      $region58: #{transformer_forward.6} parent=47 // pred_check_branch
        %995 = sbr.rel (%p993) target = $region60
      $region59: #{transformer_forward.6} parent=47 // pred_region
        _
      $region60: #{transformer_forward.6} parent=47 // pred_fallthru
        _
    $region48: #{transformer_forward.6} parent=5 // pred_fallthru
      _
    %p996 = scmp.le.s32.totalorder 2, %s13
    // Predicated region
    $region61: #{transformer_forward.6} parent=5 // pred_check
      %p997 = pneg %p996
    $region62: #{transformer_forward.6} parent=5 // pred_check_branch
      %999 = sbr.rel (%p997) target = $region64
    $region63: #{transformer_forward.6} parent=5 // pred_region
      %s1000 = ssub.s32 %s13, 2
      // Predicated region
      $region65: #{transformer_forward.6} parent=63 // pred_check
        %p1001 = pneg %p221
      $region66: #{transformer_forward.6} parent=63 // pred_check_branch
        %1003 = sbr.rel (%p1001) target = $region68
      $region67: #{transformer_forward.6} parent=63 // pred_region
        %p1004 = scmp.lt.s32.totalorder %s24, 1
        %s1005 = scalar_select %p1004, %s24, 1
        %s1006 = smul.addr %s1005, 8
        %s1007 = scalar_lea.vmem %s7, %s1006
      $region68: #{transformer_forward.6} parent=63 // pred_fallthru
        _
    $region64: #{transformer_forward.6} parent=5 // pred_fallthru
      _
  $region6: #{transformer_forward.6} parent=0 // loop_footer
    %s17 = sadd.s32 1, %s13
  $region7: #{transformer_forward.6} parent=0 // loop_footer_branch
    %12 = sbr.rel target = $region3
  $region8: #{transformer_forward.6} parent=0 // loop_exit
    _

// kernel: transformer_forward.4
$region0: #{transformer_forward.4}
  #allocation0 [shape = 'u32[]', space=smem, size = 0x4, offset = 0x4, fixed_abs, tag = 'smem constant byte address 0x4 - core index']
  #allocation1 [shape = 'u32[144,128]{1,0:T(1,128)}', space=vmem, size = 0x12000, scoped, tag = 'internal scratch']
  #allocation2 [shape = 'bf16[8,32]{1,0:T(8,128)(2,1)}', space=vmem, size = 0x800, scoped, tag = 'scratch operand']
  #allocation3 [shape = 'f32[8,32]{1,0:T(8,128)}', space=vmem, size = 0x1000, scoped, tag = 'scratch operand']
  %s0 = inlined_call_operand.hbm [shape: f32[2,8,32], index: 0, kind: input, shape index: {}]
  %s1 = inlined_call_operand.vmem [shape: f32[1,32], index: 1, kind: input, shape index: {}]
  %s2 = inlined_call_operand.vmem [shape: f32[1,32], index: 2, kind: input, shape index: {}]
  %s3 = inlined_call_operand.vmem [shape: bf16[1,32,96], index: 3, kind: input, shape index: {}]
  %s4 = inlined_call_operand.hbm [shape: f32[1,1,96], index: 4, kind: input, shape index: {}]
  %s5 = inlined_call_operand.hbm [shape: bf16[1,32,32], index: 5, kind: input, shape index: {}]
  %s6 = inlined_call_operand.vmem [shape: f32[1,32], index: 6, kind: input, shape index: {}]
  %s7 = inlined_call_operand.vmem [shape: f32[2,8,32], index: 7, kind: output, shape index: {}]
  %s8 = sld [smem:[#allocation0]]
  $region81: #{transformer_forward.4} parent=0
    _
  %s10 = ssub.s32 1, %s8
  %s11 = scalar_select 0, %s10, %s8
  $region1: #{transformer_forward.4} parent=0
    #allocation4 [shape = 'u8[8192]{0}', space=vmem, size = 0x2000, scoped, tag = 'input window, operand 0']
    #allocation5 [shape = 's32[2]{0}', space=sflag, size = 0x8, scoped, tag = 'scoped memory for transformer_forward.4']
    #allocation6 [shape = 'u8[512]{0}', space=vmem, size = 0x400, scoped, tag = 'input window, operand 4, single buffered']
    #allocation7 [shape = 's32[1]{0}', space=sflag, size = 0x4, scoped, tag = 'scoped memory for transformer_forward.4']
    #allocation8 [shape = 'u8[8192]{0}', space=vmem, size = 0x2000, scoped, tag = 'input window, operand 5, single buffered']
    %12 = vsyncpa [#allocation5], 0
    %s13 = scalar_lea.sflag [#allocation5], 1
    %14 = vsyncpa %s13, 0
    %15 = vsyncpa [#allocation7], 0
    loop: start=0, step=1, limit=4
    $region2: #{transformer_forward.4} parent=1 // loop_pre_header
      _
    $region3: #{transformer_forward.4} parent=1 // loop_header
      %s17 = sphi 0, %s21
      %p18 = scmp.ge.s32.totalorder %s17, 4
      %s24 = sphi 0, %s36
      %s25 = sphi 0, %s32
      %s26 = sphi 0, %s24
      %s27 = sphi 0, %s25
      %s28 = sphi 0, %s26
      %s29 = sphi 0, %s27
      %s39 = sphi 0, %s41
      %s42 = sphi 0, %s39
      %s43 = sphi 0, %s42
      %s59 = sphi 0, %s43
      %s63 = sphi 0, %s63
      %s65 = sphi 0, %s63
      %s66 = sphi 0, %s65
      %s80 = sphi 0, %s66
      %s84 = sphi 0, %s84
      %s86 = sphi 0, %s84
      %s87 = sphi 0, %s86
      %s101 = sphi 0, %s87
      %s107 = sphi 0, %s109
      %s110 = sphi 0, %s107
      %s111 = sphi 0, %s110
      %s127 = sphi 0, %s111
      %s133 = sphi 0, %s135
      %s136 = sphi 0, %s133
      %s137 = sphi 0, %s136
      %s153 = sphi 0, %s137
      %s159 = sphi 0, %s161
      %s162 = sphi 0, %s159
      %s163 = sphi 0, %s162
      %s179 = sphi 0, %s163
      %s183 = sphi 0, %s183
      %s185 = sphi 0, %s183
      %s186 = sphi 0, %s185
      %s200 = sphi 0, %s186
      %s206 = sphi 0, %s208
      %s209 = sphi 0, %s206
      %s210 = sphi 0, %s209
      %s226 = sphi 0, %s210
    $region4: #{transformer_forward.4} parent=1 // loop_header_branch
      %20 = sbr.rel (%p18) target = $region8
    $region5: #{transformer_forward.4} parent=1 // loop_body
      %s22 = ssub.s32 %s17, 1
      %s23 = ssub.s32 %s17, 2
      %s30 = sadd.s32 1, %s25
      %p31 = scmp.ge.s32.totalorder %s30, 1
      %s32 = scalar_select %p31, 0, %s30
      %s33 = sadd.s32 1, %s24
      %s34 = scalar_select %p31, %s33, %s24
      %p35 = scmp.ge.s32.totalorder %s34, 2
      %s36 = scalar_select %p35, 0, %s34
      %s37 = ssub.s32 %s24, %s36
      %p38 = scmp.eq.s32.totalorder %s37, 0
      %s40 = sadd.s32 %s39, 1
      %s41 = scalar_select %p38, %s39, %s40
      %p44 = pneg %p38
      %p45 = scmp.eq.s32.totalorder %s17, 1
      %p46 = por %p44, %p45
      %p47 = scmp.ne.s32.totalorder %s39, %s42
      %p48 = scmp.eq.s32.totalorder %s17, 0
      %p49 = por %p47, %p48
      %p50 = scmp.ne.s32.totalorder %s39, %s42
      %p51 = scmp.eq.s32.totalorder %s22, 1
      %p52 = por %p50, %p51
      %p53 = scmp.ne.s32.totalorder %s42, %s43
      %p54 = scmp.eq.s32.totalorder %s22, 0
      %p55 = por %p53, %p54
      %p56 = scmp.ne.s32.totalorder %s42, %s43
      %p57 = scmp.eq.s32.totalorder %s23, 1
      %p58 = por %p56, %p57
      %p60 = scmp.ne.s32.totalorder %s43, %s59
      %p61 = scmp.eq.s32.totalorder %s23, 0
      %p62 = por %p60, %p61
      %s64 = sadd.s32 %s63, 1
      %p67 = scmp.eq.s32.totalorder %s17, 1
      %p68 = scmp.ne.s32.totalorder %s63, %s65
      %p69 = scmp.eq.s32.totalorder %s17, 0
      %p70 = por %p68, %p69
      %p71 = scmp.ne.s32.totalorder %s63, %s65
      %p72 = scmp.eq.s32.totalorder %s22, 1
      %p73 = por %p71, %p72
      %p74 = scmp.ne.s32.totalorder %s65, %s66
      %p75 = scmp.eq.s32.totalorder %s22, 0
      %p76 = por %p74, %p75
      %p77 = scmp.ne.s32.totalorder %s65, %s66
      %p78 = scmp.eq.s32.totalorder %s23, 1
      %p79 = por %p77, %p78
      %p81 = scmp.ne.s32.totalorder %s66, %s80
      %p82 = scmp.eq.s32.totalorder %s23, 0
      %p83 = por %p81, %p82
      %s85 = sadd.s32 %s84, 1
      %p88 = scmp.eq.s32.totalorder %s17, 1
      %p89 = scmp.ne.s32.totalorder %s84, %s86
      %p90 = scmp.eq.s32.totalorder %s17, 0
      %p91 = por %p89, %p90
      %p92 = scmp.ne.s32.totalorder %s84, %s86
      %p93 = scmp.eq.s32.totalorder %s22, 1
      %p94 = por %p92, %p93
      %p95 = scmp.ne.s32.totalorder %s86, %s87
      %p96 = scmp.eq.s32.totalorder %s22, 0
      %p97 = por %p95, %p96
      %p98 = scmp.ne.s32.totalorder %s86, %s87
      %p99 = scmp.eq.s32.totalorder %s23, 1
      %p100 = por %p98, %p99
      %p102 = scmp.ne.s32.totalorder %s87, %s101
      %p103 = scmp.eq.s32.totalorder %s23, 0
      %p104 = por %p102, %p103
      %s105 = ssub.s32 %s25, %s32
      %p106 = scmp.eq.s32.totalorder %s105, 0
      %s108 = sadd.s32 %s107, 1
      %s109 = scalar_select %p106, %s107, %s108
      %p112 = pneg %p106
      %p113 = scmp.eq.s32.totalorder %s17, 1
      %p114 = por %p112, %p113
      %p115 = scmp.ne.s32.totalorder %s107, %s110
      %p116 = scmp.eq.s32.totalorder %s17, 0
      %p117 = por %p115, %p116
      %p118 = scmp.ne.s32.totalorder %s107, %s110
      %p119 = scmp.eq.s32.totalorder %s22, 1
      %p120 = por %p118, %p119
      %p121 = scmp.ne.s32.totalorder %s110, %s111
      %p122 = scmp.eq.s32.totalorder %s22, 0
      %p123 = por %p121, %p122
      %p124 = scmp.ne.s32.totalorder %s110, %s111
      %p125 = scmp.eq.s32.totalorder %s23, 1
      %p126 = por %p124, %p125
      %p128 = scmp.ne.s32.totalorder %s111, %s127
      %p129 = scmp.eq.s32.totalorder %s23, 0
      %p130 = por %p128, %p129
      %s131 = ssub.s32 %s25, %s32
      %p132 = scmp.eq.s32.totalorder %s131, 0
      %s134 = sadd.s32 %s133, 1
      %s135 = scalar_select %p132, %s133, %s134
      %p138 = pneg %p132
      %p139 = scmp.eq.s32.totalorder %s17, 1
      %p140 = por %p138, %p139
      %p141 = scmp.ne.s32.totalorder %s133, %s136
      %p142 = scmp.eq.s32.totalorder %s17, 0
      %p143 = por %p141, %p142
      %p144 = scmp.ne.s32.totalorder %s133, %s136
      %p145 = scmp.eq.s32.totalorder %s22, 1
      %p146 = por %p144, %p145
      %p147 = scmp.ne.s32.totalorder %s136, %s137
      %p148 = scmp.eq.s32.totalorder %s22, 0
      %p149 = por %p147, %p148
      %p150 = scmp.ne.s32.totalorder %s136, %s137
      %p151 = scmp.eq.s32.totalorder %s23, 1
      %p152 = por %p150, %p151
      %p154 = scmp.ne.s32.totalorder %s137, %s153
      %p155 = scmp.eq.s32.totalorder %s23, 0
      %p156 = por %p154, %p155
      %s157 = ssub.s32 %s25, %s32
      %p158 = scmp.eq.s32.totalorder %s157, 0
      %s160 = sadd.s32 %s159, 1
      %s161 = scalar_select %p158, %s159, %s160
      %p164 = pneg %p158
      %p165 = scmp.eq.s32.totalorder %s17, 1
      %p166 = por %p164, %p165
      %p167 = scmp.ne.s32.totalorder %s159, %s162
      %p168 = scmp.eq.s32.totalorder %s17, 0
      %p169 = por %p167, %p168
      %p170 = scmp.ne.s32.totalorder %s159, %s162
      %p171 = scmp.eq.s32.totalorder %s22, 1
      %p172 = por %p170, %p171
      %p173 = scmp.ne.s32.totalorder %s162, %s163
      %p174 = scmp.eq.s32.totalorder %s22, 0
      %p175 = por %p173, %p174
      %p176 = scmp.ne.s32.totalorder %s162, %s163
      %p177 = scmp.eq.s32.totalorder %s23, 1
      %p178 = por %p176, %p177
      %p180 = scmp.ne.s32.totalorder %s163, %s179
      %p181 = scmp.eq.s32.totalorder %s23, 0
      %p182 = por %p180, %p181
      %s184 = sadd.s32 %s183, 1
      %p187 = scmp.eq.s32.totalorder %s17, 1
      %p188 = scmp.ne.s32.totalorder %s183, %s185
      %p189 = scmp.eq.s32.totalorder %s17, 0
      %p190 = por %p188, %p189
      %p191 = scmp.ne.s32.totalorder %s183, %s185
      %p192 = scmp.eq.s32.totalorder %s22, 1
      %p193 = por %p191, %p192
      %p194 = scmp.ne.s32.totalorder %s185, %s186
      %p195 = scmp.eq.s32.totalorder %s22, 0
      %p196 = por %p194, %p195
      %p197 = scmp.ne.s32.totalorder %s185, %s186
      %p198 = scmp.eq.s32.totalorder %s23, 1
      %p199 = por %p197, %p198
      %p201 = scmp.ne.s32.totalorder %s186, %s200
      %p202 = scmp.eq.s32.totalorder %s23, 0
      %p203 = por %p201, %p202
      %s204 = ssub.s32 %s24, %s36
      %p205 = scmp.eq.s32.totalorder %s204, 0
      %s207 = sadd.s32 %s206, 1
      %s208 = scalar_select %p205, %s206, %s207
      %p211 = pneg %p205
      %p212 = scmp.eq.s32.totalorder %s17, 1
      %p213 = por %p211, %p212
      %p214 = scmp.ne.s32.totalorder %s206, %s209
      %p215 = scmp.eq.s32.totalorder %s17, 0
      %p216 = por %p214, %p215
      %p217 = scmp.ne.s32.totalorder %s206, %s209
      %p218 = scmp.eq.s32.totalorder %s22, 1
      %p219 = por %p217, %p218
      %p220 = scmp.ne.s32.totalorder %s209, %s210
      %p221 = scmp.eq.s32.totalorder %s22, 0
      %p222 = por %p220, %p221
      %p223 = scmp.ne.s32.totalorder %s209, %s210
      %p224 = scmp.eq.s32.totalorder %s23, 1
      %p225 = por %p223, %p224
      %p227 = scmp.ne.s32.totalorder %s210, %s226
      %p228 = scmp.eq.s32.totalorder %s23, 0
      %p229 = por %p227, %p228
      %p230 = scmp.le.s32.totalorder 1, %s17
      %p231 = scmp.lt.s32.totalorder %s17, 3
      %p232 = pnand %p230, %p231
      %p233 = pneg %p232
      // Predicated region
      $region9: #{transformer_forward.4} parent=5 // pred_check
        _
      $region10: #{transformer_forward.4} parent=5 // pred_check_branch
        %235 = sbr.rel (%p232) target = $region12
      $region11: #{transformer_forward.4} parent=5 // pred_region
        %s236 = ssub.s32 %s17, 1
        // Predicated region
        $region13: #{transformer_forward.4} parent=11 // pred_check
          %p237 = pneg %p76
        $region14: #{transformer_forward.4} parent=11 // pred_check_branch
          %239 = sbr.rel (%p237) target = $region16
        $region15: #{transformer_forward.4} parent=11 // pred_region
          _
        $region16: #{transformer_forward.4} parent=11 // pred_fallthru
          _
        // Predicated region
        $region17: #{transformer_forward.4} parent=11 // pred_check
          %p240 = pneg %p97
        $region18: #{transformer_forward.4} parent=11 // pred_check_branch
          %242 = sbr.rel (%p240) target = $region20
        $region19: #{transformer_forward.4} parent=11 // pred_region
          _
        $region20: #{transformer_forward.4} parent=11 // pred_fallthru
          _
        // Predicated region
        $region21: #{transformer_forward.4} parent=11 // pred_check
          %p243 = pneg %p123
        $region22: #{transformer_forward.4} parent=11 // pred_check_branch
          %245 = sbr.rel (%p243) target = $region24
        $region23: #{transformer_forward.4} parent=11 // pred_region
          %p246 = scmp.lt.s32.totalorder %s27, 0
          %s247 = scalar_select %p246, %s27, 0
          %s248 = smul.addr %s247, 4
          %s249 = smul.addr %s248, 4
          %s250 = scalar_lea.vmem %s3, %s249
        $region24: #{transformer_forward.4} parent=11 // pred_fallthru
          _
        // Predicated region
        $region25: #{transformer_forward.4} parent=11 // pred_check
          %p251 = pneg %p149
        $region26: #{transformer_forward.4} parent=11 // pred_check_branch
          %253 = sbr.rel (%p251) target = $region28
        $region27: #{transformer_forward.4} parent=11 // pred_region
          %s255 = ssub.s32 16, 16
          %256 = vsyncadd [#allocation7], %s255
          %s257 = smul.addr %s27, 16
          %s258 = scalar_lea.hbm %s4, %s257
          %s260 = sshll.u32 [#allocation6], 4
          %s261 = int_to_ptr.vmem [resolvable:$true] %s260
          %263 = dma.hbm_to_vmem [thread:$0]  %s258, 16, %s261, [#allocation7]
        $region28: #{transformer_forward.4} parent=11 // pred_fallthru
          _
        // Predicated region
        $region29: #{transformer_forward.4} parent=11 // pred_check
          %p264 = pneg %p175
        $region30: #{transformer_forward.4} parent=11 // pred_check_branch
          %266 = sbr.rel (%p264) target = $region32
        $region31: #{transformer_forward.4} parent=11 // pred_region
          %s268 = ssub.s32 256, 256
          %269 = vsyncadd [#allocation7], %s268
          %s270 = smul.addr %s27, 4
          %s271 = smul.addr %s270, 64
          %s272 = scalar_lea.hbm %s5, %s271
          %s273 = sshll.u32 [#allocation8], 4
          %s274 = int_to_ptr.vmem [resolvable:$true] %s273
          %279 = dma.hbm_to_vmem [thread:$0]  %s272, 256, %s274, [#allocation7], 64, 64, 4
        $region32: #{transformer_forward.4} parent=11 // pred_fallthru
          _
        // Predicated region
        $region33: #{transformer_forward.4} parent=11 // pred_check
          %p280 = pneg %p196
        $region34: #{transformer_forward.4} parent=11 // pred_check_branch
          %282 = sbr.rel (%p280) target = $region36
        $region35: #{transformer_forward.4} parent=11 // pred_region
          _
        $region36: #{transformer_forward.4} parent=11 // pred_fallthru
          _
      $region12: #{transformer_forward.4} parent=5 // pred_fallthru
        _
      %p283 = scmp.lt.s32.totalorder %s17, 2
      // Predicated region
      $region37: #{transformer_forward.4} parent=5 // pred_check
        %p284 = pneg %p283
      $region38: #{transformer_forward.4} parent=5 // pred_check_branch
        %286 = sbr.rel (%p284) target = $region40
      $region39: #{transformer_forward.4} parent=5 // pred_region
        // Predicated region
        $region41: #{transformer_forward.4} parent=39 // pred_check
          %p287 = pneg %p49
        $region42: #{transformer_forward.4} parent=39 // pred_check_branch
          %289 = sbr.rel (%p287) target = $region44
        $region43: #{transformer_forward.4} parent=39 // pred_region
          %s290 = sand.u32 %s39, 1
          %s291 = scalar_lea.sflag [#allocation5], %s290
          %s292 = sand.u32 %s39, 1
          %s293 = smul.addr %s292, 8
          %s294 = scalar_lea.vmem [#allocation4], %s293
          %s296 = ssub.s32 128, 128
          %297 = vsyncadd %s291, %s296
          %s298 = smul.addr %s24, 128
          %s299 = scalar_lea.hbm %s0, %s298
          %s301 = sshll.u32 %s294, 4
          %s302 = int_to_ptr.vmem [resolvable:$true] %s301
          %304 = dma.hbm_to_vmem [thread:$0]  %s299, 128, %s302, %s291
        $region44: #{transformer_forward.4} parent=39 // pred_fallthru
          _
      $region40: #{transformer_forward.4} parent=5 // pred_fallthru
        _
      %p305 = scmp.le.s32.totalorder 1, %s17
      %p306 = scmp.lt.s32.totalorder %s17, 3
      %p307 = pnand %p305, %p306
      %p308 = pneg %p307
      // Predicated region
      $region45: #{transformer_forward.4} parent=5 // pred_check
        _
      $region46: #{transformer_forward.4} parent=5 // pred_check_branch
        %310 = sbr.rel (%p307) target = $region48
      $region47: #{transformer_forward.4} parent=5 // pred_region
        %s311 = ssub.s32 %s17, 1
        %s312 = sand.u32 %s42, 1
        %s313 = scalar_lea.sflag [#allocation5], %s312
        %s314 = sand.u32 %s42, 1
        %s315 = smul.addr %s314, 8
        %s316 = scalar_lea.vmem [#allocation4], %s315
        // Predicated region
        $region49: #{transformer_forward.4} parent=47 // pred_check
          %p317 = pneg %p55
        $region50: #{transformer_forward.4} parent=47 // pred_check_branch
          %319 = sbr.rel (%p317) target = $region52
        $region51: #{transformer_forward.4} parent=47 // pred_region
          %320 = dma.done %s313, 128
        $region52: #{transformer_forward.4} parent=47 // pred_fallthru
          _
        // Predicated region
        $region53: #{transformer_forward.4} parent=47 // pred_check
          %p321 = pneg %p149
        $region54: #{transformer_forward.4} parent=47 // pred_check_branch
          %323 = sbr.rel (%p321) target = $region56
        $region55: #{transformer_forward.4} parent=47 // pred_region
          %324 = dma.done [#allocation7], 16
        $region56: #{transformer_forward.4} parent=47 // pred_fallthru
          _
        // Predicated region
        $region57: #{transformer_forward.4} parent=47 // pred_check
          %p325 = pneg %p175
        $region58: #{transformer_forward.4} parent=47 // pred_check_branch
          %327 = sbr.rel (%p325) target = $region60
        $region59: #{transformer_forward.4} parent=47 // pred_region
          %328 = dma.done [#allocation7], 256
        $region60: #{transformer_forward.4} parent=47 // pred_fallthru
          _
        %s329 = sand.u32 %s42, 1
        %s330 = scalar_lea.sflag [#allocation5], %s329
        %s331 = sand.u32 %s42, 1
        %s332 = smul.addr %s331, 8
        %s333 = scalar_lea.vmem [#allocation4], %s332
        %p334 = pneg %p55
        %p335 = pneg %p52
        %p336 = pneg %p76
        %p337 = pneg %p73
        %p338 = pneg %p97
        %p339 = pneg %p94
        %p340 = scmp.lt.s32.totalorder %s27, 0
        %s341 = scalar_select %p340, %s27, 0
        %s342 = smul.addr %s341, 4
        %s343 = smul.addr %s342, 4
        %s344 = scalar_lea.vmem %s3, %s343
        %p345 = pneg %p123
        %p346 = pneg %p120
        %p347 = pneg %p149
        %p348 = pneg %p146
        %p349 = pneg %p175
        %p350 = pneg %p172
        %p351 = pneg %p196
        %p352 = pneg %p193
        %p353 = pneg %p222
        %p354 = pneg %p219
        %p355 = scmp.lt.s32.totalorder %s26, 1
        %s356 = scalar_select %p355, %s26, 1
        %s357 = smul.addr %s356, 8
        %s358 = scalar_lea.vmem %s7, %s357
        %p359 = scmp.lt.s32.totalorder %s27, 0
        %s360 = scalar_select %p359, %s27, 0
        %s361 = smul.addr %s360, 4
        %s362 = smul.addr %s361, 4
        %s363 = scalar_lea.vmem %s3, %s362
        %p364 = scmp.lt.s32.totalorder %s26, 1
        %s365 = scalar_select %p364, %s26, 1
        %s366 = smul.addr %s365, 8
        %s367 = scalar_lea.vmem %s7, %s366
        %p369 = scmp.eq.s32.totalorder %s27, 0
        // Predicated region
        $region61: #{transformer_forward.4} parent=47 // pred_check
          %p370 = pneg %p369
        $region62: #{transformer_forward.4} parent=47 // pred_check_branch
          %372 = sbr.rel (%p370) target = $region64
        $region63: #{transformer_forward.4} parent=47 // pred_region
          %v373 = vld [vmem:[%s316] sm:$0xff]
          %v374 = vld [vmem:[%s1] sm:$0x1]
          %v375 = vld [vmem:[%s2] sm:$0x1]
          %vm376 = vcmask 261120
          %v377 = vsel %vm376, %v373, 0.0
          %378 = vadd.xlane.f32.xlu0 %v377
          %v379 = vpop.xlane.xlu0 %378
          %v380 = vrcp.pop 32.0
          %v381 = vmul.f32 %v379, %v380
          %v382 = vsub.f32 %v373, %v381
          %v383 = vmul.f32 %v382, %v382
          %v384 = vsel %vm376, %v383, 0.0
          %385 = vadd.xlane.f32.xlu0 %v384
          %v386 = vpop.xlane.xlu0 %385
          %v387 = vmul.f32 %v386, %v380
          %v388 = vadd.f32 %v387, 1e-05
          %v389 = vrsqrt.pop %v388
          %v390 = vmul.f32 %v382, %v389
          %v392 = vlaneseq
          %v393 = vshrl.u32 %v392, 7
          %v394 = vsub.s32 0, %v393
          %v395 = vrot.slane %v374, %v394
          %v397 = vmul.f32 %v390, %v395
          %v399 = vlaneseq
          %v400 = vshrl.u32 %v399, 7
          %v401 = vsub.s32 0, %v400
          %v402 = vrot.slane %v375, %v401
          %v404 = vadd.f32 %v397, %v402
          %v405 = vpack.c.bf16 %v404, %v404
          %vm406 = vcmask 257024
          %407 = vst.msk [vmem:[#allocation2] sm:$0xf] %vm406, %v405
          %408 = vst.msk [vmem:[#allocation3] sm:$0xff] %vm376, 0.0
        $region64: #{transformer_forward.4} parent=47 // pred_fallthru
          _
        %v409 = vld [vmem:[#allocation2] sm:$0xf]
        %v410 = vld [vmem:[%s363] sm:$0xf]
        %v411 = vld [vmem:[%s363 + $0x4] sm:$0xf]
        %v412 = vld [vmem:[%s363 + $0x8] sm:$0xf]
        %v413 = vld [vmem:[%s363 + $0xc] sm:$0xf]
        %v414 = vld [vmem:[#allocation6] sm:$0x1]
        %v416 = vlaneseq
        %v417 = vshrl.u32 %v416, 7
        %v418 = vsub.s32 0, %v417
        %v419 = vrot.slane %v414, %v418
        %v425 = vunpack.c.l.b16 %v410
        %v426 = vunpack.c.l.b16 %v411
        %v427 = vunpack.c.l.b16 %v412
        %v428 = vunpack.c.l.b16 %v413
        %v429 = vpack.c.b16 %v426, %v425
        %v430 = vpack.c.b16 %v428, %v427
        %vm433 = vcmask 261120
        %v435 = vsel %vm433, %v409, 0
        %437 = vmatprep.subr.bf16.mxu0 0
        %438 = vmatpush1.bf16.msra.mxu0 0
        %439 = vmatprep.subr.bf16.mxu0 0
        %440 = vmatpush1.bf16.msra.mxu0 0
        %441 = vmatprep.subr.bf16.mxu0 0
        %442 = vmatpush1.bf16.msra.mxu0 0
        %443 = vmatprep.subr.bf16.mxu0 0
        %444 = vmatpush1.bf16.msra.mxu0 0
        %445 = vmatprep.subr.bf16.mxu0 0
        %446 = vmatpush1.bf16.msra.mxu0 0
        %447 = vmatprep.subr.bf16.mxu0 0
        %448 = vmatpush1.bf16.msra.mxu0 0
        %449 = vmatprep.subr.bf16.mxu0 0
        %450 = vmatpush1.bf16.msra.mxu0 %v430
        %451 = vmatprep.subr.bf16.mxu0 0
        %452 = vmatpush1.bf16.msra.mxu0 %v429
        %453 = vmatprep.subr.bf16.mxu0 0
        %454 = vmatpush2.bf16.msra.mxu0 0
        %455 = vmatprep.subr.bf16.mxu0 0
        %456 = vmatpush2.bf16.msra.mxu0 0
        %457 = vmatprep.subr.bf16.mxu0 0
        %458 = vmatpush2.bf16.msra.mxu0 0
        %459 = vmatprep.subr.bf16.mxu0 0
        %460 = vmatpush2.bf16.msra.mxu0 0
        %461 = vmatprep.subr.bf16.mxu0 0
        %462 = vmatpush2.bf16.msra.mxu0 0
        %463 = vmatprep.subr.bf16.mxu0 0
        %464 = vmatpush2.bf16.msra.mxu0 0
        %465 = vmatprep.subr.bf16.mxu0 0
        %466 = vmatpush2.bf16.msra.mxu0 0
        %467 = vmatprep.subr.bf16.mxu0 0
        %468 = vmatpush2.bf16.msra.mxu0 0
        %469 = vmatprep.mubr.bf16.mxu0 0
        %470 = vmatmul.mubr.bf16.gmra.mxu0 %v435
        %v471 = vpop.f32.mrf.mxu0
        %v472 = vadd.f32 %v419, %v471
        %v473 = vpop.f32.mrf.mxu0
        %v474 = vpop.f32.mrf.mxu0
        %v475 = vpop.f32.mrf.mxu0
        %476 = vdwg.mxu0
        %v477 = vpack.c.bf16 %v472, %v472
        %479 = vrot.lane.b32.xlu0 %v477, 96
        %v480 = vpop.permute.xlu0 %479
        %vm481 = vcmask 64512
        %v483 = vsel %vm481, %v477, 0
        %v486 = vsel %vm481, %v480, 0
        %488 = vmatprep.subr.bf16.mxu0 0
        %489 = vmatpush1.bf16.xpose.msra.mxu0 0
        %490 = vmatprep.subr.bf16.mxu0 0
        %491 = vmatpush1.bf16.xpose.msra.mxu0 0
        %492 = vmatprep.subr.bf16.mxu0 0
        %493 = vmatpush1.bf16.xpose.msra.mxu0 0
        %494 = vmatprep.subr.bf16.mxu0 0
        %495 = vmatpush1.bf16.xpose.msra.mxu0 0
        %496 = vmatprep.subr.bf16.mxu0 0
        %497 = vmatpush1.bf16.xpose.msra.mxu0 0
        %498 = vmatprep.subr.bf16.mxu0 0
        %499 = vmatpush1.bf16.xpose.msra.mxu0 0
        %500 = vmatprep.subr.bf16.mxu0 0
        %501 = vmatpush1.bf16.xpose.msra.mxu0 0
        %502 = vmatprep.subr.bf16.mxu0 0
        %503 = vmatpush1.bf16.xpose.msra.mxu0 %v486
        %504 = vmatprep.subr.bf16.mxu0 0
        %505 = vmatpush2.bf16.xpose.msra.mxu0 0
        %506 = vmatprep.subr.bf16.mxu0 0
        %507 = vmatpush2.bf16.xpose.msra.mxu0 0
        %508 = vmatprep.subr.bf16.mxu0 0
        %509 = vmatpush2.bf16.xpose.msra.mxu0 0
        %510 = vmatprep.subr.bf16.mxu0 0
        %511 = vmatpush2.bf16.xpose.msra.mxu0 0
        %512 = vmatprep.subr.bf16.mxu0 0
        %513 = vmatpush2.bf16.xpose.msra.mxu0 0
        %514 = vmatprep.subr.bf16.mxu0 0
        %515 = vmatpush2.bf16.xpose.msra.mxu0 0
        %516 = vmatprep.subr.bf16.mxu0 0
        %517 = vmatpush2.bf16.xpose.msra.mxu0 0
        %518 = vmatprep.subr.bf16.mxu0 0
        %519 = vmatpush2.bf16.xpose.msra.mxu0 0
        %520 = vmatprep.mubr.bf16.mxu0 0
        %521 = vmatmul.mubr.bf16.gmra.mxu0 %v483
        %v522 = vpop.f32.mrf.mxu0
        %v523 = vadd.f32 0.0, %v522
        %v524 = vpop.f32.mrf.mxu0
        %v525 = vpop.f32.mrf.mxu0
        %v526 = vpop.f32.mrf.mxu0
        %527 = vdwg.mxu0
        %v528 = vsel %vm481, %v523, -inf
        %529 = vmax.xlane.f32.xlu0 %v528
        %v530 = vpop.xlane.xlu0 %529
        %v531 = vsub.f32 %v523, %v530
        %v532 = vmul.f32 %v531, 1.442695
        %v533 = vpow.pop %v532
        %v534 = vsel %vm481, %v533, 0.0
        %535 = vadd.xlane.f32.xlu0 %v534
        %v536 = vpop.xlane.xlu0 %535
        %v537 = vpack.c.bf16 %v533, %v533
        %538 = vrot.lane.b32.xlu0 %v477, 64
        %v539 = vpop.permute.xlu0 %538
        %v541 = vsel %vm481, %v537, 0
        %vm543 = vcmask 1043456
        %v545 = vsel %vm543, %v539, 0
        %547 = vmatprep.subr.bf16.mxu0 0
        %548 = vmatpush1.bf16.msra.mxu0 0
        %549 = vmatprep.subr.bf16.mxu0 0
        %550 = vmatpush1.bf16.msra.mxu0 0
        %551 = vmatprep.subr.bf16.mxu0 0
        %552 = vmatpush1.bf16.msra.mxu0 0
        %553 = vmatprep.subr.bf16.mxu0 0
        %554 = vmatpush1.bf16.msra.mxu0 0
        %555 = vmatprep.subr.bf16.mxu0 0
        %556 = vmatpush1.bf16.msra.mxu0 0
        %557 = vmatprep.subr.bf16.mxu0 0
        %558 = vmatpush1.bf16.msra.mxu0 0
        %559 = vmatprep.subr.bf16.mxu0 0
        %560 = vmatpush1.bf16.msra.mxu0 0
        %561 = vmatprep.subr.bf16.mxu0 0
        %562 = vmatpush1.bf16.msra.mxu0 %v545
        %563 = vmatprep.subr.bf16.mxu0 0
        %564 = vmatpush2.bf16.msra.mxu0 0
        %565 = vmatprep.subr.bf16.mxu0 0
        %566 = vmatpush2.bf16.msra.mxu0 0
        %567 = vmatprep.subr.bf16.mxu0 0
        %568 = vmatpush2.bf16.msra.mxu0 0
        %569 = vmatprep.subr.bf16.mxu0 0
        %570 = vmatpush2.bf16.msra.mxu0 0
        %571 = vmatprep.subr.bf16.mxu0 0
        %572 = vmatpush2.bf16.msra.mxu0 0
        %573 = vmatprep.subr.bf16.mxu0 0
        %574 = vmatpush2.bf16.msra.mxu0 0
        %575 = vmatprep.subr.bf16.mxu0 0
        %576 = vmatpush2.bf16.msra.mxu0 0
        %577 = vmatprep.subr.bf16.mxu0 0
        %578 = vmatpush2.bf16.msra.mxu0 0
        %579 = vmatprep.mubr.bf16.mxu0 0
        %580 = vmatmul.mubr.bf16.gmra.mxu0 %v541
        %v581 = vpop.f32.mrf.mxu0
        %v582 = vadd.f32 0.0, %v581
        %v583 = vpop.f32.mrf.mxu0
        %v584 = vpop.f32.mrf.mxu0
        %v585 = vpop.f32.mrf.mxu0
        %586 = vdwg.mxu0
        %v587 = vrcp.pop %v536
        %v588 = vmul.f32 %v582, %v587
        %v589 = vpack.c.bf16 %v588, %v588
        %590 = vrot.lane.b32.xlu0 %v477, 120
        %v591 = vpop.permute.xlu0 %590
        %592 = vrot.lane.b32.xlu0 %v477, 88
        %v593 = vpop.permute.xlu0 %592
        %v595 = vsel %vm481, %v591, 0
        %v598 = vsel %vm481, %v593, 0
        %600 = vmatprep.subr.bf16.mxu0 0
        %601 = vmatpush1.bf16.xpose.msra.mxu0 0
        %602 = vmatprep.subr.bf16.mxu0 0
        %603 = vmatpush1.bf16.xpose.msra.mxu0 0
        %604 = vmatprep.subr.bf16.mxu0 0
        %605 = vmatpush1.bf16.xpose.msra.mxu0 0
        %606 = vmatprep.subr.bf16.mxu0 0
        %607 = vmatpush1.bf16.xpose.msra.mxu0 0
        %608 = vmatprep.subr.bf16.mxu0 0
        %609 = vmatpush1.bf16.xpose.msra.mxu0 0
        %610 = vmatprep.subr.bf16.mxu0 0
        %611 = vmatpush1.bf16.xpose.msra.mxu0 0
        %612 = vmatprep.subr.bf16.mxu0 0
        %613 = vmatpush1.bf16.xpose.msra.mxu0 0
        %614 = vmatprep.subr.bf16.mxu0 0
        %615 = vmatpush1.bf16.xpose.msra.mxu0 %v598
        %616 = vmatprep.subr.bf16.mxu0 0
        %617 = vmatpush2.bf16.xpose.msra.mxu0 0
        %618 = vmatprep.subr.bf16.mxu0 0
        %619 = vmatpush2.bf16.xpose.msra.mxu0 0
        %620 = vmatprep.subr.bf16.mxu0 0
        %621 = vmatpush2.bf16.xpose.msra.mxu0 0
        %622 = vmatprep.subr.bf16.mxu0 0
        %623 = vmatpush2.bf16.xpose.msra.mxu0 0
        %624 = vmatprep.subr.bf16.mxu0 0
        %625 = vmatpush2.bf16.xpose.msra.mxu0 0
        %626 = vmatprep.subr.bf16.mxu0 0
        %627 = vmatpush2.bf16.xpose.msra.mxu0 0
        %628 = vmatprep.subr.bf16.mxu0 0
        %629 = vmatpush2.bf16.xpose.msra.mxu0 0
        %630 = vmatprep.subr.bf16.mxu0 0
        %631 = vmatpush2.bf16.xpose.msra.mxu0 0
        %632 = vmatprep.mubr.bf16.mxu0 0
        %633 = vmatmul.mubr.bf16.gmra.mxu0 %v595
        %v634 = vpop.f32.mrf.mxu0
        %v635 = vadd.f32 0.0, %v634
        %v636 = vpop.f32.mrf.mxu0
        %v637 = vpop.f32.mrf.mxu0
        %v638 = vpop.f32.mrf.mxu0
        %639 = vdwg.mxu0
        %v640 = vsel %vm481, %v635, -inf
        %641 = vmax.xlane.f32.xlu0 %v640
        %v642 = vpop.xlane.xlu0 %641
        %v643 = vsub.f32 %v635, %v642
        %v644 = vmul.f32 %v643, 1.442695
        %v645 = vpow.pop %v644
        %v646 = vsel %vm481, %v645, 0.0
        %647 = vadd.xlane.f32.xlu0 %v646
        %v648 = vpop.xlane.xlu0 %647
        %v649 = vpack.c.bf16 %v645, %v645
        %650 = vrot.lane.b32.xlu0 %v477, 56
        %v651 = vpop.permute.xlu0 %650
        %v653 = vsel %vm481, %v649, 0
        %v656 = vsel %vm543, %v651, 0
        %658 = vmatprep.subr.bf16.mxu0 0
        %659 = vmatpush1.bf16.msra.mxu0 0
        %660 = vmatprep.subr.bf16.mxu0 0
        %661 = vmatpush1.bf16.msra.mxu0 0
        %662 = vmatprep.subr.bf16.mxu0 0
        %663 = vmatpush1.bf16.msra.mxu0 0
        %664 = vmatprep.subr.bf16.mxu0 0
        %665 = vmatpush1.bf16.msra.mxu0 0
        %666 = vmatprep.subr.bf16.mxu0 0
        %667 = vmatpush1.bf16.msra.mxu0 0
        %668 = vmatprep.subr.bf16.mxu0 0
        %669 = vmatpush1.bf16.msra.mxu0 0
        %670 = vmatprep.subr.bf16.mxu0 0
        %671 = vmatpush1.bf16.msra.mxu0 0
        %672 = vmatprep.subr.bf16.mxu0 0
        %673 = vmatpush1.bf16.msra.mxu0 %v656
        %674 = vmatprep.subr.bf16.mxu0 0
        %675 = vmatpush2.bf16.msra.mxu0 0
        %676 = vmatprep.subr.bf16.mxu0 0
        %677 = vmatpush2.bf16.msra.mxu0 0
        %678 = vmatprep.subr.bf16.mxu0 0
        %679 = vmatpush2.bf16.msra.mxu0 0
        %680 = vmatprep.subr.bf16.mxu0 0
        %681 = vmatpush2.bf16.msra.mxu0 0
        %682 = vmatprep.subr.bf16.mxu0 0
        %683 = vmatpush2.bf16.msra.mxu0 0
        %684 = vmatprep.subr.bf16.mxu0 0
        %685 = vmatpush2.bf16.msra.mxu0 0
        %686 = vmatprep.subr.bf16.mxu0 0
        %687 = vmatpush2.bf16.msra.mxu0 0
        %688 = vmatprep.subr.bf16.mxu0 0
        %689 = vmatpush2.bf16.msra.mxu0 0
        %690 = vmatprep.mubr.bf16.mxu0 0
        %691 = vmatmul.mubr.bf16.gmra.mxu0 %v653
        %v692 = vpop.f32.mrf.mxu0
        %v693 = vadd.f32 0.0, %v692
        %v694 = vpop.f32.mrf.mxu0
        %v695 = vpop.f32.mrf.mxu0
        %v696 = vpop.f32.mrf.mxu0
        %697 = vdwg.mxu0
        %v698 = vrcp.pop %v648
        %v699 = vmul.f32 %v693, %v698
        %v700 = vpack.c.bf16 %v699, %v699
        %701 = vrot.lane.b32.xlu0 %v477, 112
        %v702 = vpop.permute.xlu0 %701
        %703 = vrot.lane.b32.xlu0 %v477, 80
        %v704 = vpop.permute.xlu0 %703
        %v706 = vsel %vm481, %v702, 0
        %v709 = vsel %vm481, %v704, 0
        %711 = vmatprep.subr.bf16.mxu0 0
        %712 = vmatpush1.bf16.xpose.msra.mxu0 0
        %713 = vmatprep.subr.bf16.mxu0 0
        %714 = vmatpush1.bf16.xpose.msra.mxu0 0
        %715 = vmatprep.subr.bf16.mxu0 0
        %716 = vmatpush1.bf16.xpose.msra.mxu0 0
        %717 = vmatprep.subr.bf16.mxu0 0
        %718 = vmatpush1.bf16.xpose.msra.mxu0 0
        %719 = vmatprep.subr.bf16.mxu0 0
        %720 = vmatpush1.bf16.xpose.msra.mxu0 0
        %721 = vmatprep.subr.bf16.mxu0 0
        %722 = vmatpush1.bf16.xpose.msra.mxu0 0
        %723 = vmatprep.subr.bf16.mxu0 0
        %724 = vmatpush1.bf16.xpose.msra.mxu0 0
        %725 = vmatprep.subr.bf16.mxu0 0
        %726 = vmatpush1.bf16.xpose.msra.mxu0 %v709
        %727 = vmatprep.subr.bf16.mxu0 0
        %728 = vmatpush2.bf16.xpose.msra.mxu0 0
        %729 = vmatprep.subr.bf16.mxu0 0
        %730 = vmatpush2.bf16.xpose.msra.mxu0 0
        %731 = vmatprep.subr.bf16.mxu0 0
        %732 = vmatpush2.bf16.xpose.msra.mxu0 0
        %733 = vmatprep.subr.bf16.mxu0 0
        %734 = vmatpush2.bf16.xpose.msra.mxu0 0
        %735 = vmatprep.subr.bf16.mxu0 0
        %736 = vmatpush2.bf16.xpose.msra.mxu0 0
        %737 = vmatprep.subr.bf16.mxu0 0
        %738 = vmatpush2.bf16.xpose.msra.mxu0 0
        %739 = vmatprep.subr.bf16.mxu0 0
        %740 = vmatpush2.bf16.xpose.msra.mxu0 0
        %741 = vmatprep.subr.bf16.mxu0 0
        %742 = vmatpush2.bf16.xpose.msra.mxu0 0
        %743 = vmatprep.mubr.bf16.mxu0 0
        %744 = vmatmul.mubr.bf16.gmra.mxu0 %v706
        %v745 = vpop.f32.mrf.mxu0
        %v746 = vadd.f32 0.0, %v745
        %v747 = vpop.f32.mrf.mxu0
        %v748 = vpop.f32.mrf.mxu0
        %v749 = vpop.f32.mrf.mxu0
        %750 = vdwg.mxu0
        %v751 = vsel %vm481, %v746, -inf
        %752 = vmax.xlane.f32.xlu0 %v751
        %v753 = vpop.xlane.xlu0 %752
        %v754 = vsub.f32 %v746, %v753
        %v755 = vmul.f32 %v754, 1.442695
        %v756 = vpow.pop %v755
        %v757 = vsel %vm481, %v756, 0.0
        %758 = vadd.xlane.f32.xlu0 %v757
        %v759 = vpop.xlane.xlu0 %758
        %v760 = vpack.c.bf16 %v756, %v756
        %761 = vrot.lane.b32.xlu0 %v477, 48
        %v762 = vpop.permute.xlu0 %761
        %v764 = vsel %vm481, %v760, 0
        %v767 = vsel %vm543, %v762, 0
        %769 = vmatprep.subr.bf16.mxu0 0
        %770 = vmatpush1.bf16.msra.mxu0 0
        %771 = vmatprep.subr.bf16.mxu0 0
        %772 = vmatpush1.bf16.msra.mxu0 0
        %773 = vmatprep.subr.bf16.mxu0 0
        %774 = vmatpush1.bf16.msra.mxu0 0
        %775 = vmatprep.subr.bf16.mxu0 0
        %776 = vmatpush1.bf16.msra.mxu0 0
        %777 = vmatprep.subr.bf16.mxu0 0
        %778 = vmatpush1.bf16.msra.mxu0 0
        %779 = vmatprep.subr.bf16.mxu0 0
        %780 = vmatpush1.bf16.msra.mxu0 0
        %781 = vmatprep.subr.bf16.mxu0 0
        %782 = vmatpush1.bf16.msra.mxu0 0
        %783 = vmatprep.subr.bf16.mxu0 0
        %784 = vmatpush1.bf16.msra.mxu0 %v767
        %785 = vmatprep.subr.bf16.mxu0 0
        %786 = vmatpush2.bf16.msra.mxu0 0
        %787 = vmatprep.subr.bf16.mxu0 0
        %788 = vmatpush2.bf16.msra.mxu0 0
        %789 = vmatprep.subr.bf16.mxu0 0
        %790 = vmatpush2.bf16.msra.mxu0 0
        %791 = vmatprep.subr.bf16.mxu0 0
        %792 = vmatpush2.bf16.msra.mxu0 0
        %793 = vmatprep.subr.bf16.mxu0 0
        %794 = vmatpush2.bf16.msra.mxu0 0
        %795 = vmatprep.subr.bf16.mxu0 0
        %796 = vmatpush2.bf16.msra.mxu0 0
        %797 = vmatprep.subr.bf16.mxu0 0
        %798 = vmatpush2.bf16.msra.mxu0 0
        %799 = vmatprep.subr.bf16.mxu0 0
        %800 = vmatpush2.bf16.msra.mxu0 0
        %801 = vmatprep.mubr.bf16.mxu0 0
        %802 = vmatmul.mubr.bf16.gmra.mxu0 %v764
        %v803 = vpop.f32.mrf.mxu0
        %v804 = vadd.f32 0.0, %v803
        %v805 = vpop.f32.mrf.mxu0
        %v806 = vpop.f32.mrf.mxu0
        %v807 = vpop.f32.mrf.mxu0
        %808 = vdwg.mxu0
        %v809 = vrcp.pop %v759
        %v810 = vmul.f32 %v804, %v809
        %v811 = vpack.c.bf16 %v810, %v810
        %812 = vrot.lane.b32.xlu0 %v477, 104
        %v813 = vpop.permute.xlu0 %812
        %814 = vrot.lane.b32.xlu0 %v477, 72
        %v815 = vpop.permute.xlu0 %814
        %v817 = vsel %vm481, %v813, 0
        %v820 = vsel %vm481, %v815, 0
        %822 = vmatprep.subr.bf16.mxu0 0
        %823 = vmatpush1.bf16.xpose.msra.mxu0 0
        %824 = vmatprep.subr.bf16.mxu0 0
        %825 = vmatpush1.bf16.xpose.msra.mxu0 0
        %826 = vmatprep.subr.bf16.mxu0 0
        %827 = vmatpush1.bf16.xpose.msra.mxu0 0
        %828 = vmatprep.subr.bf16.mxu0 0
        %829 = vmatpush1.bf16.xpose.msra.mxu0 0
        %830 = vmatprep.subr.bf16.mxu0 0
        %831 = vmatpush1.bf16.xpose.msra.mxu0 0
        %832 = vmatprep.subr.bf16.mxu0 0
        %833 = vmatpush1.bf16.xpose.msra.mxu0 0
        %834 = vmatprep.subr.bf16.mxu0 0
        %835 = vmatpush1.bf16.xpose.msra.mxu0 0
        %836 = vmatprep.subr.bf16.mxu0 0
        %837 = vmatpush1.bf16.xpose.msra.mxu0 %v820
        %838 = vmatprep.subr.bf16.mxu0 0
        %839 = vmatpush2.bf16.xpose.msra.mxu0 0
        %840 = vmatprep.subr.bf16.mxu0 0
        %841 = vmatpush2.bf16.xpose.msra.mxu0 0
        %842 = vmatprep.subr.bf16.mxu0 0
        %843 = vmatpush2.bf16.xpose.msra.mxu0 0
        %844 = vmatprep.subr.bf16.mxu0 0
        %845 = vmatpush2.bf16.xpose.msra.mxu0 0
        %846 = vmatprep.subr.bf16.mxu0 0
        %847 = vmatpush2.bf16.xpose.msra.mxu0 0
        %848 = vmatprep.subr.bf16.mxu0 0
        %849 = vmatpush2.bf16.xpose.msra.mxu0 0
        %850 = vmatprep.subr.bf16.mxu0 0
        %851 = vmatpush2.bf16.xpose.msra.mxu0 0
        %852 = vmatprep.subr.bf16.mxu0 0
        %853 = vmatpush2.bf16.xpose.msra.mxu0 0
        %854 = vmatprep.mubr.bf16.mxu0 0
        %855 = vmatmul.mubr.bf16.gmra.mxu0 %v817
        %v856 = vpop.f32.mrf.mxu0
        %v857 = vadd.f32 0.0, %v856
        %v858 = vpop.f32.mrf.mxu0
        %v859 = vpop.f32.mrf.mxu0
        %v860 = vpop.f32.mrf.mxu0
        %861 = vdwg.mxu0
        %v862 = vsel %vm481, %v857, -inf
        %863 = vmax.xlane.f32.xlu0 %v862
        %v864 = vpop.xlane.xlu0 %863
        %v865 = vsub.f32 %v857, %v864
        %v866 = vmul.f32 %v865, 1.442695
        %v867 = vpow.pop %v866
        %v868 = vsel %vm481, %v867, 0.0
        %869 = vadd.xlane.f32.xlu0 %v868
        %v870 = vpop.xlane.xlu0 %869
        %v871 = vpack.c.bf16 %v867, %v867
        %872 = vrot.lane.b32.xlu0 %v477, 40
        %v873 = vpop.permute.xlu0 %872
        %v875 = vsel %vm481, %v871, 0
        %v878 = vsel %vm543, %v873, 0
        %880 = vmatprep.subr.bf16.mxu0 0
        %881 = vmatpush1.bf16.msra.mxu0 0
        %882 = vmatprep.subr.bf16.mxu0 0
        %883 = vmatpush1.bf16.msra.mxu0 0
        %884 = vmatprep.subr.bf16.mxu0 0
        %885 = vmatpush1.bf16.msra.mxu0 0
        %886 = vmatprep.subr.bf16.mxu0 0
        %887 = vmatpush1.bf16.msra.mxu0 0
        %888 = vmatprep.subr.bf16.mxu0 0
        %889 = vmatpush1.bf16.msra.mxu0 0
        %890 = vmatprep.subr.bf16.mxu0 0
        %891 = vmatpush1.bf16.msra.mxu0 0
        %892 = vmatprep.subr.bf16.mxu0 0
        %893 = vmatpush1.bf16.msra.mxu0 0
        %894 = vmatprep.subr.bf16.mxu0 0
        %895 = vmatpush1.bf16.msra.mxu0 %v878
        %896 = vmatprep.subr.bf16.mxu0 0
        %897 = vmatpush2.bf16.msra.mxu0 0
        %898 = vmatprep.subr.bf16.mxu0 0
        %899 = vmatpush2.bf16.msra.mxu0 0
        %900 = vmatprep.subr.bf16.mxu0 0
        %901 = vmatpush2.bf16.msra.mxu0 0
        %902 = vmatprep.subr.bf16.mxu0 0
        %903 = vmatpush2.bf16.msra.mxu0 0
        %904 = vmatprep.subr.bf16.mxu0 0
        %905 = vmatpush2.bf16.msra.mxu0 0
        %906 = vmatprep.subr.bf16.mxu0 0
        %907 = vmatpush2.bf16.msra.mxu0 0
        %908 = vmatprep.subr.bf16.mxu0 0
        %909 = vmatpush2.bf16.msra.mxu0 0
        %910 = vmatprep.subr.bf16.mxu0 0
        %911 = vmatpush2.bf16.msra.mxu0 0
        %912 = vmatprep.mubr.bf16.mxu0 0
        %913 = vmatmul.mubr.bf16.gmra.mxu0 %v875
        %v914 = vpop.f32.mrf.mxu0
        %v915 = vadd.f32 0.0, %v914
        %v916 = vpop.f32.mrf.mxu0
        %v917 = vpop.f32.mrf.mxu0
        %v918 = vpop.f32.mrf.mxu0
        %919 = vdwg.mxu0
        %v920 = vrcp.pop %v870
        %v921 = vmul.f32 %v915, %v920
        %v922 = vpack.c.bf16 %v921, %v921
        %924 = vrot.lane.b32.xlu0 %v700, 8
        %v925 = vpop.permute.xlu0 %924
        %927 = vrot.lane.b32.xlu0 %v811, 16
        %v928 = vpop.permute.xlu0 %927
        %930 = vrot.lane.b32.xlu0 %v922, 24
        %v931 = vpop.permute.xlu0 %930
        %v934 = vsel %vm481, %v589, %v925
        %vm935 = vcmask 130048
        %v937 = vsel %vm935, %v934, %v928
        %vm938 = vcmask 195584
        %v940 = vsel %vm938, %v937, %v931
        %v941 = vld [vmem:[#allocation3] sm:$0xff]
        %v942 = vld [vmem:[#allocation8] sm:$0xf]
        %v943 = vld [vmem:[#allocation8 + $0x4] sm:$0xf]
        %v944 = vld [vmem:[#allocation8 + $0x8] sm:$0xf]
        %v945 = vld [vmem:[#allocation8 + $0xc] sm:$0xf]
        %v950 = vunpack.c.l.b16 %v942
        %v951 = vunpack.c.l.b16 %v943
        %v952 = vunpack.c.l.b16 %v944
        %v953 = vunpack.c.l.b16 %v945
        %v954 = vpack.c.b16 %v951, %v950
        %v955 = vpack.c.b16 %v953, %v952
        %v958 = vsel %vm433, %v940, 0
        %960 = vmatprep.subr.bf16.mxu0 0
        %961 = vmatpush1.bf16.msra.mxu0 0
        %962 = vmatprep.subr.bf16.mxu0 0
        %963 = vmatpush1.bf16.msra.mxu0 0
        %964 = vmatprep.subr.bf16.mxu0 0
        %965 = vmatpush1.bf16.msra.mxu0 0
        %966 = vmatprep.subr.bf16.mxu0 0
        %967 = vmatpush1.bf16.msra.mxu0 0
        %968 = vmatprep.subr.bf16.mxu0 0
        %969 = vmatpush1.bf16.msra.mxu0 0
        %970 = vmatprep.subr.bf16.mxu0 0
        %971 = vmatpush1.bf16.msra.mxu0 0
        %972 = vmatprep.subr.bf16.mxu0 0
        %973 = vmatpush1.bf16.msra.mxu0 %v955
        %974 = vmatprep.subr.bf16.mxu0 0
        %975 = vmatpush1.bf16.msra.mxu0 %v954
        %976 = vmatprep.subr.bf16.mxu0 0
        %977 = vmatpush2.bf16.msra.mxu0 0
        %978 = vmatprep.subr.bf16.mxu0 0
        %979 = vmatpush2.bf16.msra.mxu0 0
        %980 = vmatprep.subr.bf16.mxu0 0
        %981 = vmatpush2.bf16.msra.mxu0 0
        %982 = vmatprep.subr.bf16.mxu0 0
        %983 = vmatpush2.bf16.msra.mxu0 0
        %984 = vmatprep.subr.bf16.mxu0 0
        %985 = vmatpush2.bf16.msra.mxu0 0
        %986 = vmatprep.subr.bf16.mxu0 0
        %987 = vmatpush2.bf16.msra.mxu0 0
        %988 = vmatprep.subr.bf16.mxu0 0
        %989 = vmatpush2.bf16.msra.mxu0 0
        %990 = vmatprep.subr.bf16.mxu0 0
        %991 = vmatpush2.bf16.msra.mxu0 0
        %992 = vmatprep.mubr.bf16.mxu0 0
        %993 = vmatmul.mubr.bf16.gmra.mxu0 %v958
        %v994 = vpop.f32.mrf.mxu0
        %v995 = vadd.f32 0.0, %v994
        %v996 = vpop.f32.mrf.mxu0
        %v997 = vpop.f32.mrf.mxu0
        %v998 = vpop.f32.mrf.mxu0
        %999 = vdwg.mxu0
        %v1000 = vadd.f32 %v941, %v995
        %1001 = vst.msk [vmem:[#allocation3] sm:$0xff] %vm433, %v1000
        // Predicated region
        $region65: #{transformer_forward.4} parent=47 // pred_check
          %p1002 = pneg %p369
        $region66: #{transformer_forward.4} parent=47 // pred_check_branch
          %1004 = sbr.rel (%p1002) target = $region68
        $region67: #{transformer_forward.4} parent=47 // pred_region
          %v1005 = vld [vmem:[%s316] sm:$0xff]
          %v1006 = vld [vmem:[#allocation3] sm:$0xff]
          %v1007 = vadd.f32 %v1005, %v1006
          %v1008 = vld [vmem:[%s6] sm:$0x1]
          %v1010 = vlaneseq
          %v1011 = vshrl.u32 %v1010, 7
          %v1012 = vsub.s32 0, %v1011
          %v1013 = vrot.slane %v1008, %v1012
          %v1015 = vadd.f32 %v1007, %v1013
          %1016 = vst.msk [vmem:[%s367] sm:$0xff] %vm433, %v1015
        $region68: #{transformer_forward.4} parent=47 // pred_fallthru
          _
        %p1017 = scmp.lt.s32.totalorder %s26, 1
        %s1018 = scalar_select %p1017, %s26, 1
        %s1019 = smul.addr %s1018, 8
        %s1020 = scalar_lea.vmem %s7, %s1019
        // Predicated region
        $region69: #{transformer_forward.4} parent=47 // pred_check
          %p1021 = pneg %p219
        $region70: #{transformer_forward.4} parent=47 // pred_check_branch
          %1023 = sbr.rel (%p1021) target = $region72
        $region71: #{transformer_forward.4} parent=47 // pred_region
          _
        $region72: #{transformer_forward.4} parent=47 // pred_fallthru
          _
      $region48: #{transformer_forward.4} parent=5 // pred_fallthru
        _
      %p1024 = scmp.le.s32.totalorder 2, %s17
      // Predicated region
      $region73: #{transformer_forward.4} parent=5 // pred_check
        %p1025 = pneg %p1024
      $region74: #{transformer_forward.4} parent=5 // pred_check_branch
        %1027 = sbr.rel (%p1025) target = $region76
      $region75: #{transformer_forward.4} parent=5 // pred_region
        %s1028 = ssub.s32 %s17, 2
        // Predicated region
        $region77: #{transformer_forward.4} parent=75 // pred_check
          %p1029 = pneg %p225
        $region78: #{transformer_forward.4} parent=75 // pred_check_branch
          %1031 = sbr.rel (%p1029) target = $region80
        $region79: #{transformer_forward.4} parent=75 // pred_region
          %p1032 = scmp.lt.s32.totalorder %s28, 1
          %s1033 = scalar_select %p1032, %s28, 1
          %s1034 = smul.addr %s1033, 8
          %s1035 = scalar_lea.vmem %s7, %s1034
        $region80: #{transformer_forward.4} parent=75 // pred_fallthru
          _
      $region76: #{transformer_forward.4} parent=5 // pred_fallthru
        _
    $region6: #{transformer_forward.4} parent=1 // loop_footer
      %s21 = sadd.s32 1, %s17
    $region7: #{transformer_forward.4} parent=1 // loop_footer_branch
      %16 = sbr.rel target = $region3
    $region8: #{transformer_forward.4} parent=1 // loop_exit
      _
    %1036 = vsyncpa [#allocation5], 1
    %s1037 = scalar_lea.sflag [#allocation5], 1
    %1038 = vsyncpa %s1037, 1
    %1039 = vsyncpa [#allocation7], 1

// kernel: transformer_forward.7
$region0: #{transformer_forward.7}
  #allocation0 [shape = 'u32[]', space=smem, size = 0x4, offset = 0x4, fixed_abs, tag = 'smem constant byte address 0x4 - core index']
  #allocation1 [shape = 'u32[144,128]{1,0:T(1,128)}', space=vmem, size = 0x12000, scoped, tag = 'internal scratch']
  #allocation2 [shape = 'bf16[16,32]{1,0:T(8,128)(2,1)}', space=vmem, size = 0x1000, scoped, tag = 'scratch operand']
  #allocation3 [shape = 'f32[16,32]{1,0:T(8,128)}', space=vmem, size = 0x2000, scoped, tag = 'scratch operand']
  %s0 = inlined_call_operand.vmem [shape: f32[16,32], index: 0, kind: input, shape index: {}]
  %s1 = inlined_call_operand.vmem [shape: f32[1,32], index: 1, kind: input, shape index: {}]
  %s2 = inlined_call_operand.vmem [shape: f32[1,32], index: 2, kind: input, shape index: {}]
  %s3 = inlined_call_operand.vmem [shape: bf16[32,128], index: 3, kind: input, shape index: {}]
  %s4 = inlined_call_operand.vmem [shape: f32[1,128], index: 4, kind: input, shape index: {}]
  %s5 = inlined_call_operand.vmem [shape: bf16[128,32], index: 5, kind: input, shape index: {}]
  %s6 = inlined_call_operand.vmem [shape: f32[1,32], index: 6, kind: input, shape index: {}]
  %s7 = inlined_call_operand.hbm [shape: f32[16,32], index: 7, kind: output, shape index: {}]
  %s8 = sld [smem:[#allocation0]]
  $region46: #{transformer_forward.7} parent=0
    _
  %s10 = ssub.s32 1, %s8
  %s11 = scalar_select 0, %s10, %s8
  $region1: #{transformer_forward.7} parent=0
    #allocation4 [shape = 'u8[8192]{0}', space=vmem, size = 0x2000, scoped, tag = 'output window, operand 0, single buffered']
    #allocation5 [shape = 's32[1]{0}', space=sflag, size = 0x4, scoped, tag = 'scoped memory for transformer_forward.7']
    %12 = vsyncpa [#allocation5], 0
    // Predicated region
    $region2: #{transformer_forward.7} parent=1 // pred_check
      _
    $region3: #{transformer_forward.7} parent=1 // pred_check_branch
      %14 = sbr.rel (0) target = $region5
    $region4: #{transformer_forward.7} parent=1 // pred_region
      _
    $region5: #{transformer_forward.7} parent=1 // pred_fallthru
      _
    // Predicated region
    $region6: #{transformer_forward.7} parent=1 // pred_check
      _
    $region7: #{transformer_forward.7} parent=1 // pred_check_branch
      %16 = sbr.rel (0) target = $region9
    $region8: #{transformer_forward.7} parent=1 // pred_region
      _
    $region9: #{transformer_forward.7} parent=1 // pred_fallthru
      _
    // Predicated region
    $region10: #{transformer_forward.7} parent=1 // pred_check
      _
    $region11: #{transformer_forward.7} parent=1 // pred_check_branch
      %18 = sbr.rel (0) target = $region13
    $region12: #{transformer_forward.7} parent=1 // pred_region
      _
    $region13: #{transformer_forward.7} parent=1 // pred_fallthru
      _
    // Predicated region
    $region14: #{transformer_forward.7} parent=1 // pred_check
      _
    $region15: #{transformer_forward.7} parent=1 // pred_check_branch
      %20 = sbr.rel (0) target = $region17
    $region16: #{transformer_forward.7} parent=1 // pred_region
      _
    $region17: #{transformer_forward.7} parent=1 // pred_fallthru
      _
    // Predicated region
    $region18: #{transformer_forward.7} parent=1 // pred_check
      _
    $region19: #{transformer_forward.7} parent=1 // pred_check_branch
      %22 = sbr.rel (0) target = $region21
    $region20: #{transformer_forward.7} parent=1 // pred_region
      _
    $region21: #{transformer_forward.7} parent=1 // pred_fallthru
      _
    // Predicated region
    $region22: #{transformer_forward.7} parent=1 // pred_check
      _
    $region23: #{transformer_forward.7} parent=1 // pred_check_branch
      %24 = sbr.rel (0) target = $region25
    $region24: #{transformer_forward.7} parent=1 // pred_region
      _
    $region25: #{transformer_forward.7} parent=1 // pred_fallthru
      _
    // Predicated region
    $region26: #{transformer_forward.7} parent=1 // pred_check
      _
    $region27: #{transformer_forward.7} parent=1 // pred_check_branch
      %26 = sbr.rel (0) target = $region29
    $region28: #{transformer_forward.7} parent=1 // pred_region
      _
    $region29: #{transformer_forward.7} parent=1 // pred_fallthru
      _
    %p28 = scmp.eq.s32.totalorder 0, 0
    // Predicated region
    $region30: #{transformer_forward.7} parent=1 // pred_check
      %p29 = pneg %p28
    $region31: #{transformer_forward.7} parent=1 // pred_check_branch
      %31 = sbr.rel (%p29) target = $region33
    $region32: #{transformer_forward.7} parent=1 // pred_region
      %v32 = vld [vmem:[%s0] sm:$0xff]
      %v33 = vld [vmem:[%s0 + $0x8] sm:$0xff]
      %v34 = vld [vmem:[%s1] sm:$0x1]
      %v35 = vld [vmem:[%s2] sm:$0x1]
      %vm36 = vcmask 261120
      %v37 = vsel %vm36, %v32, 0.0
      %38 = vadd.xlane.f32.xlu0 %v37
      %v39 = vpop.xlane.xlu0 %38
      %v40 = vsel %vm36, %v33, 0.0
      %41 = vadd.xlane.f32.xlu0 %v40
      %v42 = vpop.xlane.xlu0 %41
      %v43 = vrcp.pop 32.0
      %v44 = vmul.f32 %v39, %v43
      %v45 = vmul.f32 %v42, %v43
      %v46 = vsub.f32 %v32, %v44
      %v47 = vsub.f32 %v33, %v45
      %v48 = vmul.f32 %v46, %v46
      %v49 = vmul.f32 %v47, %v47
      %v50 = vsel %vm36, %v48, 0.0
      %51 = vadd.xlane.f32.xlu0 %v50
      %v52 = vpop.xlane.xlu0 %51
      %v53 = vsel %vm36, %v49, 0.0
      %54 = vadd.xlane.f32.xlu0 %v53
      %v55 = vpop.xlane.xlu0 %54
      %v56 = vmul.f32 %v52, %v43
      %v57 = vmul.f32 %v55, %v43
      %v58 = vadd.f32 %v56, 1e-05
      %v59 = vadd.f32 %v57, 1e-05
      %v60 = vrsqrt.pop %v58
      %v61 = vrsqrt.pop %v59
      %v62 = vmul.f32 %v46, %v60
      %v63 = vmul.f32 %v47, %v61
      %v65 = vlaneseq
      %v66 = vshrl.u32 %v65, 7
      %v67 = vsub.s32 0, %v66
      %v68 = vrot.slane %v34, %v67
      %v70 = vmul.f32 %v62, %v68
      %v71 = vmul.f32 %v63, %v68
      %v73 = vlaneseq
      %v74 = vshrl.u32 %v73, 7
      %v75 = vsub.s32 0, %v74
      %v76 = vrot.slane %v35, %v75
      %v78 = vadd.f32 %v70, %v76
      %v79 = vadd.f32 %v71, %v76
      %v80 = vpack.c.bf16 %v79, %v78
      %v82 = vunpack.c.l.b16 %v80
      %v83 = vunpack.c.h.b16 %v80
      %v84 = vpack.c.b16 %v82, %v82
      %v85 = vpack.c.b16 %v83, %v83
      %vm88 = vcmask 257024
      %89 = vst.msk [vmem:[#allocation2] sm:$0xf] %vm88, %v84
      %90 = vst.msk [vmem:[#allocation2 + $0x4] sm:$0xf] %vm88, %v85
      %91 = vst.msk [vmem:[#allocation3] sm:$0xff] %vm36, 0.0
      %92 = vst.msk [vmem:[#allocation3 + $0x8] sm:$0xff] %vm36, 0.0
    $region33: #{transformer_forward.7} parent=1 // pred_fallthru
      _
    %v93 = vld [vmem:[#allocation2] sm:$0xf]
    %v94 = vld [vmem:[#allocation2 + $0x4] sm:$0xf]
    %v95 = vld [vmem:[%s3] sm:$0xf]
    %v96 = vld [vmem:[%s3 + $0x4] sm:$0xf]
    %v97 = vld [vmem:[%s3 + $0x8] sm:$0xf]
    %v98 = vld [vmem:[%s3 + $0xc] sm:$0xf]
    %v99 = vld [vmem:[%s4] sm:$0x1]
    %v101 = vlaneseq
    %v102 = vshrl.u32 %v101, 7
    %v103 = vsub.s32 0, %v102
    %v104 = vrot.slane %v99, %v103
    %v108 = vunpack.c.l.b16 %v93
    %v109 = vunpack.c.l.b16 %v94
    %v110 = vpack.c.b16 %v109, %v108
    %v115 = vunpack.c.l.b16 %v95
    %v116 = vunpack.c.l.b16 %v96
    %v117 = vunpack.c.l.b16 %v97
    %v118 = vunpack.c.l.b16 %v98
    %v119 = vpack.c.b16 %v116, %v115
    %v120 = vpack.c.b16 %v118, %v117
    %vm123 = vcmask 261120
    %v125 = vsel %vm123, %v110, 0
    %127 = vmatprep.subr.bf16.mxu0 0
    %128 = vmatpush1.bf16.msra.mxu0 0
    %129 = vmatprep.subr.bf16.mxu0 0
    %130 = vmatpush1.bf16.msra.mxu0 0
    %131 = vmatprep.subr.bf16.mxu0 0
    %132 = vmatpush1.bf16.msra.mxu0 0
    %133 = vmatprep.subr.bf16.mxu0 0
    %134 = vmatpush1.bf16.msra.mxu0 0
    %135 = vmatprep.subr.bf16.mxu0 0
    %136 = vmatpush1.bf16.msra.mxu0 0
    %137 = vmatprep.subr.bf16.mxu0 0
    %138 = vmatpush1.bf16.msra.mxu0 0
    %139 = vmatprep.subr.bf16.mxu0 0
    %140 = vmatpush1.bf16.msra.mxu0 %v120
    %141 = vmatprep.subr.bf16.mxu0 0
    %142 = vmatpush1.bf16.msra.mxu0 %v119
    %143 = vmatprep.subr.bf16.mxu0 0
    %144 = vmatpush2.bf16.msra.mxu0 0
    %145 = vmatprep.subr.bf16.mxu0 0
    %146 = vmatpush2.bf16.msra.mxu0 0
    %147 = vmatprep.subr.bf16.mxu0 0
    %148 = vmatpush2.bf16.msra.mxu0 0
    %149 = vmatprep.subr.bf16.mxu0 0
    %150 = vmatpush2.bf16.msra.mxu0 0
    %151 = vmatprep.subr.bf16.mxu0 0
    %152 = vmatpush2.bf16.msra.mxu0 0
    %153 = vmatprep.subr.bf16.mxu0 0
    %154 = vmatpush2.bf16.msra.mxu0 0
    %155 = vmatprep.subr.bf16.mxu0 0
    %156 = vmatpush2.bf16.msra.mxu0 0
    %157 = vmatprep.subr.bf16.mxu0 0
    %158 = vmatpush2.bf16.msra.mxu0 0
    %159 = vmatprep.mubr.bf16.mxu0 0
    %160 = vmatmul.mubr.bf16.gmra.mxu0 %v125
    %v161 = vpop.f32.mrf.mxu0
    %v162 = vadd.f32 %v104, %v161
    %v163 = vpop.f32.mrf.mxu0
    %v164 = vpop.f32.mrf.mxu0
    %v165 = vadd.f32 %v104, %v164
    %v166 = vpop.f32.mrf.mxu0
    %167 = vdwg.mxu0
    %v168 = vmul.f32 %v162, 0.5
    %v169 = vmul.f32 %v165, 0.5
    %v170 = vmul.f32 %v162, 0.70710677
    %v171 = vmul.f32 %v165, 0.70710677
    %v172 = verf.f32.pop %v170
    %v173 = verf.f32.pop %v171
    %v174 = vadd.f32 %v172, 1.0
    %v175 = vadd.f32 %v173, 1.0
    %v176 = vmul.f32 %v168, %v174
    %v177 = vmul.f32 %v169, %v175
    %v178 = vld [vmem:[#allocation3] sm:$0xff]
    %v179 = vld [vmem:[#allocation3 + $0x8] sm:$0xff]
    %v180 = vpack.c.bf16 %v177, %v176
    %v181 = vld [vmem:[%s5] sm:$0xf]
    %v182 = vld [vmem:[%s5 + $0x4] sm:$0xf]
    %v183 = vld [vmem:[%s5 + $0x8] sm:$0xf]
    %v184 = vld [vmem:[%s5 + $0xc] sm:$0xf]
    %v185 = vld [vmem:[%s5 + $0x10] sm:$0xf]
    %v186 = vld [vmem:[%s5 + $0x14] sm:$0xf]
    %v187 = vld [vmem:[%s5 + $0x18] sm:$0xf]
    %v188 = vld [vmem:[%s5 + $0x1c] sm:$0xf]
    %v189 = vld [vmem:[%s5 + $0x20] sm:$0xf]
    %v190 = vld [vmem:[%s5 + $0x24] sm:$0xf]
    %v191 = vld [vmem:[%s5 + $0x28] sm:$0xf]
    %v192 = vld [vmem:[%s5 + $0x2c] sm:$0xf]
    %v193 = vld [vmem:[%s5 + $0x30] sm:$0xf]
    %v194 = vld [vmem:[%s5 + $0x34] sm:$0xf]
    %v195 = vld [vmem:[%s5 + $0x38] sm:$0xf]
    %v196 = vld [vmem:[%s5 + $0x3c] sm:$0xf]
    %v213 = vunpack.c.l.b16 %v181
    %v214 = vunpack.c.l.b16 %v182
    %v215 = vunpack.c.l.b16 %v183
    %v216 = vunpack.c.l.b16 %v184
    %v217 = vunpack.c.l.b16 %v185
    %v218 = vunpack.c.l.b16 %v186
    %v219 = vunpack.c.l.b16 %v187
    %v220 = vunpack.c.l.b16 %v188
    %v221 = vunpack.c.l.b16 %v189
    %v222 = vunpack.c.l.b16 %v190
    %v223 = vunpack.c.l.b16 %v191
    %v224 = vunpack.c.l.b16 %v192
    %v225 = vunpack.c.l.b16 %v193
    %v226 = vunpack.c.l.b16 %v194
    %v227 = vunpack.c.l.b16 %v195
    %v228 = vunpack.c.l.b16 %v196
    %v229 = vpack.c.b16 %v214, %v213
    %v230 = vpack.c.b16 %v216, %v215
    %v231 = vpack.c.b16 %v218, %v217
    %v232 = vpack.c.b16 %v220, %v219
    %v233 = vpack.c.b16 %v222, %v221
    %v234 = vpack.c.b16 %v224, %v223
    %v235 = vpack.c.b16 %v226, %v225
    %v236 = vpack.c.b16 %v228, %v227
    %245 = vmatprep.subr.bf16.mxu0 0
    %246 = vmatpush1.bf16.msra.mxu0 %v236
    %247 = vmatprep.subr.bf16.mxu0 0
    %248 = vmatpush1.bf16.msra.mxu0 %v235
    %249 = vmatprep.subr.bf16.mxu0 0
    %250 = vmatpush1.bf16.msra.mxu0 %v234
    %251 = vmatprep.subr.bf16.mxu0 0
    %252 = vmatpush1.bf16.msra.mxu0 %v233
    %253 = vmatprep.subr.bf16.mxu0 0
    %254 = vmatpush1.bf16.msra.mxu0 %v232
    %255 = vmatprep.subr.bf16.mxu0 0
    %256 = vmatpush1.bf16.msra.mxu0 %v231
    %257 = vmatprep.subr.bf16.mxu0 0
    %258 = vmatpush1.bf16.msra.mxu0 %v230
    %259 = vmatprep.subr.bf16.mxu0 0
    %260 = vmatpush1.bf16.msra.mxu0 %v229
    %261 = vmatprep.subr.bf16.mxu0 0
    %262 = vmatpush2.bf16.msra.mxu0 0
    %263 = vmatprep.subr.bf16.mxu0 0
    %264 = vmatpush2.bf16.msra.mxu0 0
    %265 = vmatprep.subr.bf16.mxu0 0
    %266 = vmatpush2.bf16.msra.mxu0 0
    %267 = vmatprep.subr.bf16.mxu0 0
    %268 = vmatpush2.bf16.msra.mxu0 0
    %269 = vmatprep.subr.bf16.mxu0 0
    %270 = vmatpush2.bf16.msra.mxu0 0
    %271 = vmatprep.subr.bf16.mxu0 0
    %272 = vmatpush2.bf16.msra.mxu0 0
    %273 = vmatprep.subr.bf16.mxu0 0
    %274 = vmatpush2.bf16.msra.mxu0 0
    %275 = vmatprep.subr.bf16.mxu0 0
    %276 = vmatpush2.bf16.msra.mxu0 0
    %277 = vmatprep.mubr.bf16.mxu0 0
    %278 = vmatmul.mubr.bf16.gmra.mxu0 %v180
    %v279 = vpop.f32.mrf.mxu0
    %v280 = vadd.f32 0.0, %v279
    %v281 = vpop.f32.mrf.mxu0
    %v282 = vpop.f32.mrf.mxu0
    %v283 = vadd.f32 0.0, %v282
    %v284 = vpop.f32.mrf.mxu0
    %285 = vdwg.mxu0
    %v286 = vadd.f32 %v178, %v280
    %v287 = vadd.f32 %v179, %v283
    %288 = vst.msk [vmem:[#allocation3] sm:$0xff] %vm123, %v286
    %289 = vst.msk [vmem:[#allocation3 + $0x8] sm:$0xff] %vm123, %v287
    // Predicated region
    $region34: #{transformer_forward.7} parent=1 // pred_check
      %p290 = pneg %p28
    $region35: #{transformer_forward.7} parent=1 // pred_check_branch
      %292 = sbr.rel (%p290) target = $region37
    $region36: #{transformer_forward.7} parent=1 // pred_region
      %v293 = vld [vmem:[#allocation3] sm:$0xff]
      %v294 = vld [vmem:[#allocation3 + $0x8] sm:$0xff]
      %v295 = vld [vmem:[%s6] sm:$0x1]
      %v297 = vlaneseq
      %v298 = vshrl.u32 %v297, 7
      %v299 = vsub.s32 0, %v298
      %v300 = vrot.slane %v295, %v299
      %v302 = vadd.f32 %v293, %v300
      %v303 = vadd.f32 %v294, %v300
      %v304 = vld [vmem:[%s0] sm:$0xff]
      %v305 = vld [vmem:[%s0 + $0x8] sm:$0xff]
      %v306 = vadd.f32 %v302, %v304
      %v307 = vadd.f32 %v303, %v305
      %308 = vst.msk [vmem:[#allocation4] sm:$0xff] %vm123, %v306
      %309 = vst.msk [vmem:[#allocation4 + $0x8] sm:$0xff] %vm123, %v307
    $region37: #{transformer_forward.7} parent=1 // pred_fallthru
      _
    // Predicated region
    $region38: #{transformer_forward.7} parent=1 // pred_check
      _
    $region39: #{transformer_forward.7} parent=1 // pred_check_branch
      %311 = sbr.rel (0) target = $region41
    $region40: #{transformer_forward.7} parent=1 // pred_region
      %s313 = ssub.s32 256, 256
      %314 = vsyncadd [#allocation5], %s313
      %s315 = sshll.u32 [#allocation4], 4
      %s316 = int_to_ptr.vmem [resolvable:$true] %s315
      %321 = dma.vmem_to_hbm [thread:$0]  %s316, 256, %s7, [#allocation5], 128, 128, 8
    $region41: #{transformer_forward.7} parent=1 // pred_fallthru
      _
    // Predicated region
    $region42: #{transformer_forward.7} parent=1 // pred_check
      _
    $region43: #{transformer_forward.7} parent=1 // pred_check_branch
      %323 = sbr.rel (0) target = $region45
    $region44: #{transformer_forward.7} parent=1 // pred_region
      %324 = dma.done [#allocation5], 256
    $region45: #{transformer_forward.7} parent=1 // pred_fallthru
      _
    %325 = vsyncpa [#allocation5], 1

</llo_original>
